<compile_context>
chip_gen: v6e
topology: v6e:2x2x1
jax: 0.10.0
libtpu: 0.0.40
codegen_flags: <defaults>
</compile_context>

<pallas_src>
import functools
import math

import jax
import jax.numpy as jnp
from jax.experimental import pallas as pl
from jax.experimental.pallas import tpu as pltpu

PARAM_NAMES = (
    "attn_qkv_w", "attn_qkv_b", "attn_o_w", "attn_o_b",
    "norm_g", "norm_b",
    "ffn_w1", "ffn_b1", "ffn_w2", "ffn_b2",
    "pre_w", "pre_b",
    "wn_in_w", "wn_in_b", "wn_rs_w", "wn_rs_b",
    "post_w", "post_b",
)

# Weight matrices used as matmul RHS are stored/passed in bf16; biases & norm params f32.
MATMUL_WEIGHT_NAMES = frozenset(
    {"attn_qkv_w", "attn_o_w", "ffn_w1", "ffn_w2", "pre_w", "wn_in_w", "wn_rs_w", "post_w"})


def _coupling_kernel(x_ref, mask_t_ref, mask_s_ref,
                     attn_qkv_w_ref, attn_qkv_b_ref, attn_o_w_ref, attn_o_b_ref,
                     norm_g_ref, norm_b_ref,
                     ffn_w1_ref, ffn_b1_ref, ffn_w2_ref, ffn_b2_ref,
                     pre_w_ref, pre_b_ref,
                     wn_in_w_ref, wn_in_b_ref, wn_rs_w_ref, wn_rs_b_ref,
                     post_w_ref, post_b_ref,
                     out_ref, logdet_ref,
                     *, hc, hidden, K, dil_rate, n_wn, n_enc, n_heads, T,
                     ffn_ks, reverse):
    f32 = jnp.float32
    bf16 = jnp.bfloat16

    def mm(a, b):
        # MXU matmul: bf16 operands, f32 accumulation.
        return jnp.dot(a.astype(bf16), b.astype(bf16), preferred_element_type=f32)

    # Hoisted time-index iota + per-offset validity masks (shared by all shifted taps).
    t_idx = jax.lax.broadcasted_iota(jnp.int32, (T, 1), 0)
    valid_cache = {}

    def valid_mask(off):
        if off not in valid_cache:
            valid_cache[off] = jnp.logical_and(t_idx + off >= 0, t_idx + off < T)
        return valid_cache[off]

    def tshift(v, off):
        # y[t] = v[t + off], zero-filled outside [0, T).  XLU roll + VPU mask, no matmul.
        if off == 0:
            return v
        if abs(off) >= T:
            return jnp.zeros_like(v)
        rolled = pltpu.roll(v, (-off) % T, axis=0)
        return jnp.where(valid_mask(off), rolled, 0.0)

    def conv1d(v, w_fused, bias, ks, dilation, pad):
        # im2col: concat ks shifted copies along lanes -> ONE MXU matmul per conv.
        # w_fused: (ks * Cin, Cout), rows ordered tap-major (matches concat order).
        if ks == 1:
            col = v
        else:
            col = jnp.concatenate(
                [tshift(v, k * dilation - pad) for k in range(ks)], axis=1)
        return mm(col, w_fused) + bias

    def layer_norm(v, g, b):
        mu = jnp.mean(v, axis=-1, keepdims=True)
        c = v - mu
        var = jnp.mean(c * c, axis=-1, keepdims=True)
        return c * jax.lax.rsqrt(var + 1e-5) * g + b

    x = x_ref[0]                              # (T, C) f32
    mask = mask_t_ref[0]                      # (T, 1)
    mask_s = mask_s_ref[0]                    # (1, T)
    x0 = x[:, :hc]                            # (T, hc)
    x1 = x[:, hc:2 * hc]                      # (T, hc)

    # ---------------- pre_transformer: Encoder(hc, hc, n_heads=2, n_layers=2) ----------------
    k_ch = hc // n_heads
    inv_sqrt_k = 1.0 / math.sqrt(k_ch)
    # attn valid iff both query-time and key-time positions are unmasked (broadcast outer).
    attn_valid = jnp.logical_and(mask > 0.0, mask_s > 0.0)       # (T, T) bool

    h = x0 * mask
    fpad = (ffn_ks - 1) // 2
    for l in range(n_enc):
        qkv = mm(h, attn_qkv_w_ref[l]) + attn_qkv_b_ref[l]       # fused QKV: (T, 3*hc)
        q = qkv[:, 0:hc]
        k_ = qkv[:, hc:2 * hc]
        v_ = qkv[:, 2 * hc:3 * hc]
        head_outs = []
        for hd in range(n_heads):
            lo = hd * k_ch
            qh = q[:, lo:lo + k_ch] * inv_sqrt_k
            kh = k_[:, lo:lo + k_ch]
            vh = v_[:, lo:lo + k_ch]
            sc = jax.lax.dot_general(qh.astype(bf16), kh.astype(bf16),
                                     (((1,), (1,)), ((), ())),
                                     preferred_element_type=f32)  # (T, T)
            sc = jnp.where(attn_valid, sc, -1e4)                  # masked_fill(mask==0, -1e4)
            sc = sc - jnp.max(sc, axis=-1, keepdims=True)
            p = jnp.exp(sc)
            p = p * pl.reciprocal(jnp.sum(p, axis=-1, keepdims=True), approx=True)
            head_outs.append(mm(p, vh))                           # (T, k_ch)
        attn_cat = jnp.concatenate(head_outs, axis=1)             # (T, hc)
        attn_out = mm(attn_cat, attn_o_w_ref[l]) + attn_o_b_ref[l]
        h = layer_norm(h + attn_out, norm_g_ref[l, 0], norm_b_ref[l, 0])
        # FFN: conv(k=3, same pad) -> relu -> conv(k=3, same pad), masked.
        f = conv1d(h * mask, ffn_w1_ref[l], ffn_b1_ref[l], ffn_ks, 1, fpad)
        f = jnp.maximum(f, 0.0)
        f = conv1d(f * mask, ffn_w2_ref[l], ffn_b2_ref[l], ffn_ks, 1, fpad)
        f = f * mask
        h = layer_norm(h + f, norm_g_ref[l, 1], norm_b_ref[l, 1])
    x0_ = h * mask + x0                       # Encoder returns x*mask; residual add of x0

    # ---------------- pre: 1x1 conv to hidden channels ----------------
    hwn = (mm(x0_, pre_w_ref[...]) + pre_b_ref[...]) * mask       # (T, hidden)

    # ---------------- enc: WN gated dilated conv stack (gin_channels == 0) ----------------
    out_acc = jnp.zeros((T, hidden), f32)
    for i in range(n_wn):
        dil = dil_rate ** i
        pad = (K * dil - dil) // 2
        x_in = conv1d(hwn, wn_in_w_ref[i], wn_in_b_ref[i], K, dil, pad)  # (T, 2*hidden)
        acts = jnp.tanh(x_in[:, :hidden]) * jax.nn.sigmoid(x_in[:, hidden:2 * hidden])
        rs = mm(acts, wn_rs_w_ref[i]) + wn_rs_b_ref[i]            # (T, 2*hidden)
        if i < n_wn - 1:
            hwn = (hwn + rs[:, :hidden]) * mask
            out_acc = out_acc + rs[:, hidden:2 * hidden]
        else:
            out_acc = out_acc + rs[:, :hidden]                    # last layer: hidden outputs
    wn_out = out_acc * mask

    # ---------------- post: zero-initialized 1x1 conv -> (m, logs) ----------------
    stats = (mm(wn_out, post_w_ref[...]) + post_b_ref[...]) * mask  # (T, 2*hc)
    m = stats[:, :hc]
    logs = stats[:, hc:2 * hc]                                      # mean_only = False

    if not reverse:
        x1n = m + x1 * jnp.exp(logs) * mask
        ls = jnp.sum(logs, axis=1, keepdims=True)                   # (T, 1) lane reduce
        ls = jnp.sum(ls, axis=0, keepdims=True)                     # (1, 1) sublane reduce
        logdet_ref[0] = jnp.broadcast_to(ls, (1, 128))
    else:
        x1n = (x1 - m) * jnp.exp(-logs) * mask
        logdet_ref[0] = jnp.zeros((1, 128), f32)

    out_ref[0] = jnp.concatenate([x0, x1n], axis=1)                 # cat([x0, x1], channel)


def residual_coupling_transformers_layer(x, x_mask, params, *, kernel_size,
                                          dilation_rate, n_layers, hidden_channels,
                                          reverse=False):
    """x: (B, C, T) float32, x_mask: (B, 1, T) float32 — PyTorch NCL convention."""
    B, C, T = x.shape
    hc = C // 2
    x_tc = jnp.transpose(x, (0, 2, 1)).astype(jnp.float32)          # (B, T, C)
    m_t1 = jnp.transpose(x_mask, (0, 2, 1)).astype(jnp.float32)     # (B, T, 1)
    m_1t = x_mask.astype(jnp.float32)                               # (B, 1, T)

    # Fuse conv-tap weights for im2col: (n, K, Cin, Cout) -> (n, K*Cin, Cout), tap-major rows.
    prepared = dict(params)
    n_enc, ffn_ks = prepared["ffn_w1"].shape[0], prepared["ffn_w1"].shape[1]
    prepared["ffn_w1"] = prepared["ffn_w1"].reshape(n_enc, ffn_ks * hc, hc)
    prepared["ffn_w2"] = prepared["ffn_w2"].reshape(n_enc, ffn_ks * hc, hc)
    n_wn = prepared["wn_in_w"].shape[0]
    prepared["wn_in_w"] = prepared["wn_in_w"].reshape(
        n_wn, kernel_size * hidden_channels, 2 * hidden_channels)

    plist = [prepared[n].astype(jnp.bfloat16) if n in MATMUL_WEIGHT_NAMES
             else prepared[n].astype(jnp.float32) for n in PARAM_NAMES]

    kernel = functools.partial(
        _coupling_kernel,
        hc=hc, hidden=hidden_channels, K=kernel_size, dil_rate=dilation_rate,
        n_wn=n_layers, n_enc=n_enc, n_heads=2, T=T, ffn_ks=ffn_ks, reverse=reverse)

    # Constant weights: whole array resident in VMEM, no per-grid-step double buffering.
    weight_spec = pl.BlockSpec(memory_space=pltpu.MemorySpace.VMEM)

    in_specs = [pl.BlockSpec((1, T, C), lambda b: (b, 0, 0)),
                pl.BlockSpec((1, T, 1), lambda b: (b, 0, 0)),
                pl.BlockSpec((1, 1, T), lambda b: (b, 0, 0))]
    in_specs += [weight_spec] * len(plist)
    out_specs = [pl.BlockSpec((1, T, C), lambda b: (b, 0, 0)),
                 pl.BlockSpec((1, 1, 128), lambda b: (b, 0, 0))]
    out_shape = [jax.ShapeDtypeStruct((B, T, C), jnp.float32),
                 jax.ShapeDtypeStruct((B, 1, 128), jnp.float32)]

    y_tc, logdet_pad = pl.pallas_call(
        kernel,
        grid=(B,),
        in_specs=in_specs,
        out_specs=out_specs,
        out_shape=out_shape,
        compiler_params=pltpu.CompilerParams(
            dimension_semantics=("parallel",),          # batch is independent (v7x dual TC)
            vmem_limit_bytes=32 * 1024 * 1024),
    )(x_tc, m_t1, m_1t, *plist)

    y = jnp.transpose(y_tc, (0, 2, 1))                              # (B, C, T)
    logdet = logdet_pad[:, 0, 0]                                    # (B,)
    if reverse:
        return y
    return y, logdet


def init_params(key, channels, hidden, K, dil_rate, n_wn, n_enc=2):
    """Deterministic synthetic parameters matching the module's __init__ shapes.
    Conv weights stored pre-transposed as (..., K, Cin, Cout); QKV fused along Cout."""
    hc = channels // 2
    ks = jax.random.split(key, 14)

    def nrm(k, shape, s=0.1):
        return s * jax.random.normal(k, shape, dtype=jnp.float32)

    params = {
        # pre_transformer (Encoder): fused q/k/v 1x1 conv, output conv, 2 LayerNorms, FFN(k=3)
        "attn_qkv_w": nrm(ks[0], (n_enc, hc, 3 * hc)),
        "attn_qkv_b": nrm(ks[1], (n_enc, 1, 3 * hc), 0.01),
        "attn_o_w": nrm(ks[2], (n_enc, hc, hc)),
        "attn_o_b": nrm(ks[3], (n_enc, 1, hc), 0.01),
        "norm_g": jnp.ones((n_enc, 2, 1, hc), jnp.float32),
        "norm_b": jnp.zeros((n_enc, 2, 1, hc), jnp.float32),
        "ffn_w1": nrm(ks[4], (n_enc, 3, hc, hc)),
        "ffn_b1": nrm(ks[5], (n_enc, 1, hc), 0.01),
        "ffn_w2": nrm(ks[6], (n_enc, 3, hc, hc)),
        "ffn_b2": nrm(ks[7], (n_enc, 1, hc), 0.01),
        # pre: Conv1d(hc -> hidden, 1)
        "pre_w": nrm(ks[8], (hc, hidden)),
        "pre_b": nrm(ks[9], (1, hidden), 0.01),
        # WN: in_layers Conv1d(hidden -> 2*hidden, K, dilation), res_skip 1x1 convs
        "wn_in_w": nrm(ks[10], (n_wn, K, hidden, 2 * hidden)),
        "wn_in_b": nrm(ks[11], (n_wn, 1, 2 * hidden), 0.01),
        # post: Conv1d(hidden -> 2*hc, 1) zero-initialized exactly like the module
        "post_w": jnp.zeros((hidden, 2 * hc), jnp.float32),
        "post_b": jnp.zeros((1, 2 * hc), jnp.float32),
    }
    rs_w = nrm(ks[12], (n_wn, hidden, 2 * hidden))
    rs_b = nrm(ks[13], (n_wn, 1, 2 * hidden), 0.01)
    # last WN layer's res_skip conv only has `hidden` output channels; zero the padded half
    rs_w = rs_w.at[-1, :, hidden:].set(0.0)
    rs_b = rs_b.at[-1, :, hidden:].set(0.0)
    params["wn_rs_w"] = rs_w
    params["wn_rs_b"] = rs_b
    return params


if __name__ == "__main__":
    B, C, T = 2, 8, 16               # batch, channels (even), time
    hidden_channels = 16
    kernel_size = 3
    dilation_rate = 2
    n_layers = 3                     # WN layers
    hc = C // 2

    key = jax.random.PRNGKey(0)
    kx, kp, kpost = jax.random.split(key, 3)
    x = jax.random.normal(kx, (B, C, T), dtype=jnp.float32)
    lengths = jnp.array([16, 11], dtype=jnp.int32)
    x_mask = (jnp.arange(T)[None, :] < lengths[:, None]).astype(jnp.float32)[:, None, :]

    params = init_params(kp, C, hidden_channels, kernel_size, dilation_rate, n_layers)
    run = functools.partial(residual_coupling_transformers_layer,
                            kernel_size=kernel_size, dilation_rate=dilation_rate,
                            n_layers=n_layers, hidden_channels=hidden_channels)

    # --- Test 1: faithful zero-initialized post conv => m = logs = 0, masked pass-through ---
    y, logdet = run(x, x_mask, params, reverse=False)
    y = jax.block_until_ready(y)
    logdet = jax.block_until_ready(logdet)
    assert y.shape == (B, C, T) and logdet.shape == (B,)
    assert bool(jnp.all(jnp.isfinite(y)))
    assert bool(jnp.allclose(y[:, :hc, :], x[:, :hc, :], atol=1e-5))
    assert bool(jnp.allclose(y[:, hc:, :], x[:, hc:, :] * x_mask, atol=1e-5))
    assert bool(jnp.allclose(logdet, 0.0, atol=1e-5))
    y_rev = jax.block_until_ready(run(x, x_mask, params, reverse=True))
    assert y_rev.shape == (B, C, T)
    assert bool(jnp.allclose(y_rev, y, atol=1e-5))

    # --- Test 2: nonzero post conv — full path exercised; reverse must invert forward ---
    params_nz = dict(params)
    kw, kb = jax.random.split(kpost)
    params_nz["post_w"] = 0.05 * jax.random.normal(kw, (hidden_channels, 2 * hc), jnp.float32)
    params_nz["post_b"] = 0.01 * jax.random.normal(kb, (1, 2 * hc), jnp.float32)
    yf, ld = run(x, x_mask, params_nz, reverse=False)
    yf = jax.block_until_ready(yf)
    ld = jax.block_until_ready(ld)
    assert bool(jnp.all(jnp.isfinite(yf))) and bool(jnp.all(jnp.isfinite(ld)))
    # nonzero post conv must actually perturb x1 (proves the whole encoder/WN path ran)
    assert not bool(jnp.allclose(yf[:, hc:, :], x[:, hc:, :] * x_mask, atol=1e-4))
    y_rt = jax.block_until_ready(run(yf, x_mask, params_nz, reverse=True))
    assert bool(jnp.allclose(y_rt[:, :hc, :], x[:, :hc, :], atol=1e-4))
    assert bool(jnp.allclose(y_rt[:, hc:, :], x[:, hc:, :] * x_mask, atol=1e-3))

    print("KERNEL_OK")
</pallas_src>

<mosaic_0001>
module attributes {stable_mosaic.version = 11 : i64} {
  func.func @_coupling_kernel(%arg0: i32, %arg1: memref<1x16x8xf32, #tpu.memory_space<vmem>>, %arg2: memref<1x16x1xf32, #tpu.memory_space<vmem>>, %arg3: memref<1x1x16xf32, #tpu.memory_space<vmem>>, %arg4: memref<2x4x12xbf16, #tpu.memory_space<vmem>>, %arg5: memref<2x1x12xf32, #tpu.memory_space<vmem>>, %arg6: memref<2x4x4xbf16, #tpu.memory_space<vmem>>, %arg7: memref<2x1x4xf32, #tpu.memory_space<vmem>>, %arg8: memref<2x2x1x4xf32, #tpu.memory_space<vmem>>, %arg9: memref<2x2x1x4xf32, #tpu.memory_space<vmem>>, %arg10: memref<2x12x4xbf16, #tpu.memory_space<vmem>>, %arg11: memref<2x1x4xf32, #tpu.memory_space<vmem>>, %arg12: memref<2x12x4xbf16, #tpu.memory_space<vmem>>, %arg13: memref<2x1x4xf32, #tpu.memory_space<vmem>>, %arg14: memref<4x16xbf16, #tpu.memory_space<vmem>>, %arg15: memref<1x16xf32, #tpu.memory_space<vmem>>, %arg16: memref<3x48x32xbf16, #tpu.memory_space<vmem>>, %arg17: memref<3x1x32xf32, #tpu.memory_space<vmem>>, %arg18: memref<3x16x32xbf16, #tpu.memory_space<vmem>>, %arg19: memref<3x1x32xf32, #tpu.memory_space<vmem>>, %arg20: memref<16x8xbf16, #tpu.memory_space<vmem>>, %arg21: memref<1x8xf32, #tpu.memory_space<vmem>>, %arg22: memref<1x16x8xf32, #tpu.memory_space<vmem>>, %arg23: memref<1x1x128xf32, #tpu.memory_space<vmem>>) attributes {dimension_semantics = [#tpu.dimension_semantics<parallel>], iteration_bounds = array<i64: 2>, scalar_prefetch = 0 : i64, scratch_operands = 0 : i64, tpu.core_type = #tpu.core_type<tc>, window_params = [{transform_indices = @transform_0, window_bounds = array<i64: 1, 16, 8>}, {transform_indices = @transform_1, window_bounds = array<i64: 1, 16, 1>}, {transform_indices = @transform_2, window_bounds = array<i64: 1, 1, 16>}, {pipeline_mode = #tpu.pipeline_mode<synchronous>, transform_indices = @transform_3, window_bounds = array<i64: 2, 4, 12>}, {pipeline_mode = #tpu.pipeline_mode<synchronous>, transform_indices = @transform_4, window_bounds = array<i64: 2, 1, 12>}, {pipeline_mode = #tpu.pipeline_mode<synchronous>, transform_indices = @transform_5, window_bounds = array<i64: 2, 4, 4>}, {pipeline_mode = #tpu.pipeline_mode<synchronous>, transform_indices = @transform_6, window_bounds = array<i64: 2, 1, 4>}, {pipeline_mode = #tpu.pipeline_mode<synchronous>, transform_indices = @transform_7, window_bounds = array<i64: 2, 2, 1, 4>}, {pipeline_mode = #tpu.pipeline_mode<synchronous>, transform_indices = @transform_8, window_bounds = array<i64: 2, 2, 1, 4>}, {pipeline_mode = #tpu.pipeline_mode<synchronous>, transform_indices = @transform_9, window_bounds = array<i64: 2, 12, 4>}, {pipeline_mode = #tpu.pipeline_mode<synchronous>, transform_indices = @transform_10, window_bounds = array<i64: 2, 1, 4>}, {pipeline_mode = #tpu.pipeline_mode<synchronous>, transform_indices = @transform_11, window_bounds = array<i64: 2, 12, 4>}, {pipeline_mode = #tpu.pipeline_mode<synchronous>, transform_indices = @transform_12, window_bounds = array<i64: 2, 1, 4>}, {pipeline_mode = #tpu.pipeline_mode<synchronous>, transform_indices = @transform_13, window_bounds = array<i64: 4, 16>}, {pipeline_mode = #tpu.pipeline_mode<synchronous>, transform_indices = @transform_14, window_bounds = array<i64: 1, 16>}, {pipeline_mode = #tpu.pipeline_mode<synchronous>, transform_indices = @transform_15, window_bounds = array<i64: 3, 48, 32>}, {pipeline_mode = #tpu.pipeline_mode<synchronous>, transform_indices = @transform_16, window_bounds = array<i64: 3, 1, 32>}, {pipeline_mode = #tpu.pipeline_mode<synchronous>, transform_indices = @transform_17, window_bounds = array<i64: 3, 16, 32>}, {pipeline_mode = #tpu.pipeline_mode<synchronous>, transform_indices = @transform_18, window_bounds = array<i64: 3, 1, 32>}, {pipeline_mode = #tpu.pipeline_mode<synchronous>, transform_indices = @transform_19, window_bounds = array<i64: 16, 8>}, {pipeline_mode = #tpu.pipeline_mode<synchronous>, transform_indices = @transform_20, window_bounds = array<i64: 1, 8>}, {transform_indices = @transform_21, window_bounds = array<i64: 1, 16, 8>}, {transform_indices = @transform_22, window_bounds = array<i64: 1, 1, 128>}]} {
    %0 = tpu.iota {dimensions = array<i32: 0>} : vector<16x1xi32>
    %c0 = arith.constant 0 : index
    %c0_0 = arith.constant 0 : index
    %c0_1 = arith.constant 0 : index
    %1 = vector.load %arg1[%c0, %c0_0, %c0_1] : memref<1x16x8xf32, #tpu.memory_space<vmem>>, vector<1x16x8xf32>
    %2 = vector.shape_cast %1 : vector<1x16x8xf32> to vector<16x8xf32>
    %c0_2 = arith.constant 0 : index
    %c0_3 = arith.constant 0 : index
    %c0_4 = arith.constant 0 : index
    %3 = vector.load %arg2[%c0_2, %c0_3, %c0_4] : memref<1x16x1xf32, #tpu.memory_space<vmem>>, vector<1x16x1xf32>
    %4 = vector.shape_cast %3 : vector<1x16x1xf32> to vector<16x1xf32>
    %c0_5 = arith.constant 0 : index
    %c0_6 = arith.constant 0 : index
    %c0_7 = arith.constant 0 : index
    %5 = vector.load %arg3[%c0_5, %c0_6, %c0_7] : memref<1x1x16xf32, #tpu.memory_space<vmem>>, vector<1x1x16xf32>
    %6 = vector.shape_cast %5 : vector<1x1x16xf32> to vector<1x16xf32>
    %7 = vector.extract_strided_slice %2 {offsets = [0, 0], sizes = [16, 4], strides = [1, 1]} : vector<16x8xf32> to vector<16x4xf32>
    %8 = vector.extract_strided_slice %2 {offsets = [0, 4], sizes = [16, 4], strides = [1, 1]} : vector<16x8xf32> to vector<16x4xf32>
    %cst = arith.constant 0.000000e+00 : f32
    %9 = vector.broadcast %cst : f32 to vector<16x1xf32>
    %10 = arith.cmpf ogt, %4, %9 : vector<16x1xf32>
    %cst_8 = arith.constant 0.000000e+00 : f32
    %11 = vector.broadcast %cst_8 : f32 to vector<1x16xf32>
    %12 = arith.cmpf ogt, %6, %11 : vector<1x16xf32>
    %13 = vector.broadcast %10 : vector<16x1xi1> to vector<16x16xi1>
    %14 = vector.broadcast %12 : vector<1x16xi1> to vector<16x16xi1>
    %15 = arith.andi %13, %14 : vector<16x16xi1>
    %16 = vector.broadcast %4 : vector<16x1xf32> to vector<16x4xf32>
    %17 = arith.mulf %7, %16 : vector<16x4xf32>
    %c0_9 = arith.constant 0 : index
    %c0_10 = arith.constant 0 : index
    %c0_11 = arith.constant 0 : index
    %18 = vector.load %arg4[%c0_9, %c0_10, %c0_11] : memref<2x4x12xbf16, #tpu.memory_space<vmem>>, vector<1x4x12xbf16>
    %19 = vector.shape_cast %18 : vector<1x4x12xbf16> to vector<4x12xbf16>
    %20 = arith.truncf %17 : vector<16x4xf32> to vector<16x4xbf16>
    %cst_12 = arith.constant dense<0.000000e+00> : vector<16x12xf32>
    %21 = tpu.matmul %20, %19, %cst_12 {dimension_numbers = #tpu.dot_dimension_numbers<[1], [0], [0], [1], [0, 0, 1, 1], [], []>} : vector<16x4xbf16>, vector<4x12xbf16>, vector<16x12xf32> -> vector<16x12xf32>
    %c0_13 = arith.constant 0 : index
    %c0_14 = arith.constant 0 : index
    %c0_15 = arith.constant 0 : index
    %22 = vector.load %arg5[%c0_13, %c0_14, %c0_15] : memref<2x1x12xf32, #tpu.memory_space<vmem>>, vector<1x1x12xf32>
    %23 = vector.shape_cast %22 : vector<1x1x12xf32> to vector<1x12xf32>
    %24 = vector.broadcast %23 : vector<1x12xf32> to vector<16x12xf32>
    %25 = arith.addf %21, %24 : vector<16x12xf32>
    %26 = vector.extract_strided_slice %25 {offsets = [0, 0], sizes = [16, 4], strides = [1, 1]} : vector<16x12xf32> to vector<16x4xf32>
    %27 = vector.extract_strided_slice %25 {offsets = [0, 4], sizes = [16, 4], strides = [1, 1]} : vector<16x12xf32> to vector<16x4xf32>
    %28 = vector.extract_strided_slice %25 {offsets = [0, 8], sizes = [16, 4], strides = [1, 1]} : vector<16x12xf32> to vector<16x4xf32>
    %29 = vector.extract_strided_slice %26 {offsets = [0, 0], sizes = [16, 2], strides = [1, 1]} : vector<16x4xf32> to vector<16x2xf32>
    %cst_16 = arith.constant 0.707106769 : f32
    %30 = vector.broadcast %cst_16 : f32 to vector<16x2xf32>
    %31 = arith.mulf %29, %30 : vector<16x2xf32>
    %32 = vector.extract_strided_slice %27 {offsets = [0, 0], sizes = [16, 2], strides = [1, 1]} : vector<16x4xf32> to vector<16x2xf32>
    %33 = vector.extract_strided_slice %28 {offsets = [0, 0], sizes = [16, 2], strides = [1, 1]} : vector<16x4xf32> to vector<16x2xf32>
    %34 = arith.truncf %31 : vector<16x2xf32> to vector<16x2xbf16>
    %35 = arith.truncf %32 : vector<16x2xf32> to vector<16x2xbf16>
    %cst_17 = arith.constant dense<0.000000e+00> : vector<16x16xf32>
    %36 = tpu.matmul %34, %35, %cst_17 {dimension_numbers = #tpu.dot_dimension_numbers<[1], [1], [0], [0], [0, 0, 1, 0], [], []>} : vector<16x2xbf16>, vector<16x2xbf16>, vector<16x16xf32> -> vector<16x16xf32>
    %cst_18 = arith.constant -1.000000e+04 : f32
    %37 = vector.broadcast %cst_18 : f32 to vector<16x16xf32>
    %38 = arith.select %15, %36, %37 : vector<16x16xi1>, vector<16x16xf32>
    %cst_19 = arith.constant dense<0xFF800000> : vector<16xf32>
    %39 = vector.multi_reduction <maximumf>, %38, %cst_19 [1] : vector<16x16xf32> to vector<16xf32>
    %40 = vector.shape_cast %39 : vector<16xf32> to vector<16x1xf32>
    %41 = vector.broadcast %40 : vector<16x1xf32> to vector<16x16xf32>
    %42 = arith.subf %38, %41 : vector<16x16xf32>
    %43 = math.exp %42 : vector<16x16xf32>
    %cst_20 = arith.constant dense<0.000000e+00> : vector<16xf32>
    %44 = vector.multi_reduction <add>, %43, %cst_20 [1] : vector<16x16xf32> to vector<16xf32>
    %45 = vector.shape_cast %44 : vector<16xf32> to vector<16x1xf32>
    %46 = tpu.reciprocal %45 {approx = true} : vector<16x1xf32> -> vector<16x1xf32>
    %47 = vector.broadcast %46 : vector<16x1xf32> to vector<16x16xf32>
    %48 = arith.mulf %43, %47 : vector<16x16xf32>
    %49 = arith.truncf %48 : vector<16x16xf32> to vector<16x16xbf16>
    %50 = arith.truncf %33 : vector<16x2xf32> to vector<16x2xbf16>
    %cst_21 = arith.constant dense<0.000000e+00> : vector<16x2xf32>
    %51 = tpu.matmul %49, %50, %cst_21 {dimension_numbers = #tpu.dot_dimension_numbers<[1], [0], [0], [1], [0, 0, 1, 1], [], []>} : vector<16x16xbf16>, vector<16x2xbf16>, vector<16x2xf32> -> vector<16x2xf32>
    %52 = vector.extract_strided_slice %26 {offsets = [0, 2], sizes = [16, 2], strides = [1, 1]} : vector<16x4xf32> to vector<16x2xf32>
    %cst_22 = arith.constant 0.707106769 : f32
    %53 = vector.broadcast %cst_22 : f32 to vector<16x2xf32>
    %54 = arith.mulf %52, %53 : vector<16x2xf32>
    %55 = vector.extract_strided_slice %27 {offsets = [0, 2], sizes = [16, 2], strides = [1, 1]} : vector<16x4xf32> to vector<16x2xf32>
    %56 = vector.extract_strided_slice %28 {offsets = [0, 2], sizes = [16, 2], strides = [1, 1]} : vector<16x4xf32> to vector<16x2xf32>
    %57 = arith.truncf %54 : vector<16x2xf32> to vector<16x2xbf16>
    %58 = arith.truncf %55 : vector<16x2xf32> to vector<16x2xbf16>
    %cst_23 = arith.constant dense<0.000000e+00> : vector<16x16xf32>
    %59 = tpu.matmul %57, %58, %cst_23 {dimension_numbers = #tpu.dot_dimension_numbers<[1], [1], [0], [0], [0, 0, 1, 0], [], []>} : vector<16x2xbf16>, vector<16x2xbf16>, vector<16x16xf32> -> vector<16x16xf32>
    %cst_24 = arith.constant -1.000000e+04 : f32
    %60 = vector.broadcast %cst_24 : f32 to vector<16x16xf32>
    %61 = arith.select %15, %59, %60 : vector<16x16xi1>, vector<16x16xf32>
    %cst_25 = arith.constant dense<0xFF800000> : vector<16xf32>
    %62 = vector.multi_reduction <maximumf>, %61, %cst_25 [1] : vector<16x16xf32> to vector<16xf32>
    %63 = vector.shape_cast %62 : vector<16xf32> to vector<16x1xf32>
    %64 = vector.broadcast %63 : vector<16x1xf32> to vector<16x16xf32>
    %65 = arith.subf %61, %64 : vector<16x16xf32>
    %66 = math.exp %65 : vector<16x16xf32>
    %cst_26 = arith.constant dense<0.000000e+00> : vector<16xf32>
    %67 = vector.multi_reduction <add>, %66, %cst_26 [1] : vector<16x16xf32> to vector<16xf32>
    %68 = vector.shape_cast %67 : vector<16xf32> to vector<16x1xf32>
    %69 = tpu.reciprocal %68 {approx = true} : vector<16x1xf32> -> vector<16x1xf32>
    %70 = vector.broadcast %69 : vector<16x1xf32> to vector<16x16xf32>
    %71 = arith.mulf %66, %70 : vector<16x16xf32>
    %72 = arith.truncf %71 : vector<16x16xf32> to vector<16x16xbf16>
    %73 = arith.truncf %56 : vector<16x2xf32> to vector<16x2xbf16>
    %cst_27 = arith.constant dense<0.000000e+00> : vector<16x2xf32>
    %74 = tpu.matmul %72, %73, %cst_27 {dimension_numbers = #tpu.dot_dimension_numbers<[1], [0], [0], [1], [0, 0, 1, 1], [], []>} : vector<16x16xbf16>, vector<16x2xbf16>, vector<16x2xf32> -> vector<16x2xf32>
    %75 = tpu.concatenate %51, %74 in 1 : vector<16x2xf32>, vector<16x2xf32> -> vector<16x4xf32>
    %c0_28 = arith.constant 0 : index
    %c0_29 = arith.constant 0 : index
    %c0_30 = arith.constant 0 : index
    %76 = vector.load %arg6[%c0_28, %c0_29, %c0_30] : memref<2x4x4xbf16, #tpu.memory_space<vmem>>, vector<1x4x4xbf16>
    %77 = vector.shape_cast %76 : vector<1x4x4xbf16> to vector<4x4xbf16>
    %78 = arith.truncf %75 : vector<16x4xf32> to vector<16x4xbf16>
    %cst_31 = arith.constant dense<0.000000e+00> : vector<16x4xf32>
    %79 = tpu.matmul %78, %77, %cst_31 {dimension_numbers = #tpu.dot_dimension_numbers<[1], [0], [0], [1], [0, 0, 1, 1], [], []>} : vector<16x4xbf16>, vector<4x4xbf16>, vector<16x4xf32> -> vector<16x4xf32>
    %c0_32 = arith.constant 0 : index
    %c0_33 = arith.constant 0 : index
    %c0_34 = arith.constant 0 : index
    %80 = vector.load %arg7[%c0_32, %c0_33, %c0_34] : memref<2x1x4xf32, #tpu.memory_space<vmem>>, vector<1x1x4xf32>
    %81 = vector.shape_cast %80 : vector<1x1x4xf32> to vector<1x4xf32>
    %82 = vector.broadcast %81 : vector<1x4xf32> to vector<16x4xf32>
    %83 = arith.addf %79, %82 : vector<16x4xf32>
    %84 = arith.addf %17, %83 : vector<16x4xf32>
    %c0_35 = arith.constant 0 : index
    %c0_36 = arith.constant 0 : index
    %c0_37 = arith.constant 0 : index
    %c0_38 = arith.constant 0 : index
    %85 = vector.load %arg8[%c0_35, %c0_36, %c0_37, %c0_38] : memref<2x2x1x4xf32, #tpu.memory_space<vmem>>, vector<1x1x1x4xf32>
    %86 = vector.shape_cast %85 : vector<1x1x1x4xf32> to vector<1x4xf32>
    %c0_39 = arith.constant 0 : index
    %c0_40 = arith.constant 0 : index
    %c0_41 = arith.constant 0 : index
    %c0_42 = arith.constant 0 : index
    %87 = vector.load %arg9[%c0_39, %c0_40, %c0_41, %c0_42] : memref<2x2x1x4xf32, #tpu.memory_space<vmem>>, vector<1x1x1x4xf32>
    %88 = vector.shape_cast %87 : vector<1x1x1x4xf32> to vector<1x4xf32>
    %cst_43 = arith.constant dense<0.000000e+00> : vector<16xf32>
    %89 = vector.multi_reduction <add>, %84, %cst_43 [1] : vector<16x4xf32> to vector<16xf32>
    %90 = vector.shape_cast %89 : vector<16xf32> to vector<16x1xf32>
    %cst_44 = arith.constant 4.000000e+00 : f32
    %91 = vector.broadcast %cst_44 : f32 to vector<16x1xf32>
    %92 = arith.divf %90, %91 : vector<16x1xf32>
    %93 = vector.broadcast %92 : vector<16x1xf32> to vector<16x4xf32>
    %94 = arith.subf %84, %93 : vector<16x4xf32>
    %95 = arith.mulf %94, %94 : vector<16x4xf32>
    %cst_45 = arith.constant dense<0.000000e+00> : vector<16xf32>
    %96 = vector.multi_reduction <add>, %95, %cst_45 [1] : vector<16x4xf32> to vector<16xf32>
    %97 = vector.shape_cast %96 : vector<16xf32> to vector<16x1xf32>
    %cst_46 = arith.constant 4.000000e+00 : f32
    %98 = vector.broadcast %cst_46 : f32 to vector<16x1xf32>
    %99 = arith.divf %97, %98 : vector<16x1xf32>
    %cst_47 = arith.constant 9.99999974E-6 : f32
    %100 = vector.broadcast %cst_47 : f32 to vector<16x1xf32>
    %101 = arith.addf %99, %100 : vector<16x1xf32>
    %102 = math.rsqrt %101 : vector<16x1xf32>
    %103 = vector.broadcast %102 : vector<16x1xf32> to vector<16x4xf32>
    %104 = arith.mulf %94, %103 : vector<16x4xf32>
    %105 = vector.broadcast %86 : vector<1x4xf32> to vector<16x4xf32>
    %106 = arith.mulf %104, %105 : vector<16x4xf32>
    %107 = vector.broadcast %88 : vector<1x4xf32> to vector<16x4xf32>
    %108 = arith.addf %106, %107 : vector<16x4xf32>
    %109 = vector.broadcast %4 : vector<16x1xf32> to vector<16x4xf32>
    %110 = arith.mulf %108, %109 : vector<16x4xf32>
    %c0_48 = arith.constant 0 : index
    %c0_49 = arith.constant 0 : index
    %c0_50 = arith.constant 0 : index
    %111 = vector.load %arg10[%c0_48, %c0_49, %c0_50] : memref<2x12x4xbf16, #tpu.memory_space<vmem>>, vector<1x12x4xbf16>
    %112 = vector.shape_cast %111 : vector<1x12x4xbf16> to vector<12x4xbf16>
    %c0_51 = arith.constant 0 : index
    %c0_52 = arith.constant 0 : index
    %c0_53 = arith.constant 0 : index
    %113 = vector.load %arg11[%c0_51, %c0_52, %c0_53] : memref<2x1x4xf32, #tpu.memory_space<vmem>>, vector<1x1x4xf32>
    %114 = vector.shape_cast %113 : vector<1x1x4xf32> to vector<1x4xf32>
    %c1_i32 = arith.constant 1 : i32
    %115 = tpu.dynamic_rotate %110 by %c1_i32 dim 0 : vector<16x4xf32>, i32 -> vector<16x4xf32>
    %c-1_i32 = arith.constant -1 : i32
    %116 = vector.broadcast %c-1_i32 : i32 to vector<16x1xi32>
    %117 = arith.addi %0, %116 : vector<16x1xi32>
    %c0_i32 = arith.constant 0 : i32
    %118 = vector.broadcast %c0_i32 : i32 to vector<16x1xi32>
    %119 = arith.cmpi sge, %117, %118 : vector<16x1xi32>
    %c-1_i32_54 = arith.constant -1 : i32
    %120 = vector.broadcast %c-1_i32_54 : i32 to vector<16x1xi32>
    %121 = arith.addi %0, %120 : vector<16x1xi32>
    %c16_i32 = arith.constant 16 : i32
    %122 = vector.broadcast %c16_i32 : i32 to vector<16x1xi32>
    %123 = arith.cmpi slt, %121, %122 : vector<16x1xi32>
    %124 = arith.andi %119, %123 : vector<16x1xi1>
    %cst_55 = arith.constant 0.000000e+00 : f32
    %125 = vector.shape_cast %124 : vector<16x1xi1> to vector<16x1xi1>
    %126 = vector.broadcast %125 : vector<16x1xi1> to vector<16x4xi1>
    %127 = vector.broadcast %cst_55 : f32 to vector<16x4xf32>
    %128 = arith.select %126, %115, %127 : vector<16x4xi1>, vector<16x4xf32>
    %c15_i32 = arith.constant 15 : i32
    %129 = tpu.dynamic_rotate %110 by %c15_i32 dim 0 : vector<16x4xf32>, i32 -> vector<16x4xf32>
    %c1_i32_56 = arith.constant 1 : i32
    %130 = vector.broadcast %c1_i32_56 : i32 to vector<16x1xi32>
    %131 = arith.addi %0, %130 : vector<16x1xi32>
    %c0_i32_57 = arith.constant 0 : i32
    %132 = vector.broadcast %c0_i32_57 : i32 to vector<16x1xi32>
    %133 = arith.cmpi sge, %131, %132 : vector<16x1xi32>
    %c1_i32_58 = arith.constant 1 : i32
    %134 = vector.broadcast %c1_i32_58 : i32 to vector<16x1xi32>
    %135 = arith.addi %0, %134 : vector<16x1xi32>
    %c16_i32_59 = arith.constant 16 : i32
    %136 = vector.broadcast %c16_i32_59 : i32 to vector<16x1xi32>
    %137 = arith.cmpi slt, %135, %136 : vector<16x1xi32>
    %138 = arith.andi %133, %137 : vector<16x1xi1>
    %cst_60 = arith.constant 0.000000e+00 : f32
    %139 = vector.shape_cast %138 : vector<16x1xi1> to vector<16x1xi1>
    %140 = vector.broadcast %139 : vector<16x1xi1> to vector<16x4xi1>
    %141 = vector.broadcast %cst_60 : f32 to vector<16x4xf32>
    %142 = arith.select %140, %129, %141 : vector<16x4xi1>, vector<16x4xf32>
    %143 = tpu.concatenate %128, %110, %142 in 1 : vector<16x4xf32>, vector<16x4xf32>, vector<16x4xf32> -> vector<16x12xf32>
    %144 = arith.truncf %143 : vector<16x12xf32> to vector<16x12xbf16>
    %cst_61 = arith.constant dense<0.000000e+00> : vector<16x4xf32>
    %145 = tpu.matmul %144, %112, %cst_61 {dimension_numbers = #tpu.dot_dimension_numbers<[1], [0], [0], [1], [0, 0, 1, 1], [], []>} : vector<16x12xbf16>, vector<12x4xbf16>, vector<16x4xf32> -> vector<16x4xf32>
    %146 = vector.broadcast %114 : vector<1x4xf32> to vector<16x4xf32>
    %147 = arith.addf %145, %146 : vector<16x4xf32>
    %cst_62 = arith.constant 0.000000e+00 : f32
    %148 = vector.broadcast %cst_62 : f32 to vector<16x4xf32>
    %149 = arith.maximumf %147, %148 : vector<16x4xf32>
    %150 = vector.broadcast %4 : vector<16x1xf32> to vector<16x4xf32>
    %151 = arith.mulf %149, %150 : vector<16x4xf32>
    %c0_63 = arith.constant 0 : index
    %c0_64 = arith.constant 0 : index
    %c0_65 = arith.constant 0 : index
    %152 = vector.load %arg12[%c0_63, %c0_64, %c0_65] : memref<2x12x4xbf16, #tpu.memory_space<vmem>>, vector<1x12x4xbf16>
    %153 = vector.shape_cast %152 : vector<1x12x4xbf16> to vector<12x4xbf16>
    %c0_66 = arith.constant 0 : index
    %c0_67 = arith.constant 0 : index
    %c0_68 = arith.constant 0 : index
    %154 = vector.load %arg13[%c0_66, %c0_67, %c0_68] : memref<2x1x4xf32, #tpu.memory_space<vmem>>, vector<1x1x4xf32>
    %155 = vector.shape_cast %154 : vector<1x1x4xf32> to vector<1x4xf32>
    %c1_i32_69 = arith.constant 1 : i32
    %156 = tpu.dynamic_rotate %151 by %c1_i32_69 dim 0 : vector<16x4xf32>, i32 -> vector<16x4xf32>
    %cst_70 = arith.constant 0.000000e+00 : f32
    %157 = vector.shape_cast %124 : vector<16x1xi1> to vector<16x1xi1>
    %158 = vector.broadcast %157 : vector<16x1xi1> to vector<16x4xi1>
    %159 = vector.broadcast %cst_70 : f32 to vector<16x4xf32>
    %160 = arith.select %158, %156, %159 : vector<16x4xi1>, vector<16x4xf32>
    %c15_i32_71 = arith.constant 15 : i32
    %161 = tpu.dynamic_rotate %151 by %c15_i32_71 dim 0 : vector<16x4xf32>, i32 -> vector<16x4xf32>
    %cst_72 = arith.constant 0.000000e+00 : f32
    %162 = vector.shape_cast %138 : vector<16x1xi1> to vector<16x1xi1>
    %163 = vector.broadcast %162 : vector<16x1xi1> to vector<16x4xi1>
    %164 = vector.broadcast %cst_72 : f32 to vector<16x4xf32>
    %165 = arith.select %163, %161, %164 : vector<16x4xi1>, vector<16x4xf32>
    %166 = tpu.concatenate %160, %151, %165 in 1 : vector<16x4xf32>, vector<16x4xf32>, vector<16x4xf32> -> vector<16x12xf32>
    %167 = arith.truncf %166 : vector<16x12xf32> to vector<16x12xbf16>
    %cst_73 = arith.constant dense<0.000000e+00> : vector<16x4xf32>
    %168 = tpu.matmul %167, %153, %cst_73 {dimension_numbers = #tpu.dot_dimension_numbers<[1], [0], [0], [1], [0, 0, 1, 1], [], []>} : vector<16x12xbf16>, vector<12x4xbf16>, vector<16x4xf32> -> vector<16x4xf32>
    %169 = vector.broadcast %155 : vector<1x4xf32> to vector<16x4xf32>
    %170 = arith.addf %168, %169 : vector<16x4xf32>
    %171 = vector.broadcast %4 : vector<16x1xf32> to vector<16x4xf32>
    %172 = arith.mulf %170, %171 : vector<16x4xf32>
    %173 = arith.addf %108, %172 : vector<16x4xf32>
    %c0_74 = arith.constant 0 : index
    %c1 = arith.constant 1 : index
    %c0_75 = arith.constant 0 : index
    %c0_76 = arith.constant 0 : index
    %174 = vector.load %arg8[%c0_74, %c1, %c0_75, %c0_76] : memref<2x2x1x4xf32, #tpu.memory_space<vmem>>, vector<1x1x1x4xf32>
    %175 = vector.shape_cast %174 : vector<1x1x1x4xf32> to vector<1x4xf32>
    %c0_77 = arith.constant 0 : index
    %c1_78 = arith.constant 1 : index
    %c0_79 = arith.constant 0 : index
    %c0_80 = arith.constant 0 : index
    %176 = vector.load %arg9[%c0_77, %c1_78, %c0_79, %c0_80] : memref<2x2x1x4xf32, #tpu.memory_space<vmem>>, vector<1x1x1x4xf32>
    %177 = vector.shape_cast %176 : vector<1x1x1x4xf32> to vector<1x4xf32>
    %cst_81 = arith.constant dense<0.000000e+00> : vector<16xf32>
    %178 = vector.multi_reduction <add>, %173, %cst_81 [1] : vector<16x4xf32> to vector<16xf32>
    %179 = vector.shape_cast %178 : vector<16xf32> to vector<16x1xf32>
    %cst_82 = arith.constant 4.000000e+00 : f32
    %180 = vector.broadcast %cst_82 : f32 to vector<16x1xf32>
    %181 = arith.divf %179, %180 : vector<16x1xf32>
    %182 = vector.broadcast %181 : vector<16x1xf32> to vector<16x4xf32>
    %183 = arith.subf %173, %182 : vector<16x4xf32>
    %184 = arith.mulf %183, %183 : vector<16x4xf32>
    %cst_83 = arith.constant dense<0.000000e+00> : vector<16xf32>
    %185 = vector.multi_reduction <add>, %184, %cst_83 [1] : vector<16x4xf32> to vector<16xf32>
    %186 = vector.shape_cast %185 : vector<16xf32> to vector<16x1xf32>
    %cst_84 = arith.constant 4.000000e+00 : f32
    %187 = vector.broadcast %cst_84 : f32 to vector<16x1xf32>
    %188 = arith.divf %186, %187 : vector<16x1xf32>
    %cst_85 = arith.constant 9.99999974E-6 : f32
    %189 = vector.broadcast %cst_85 : f32 to vector<16x1xf32>
    %190 = arith.addf %188, %189 : vector<16x1xf32>
    %191 = math.rsqrt %190 : vector<16x1xf32>
    %192 = vector.broadcast %191 : vector<16x1xf32> to vector<16x4xf32>
    %193 = arith.mulf %183, %192 : vector<16x4xf32>
    %194 = vector.broadcast %175 : vector<1x4xf32> to vector<16x4xf32>
    %195 = arith.mulf %193, %194 : vector<16x4xf32>
    %196 = vector.broadcast %177 : vector<1x4xf32> to vector<16x4xf32>
    %197 = arith.addf %195, %196 : vector<16x4xf32>
    %c1_86 = arith.constant 1 : index
    %c0_87 = arith.constant 0 : index
    %c0_88 = arith.constant 0 : index
    %198 = vector.load %arg4[%c1_86, %c0_87, %c0_88] : memref<2x4x12xbf16, #tpu.memory_space<vmem>>, vector<1x4x12xbf16>
    %199 = vector.shape_cast %198 : vector<1x4x12xbf16> to vector<4x12xbf16>
    %200 = arith.truncf %197 : vector<16x4xf32> to vector<16x4xbf16>
    %cst_89 = arith.constant dense<0.000000e+00> : vector<16x12xf32>
    %201 = tpu.matmul %200, %199, %cst_89 {dimension_numbers = #tpu.dot_dimension_numbers<[1], [0], [0], [1], [0, 0, 1, 1], [], []>} : vector<16x4xbf16>, vector<4x12xbf16>, vector<16x12xf32> -> vector<16x12xf32>
    %c1_90 = arith.constant 1 : index
    %c0_91 = arith.constant 0 : index
    %c0_92 = arith.constant 0 : index
    %202 = vector.load %arg5[%c1_90, %c0_91, %c0_92] : memref<2x1x12xf32, #tpu.memory_space<vmem>>, vector<1x1x12xf32>
    %203 = vector.shape_cast %202 : vector<1x1x12xf32> to vector<1x12xf32>
    %204 = vector.broadcast %203 : vector<1x12xf32> to vector<16x12xf32>
    %205 = arith.addf %201, %204 : vector<16x12xf32>
    %206 = vector.extract_strided_slice %205 {offsets = [0, 0], sizes = [16, 4], strides = [1, 1]} : vector<16x12xf32> to vector<16x4xf32>
    %207 = vector.extract_strided_slice %205 {offsets = [0, 4], sizes = [16, 4], strides = [1, 1]} : vector<16x12xf32> to vector<16x4xf32>
    %208 = vector.extract_strided_slice %205 {offsets = [0, 8], sizes = [16, 4], strides = [1, 1]} : vector<16x12xf32> to vector<16x4xf32>
    %209 = vector.extract_strided_slice %206 {offsets = [0, 0], sizes = [16, 2], strides = [1, 1]} : vector<16x4xf32> to vector<16x2xf32>
    %cst_93 = arith.constant 0.707106769 : f32
    %210 = vector.broadcast %cst_93 : f32 to vector<16x2xf32>
    %211 = arith.mulf %209, %210 : vector<16x2xf32>
    %212 = vector.extract_strided_slice %207 {offsets = [0, 0], sizes = [16, 2], strides = [1, 1]} : vector<16x4xf32> to vector<16x2xf32>
    %213 = vector.extract_strided_slice %208 {offsets = [0, 0], sizes = [16, 2], strides = [1, 1]} : vector<16x4xf32> to vector<16x2xf32>
    %214 = arith.truncf %211 : vector<16x2xf32> to vector<16x2xbf16>
    %215 = arith.truncf %212 : vector<16x2xf32> to vector<16x2xbf16>
    %cst_94 = arith.constant dense<0.000000e+00> : vector<16x16xf32>
    %216 = tpu.matmul %214, %215, %cst_94 {dimension_numbers = #tpu.dot_dimension_numbers<[1], [1], [0], [0], [0, 0, 1, 0], [], []>} : vector<16x2xbf16>, vector<16x2xbf16>, vector<16x16xf32> -> vector<16x16xf32>
    %cst_95 = arith.constant -1.000000e+04 : f32
    %217 = vector.broadcast %cst_95 : f32 to vector<16x16xf32>
    %218 = arith.select %15, %216, %217 : vector<16x16xi1>, vector<16x16xf32>
    %cst_96 = arith.constant dense<0xFF800000> : vector<16xf32>
    %219 = vector.multi_reduction <maximumf>, %218, %cst_96 [1] : vector<16x16xf32> to vector<16xf32>
    %220 = vector.shape_cast %219 : vector<16xf32> to vector<16x1xf32>
    %221 = vector.broadcast %220 : vector<16x1xf32> to vector<16x16xf32>
    %222 = arith.subf %218, %221 : vector<16x16xf32>
    %223 = math.exp %222 : vector<16x16xf32>
    %cst_97 = arith.constant dense<0.000000e+00> : vector<16xf32>
    %224 = vector.multi_reduction <add>, %223, %cst_97 [1] : vector<16x16xf32> to vector<16xf32>
    %225 = vector.shape_cast %224 : vector<16xf32> to vector<16x1xf32>
    %226 = tpu.reciprocal %225 {approx = true} : vector<16x1xf32> -> vector<16x1xf32>
    %227 = vector.broadcast %226 : vector<16x1xf32> to vector<16x16xf32>
    %228 = arith.mulf %223, %227 : vector<16x16xf32>
    %229 = arith.truncf %228 : vector<16x16xf32> to vector<16x16xbf16>
    %230 = arith.truncf %213 : vector<16x2xf32> to vector<16x2xbf16>
    %cst_98 = arith.constant dense<0.000000e+00> : vector<16x2xf32>
    %231 = tpu.matmul %229, %230, %cst_98 {dimension_numbers = #tpu.dot_dimension_numbers<[1], [0], [0], [1], [0, 0, 1, 1], [], []>} : vector<16x16xbf16>, vector<16x2xbf16>, vector<16x2xf32> -> vector<16x2xf32>
    %232 = vector.extract_strided_slice %206 {offsets = [0, 2], sizes = [16, 2], strides = [1, 1]} : vector<16x4xf32> to vector<16x2xf32>
    %cst_99 = arith.constant 0.707106769 : f32
    %233 = vector.broadcast %cst_99 : f32 to vector<16x2xf32>
    %234 = arith.mulf %232, %233 : vector<16x2xf32>
    %235 = vector.extract_strided_slice %207 {offsets = [0, 2], sizes = [16, 2], strides = [1, 1]} : vector<16x4xf32> to vector<16x2xf32>
    %236 = vector.extract_strided_slice %208 {offsets = [0, 2], sizes = [16, 2], strides = [1, 1]} : vector<16x4xf32> to vector<16x2xf32>
    %237 = arith.truncf %234 : vector<16x2xf32> to vector<16x2xbf16>
    %238 = arith.truncf %235 : vector<16x2xf32> to vector<16x2xbf16>
    %cst_100 = arith.constant dense<0.000000e+00> : vector<16x16xf32>
    %239 = tpu.matmul %237, %238, %cst_100 {dimension_numbers = #tpu.dot_dimension_numbers<[1], [1], [0], [0], [0, 0, 1, 0], [], []>} : vector<16x2xbf16>, vector<16x2xbf16>, vector<16x16xf32> -> vector<16x16xf32>
    %cst_101 = arith.constant -1.000000e+04 : f32
    %240 = vector.broadcast %cst_101 : f32 to vector<16x16xf32>
    %241 = arith.select %15, %239, %240 : vector<16x16xi1>, vector<16x16xf32>
    %cst_102 = arith.constant dense<0xFF800000> : vector<16xf32>
    %242 = vector.multi_reduction <maximumf>, %241, %cst_102 [1] : vector<16x16xf32> to vector<16xf32>
    %243 = vector.shape_cast %242 : vector<16xf32> to vector<16x1xf32>
    %244 = vector.broadcast %243 : vector<16x1xf32> to vector<16x16xf32>
    %245 = arith.subf %241, %244 : vector<16x16xf32>
    %246 = math.exp %245 : vector<16x16xf32>
    %cst_103 = arith.constant dense<0.000000e+00> : vector<16xf32>
    %247 = vector.multi_reduction <add>, %246, %cst_103 [1] : vector<16x16xf32> to vector<16xf32>
    %248 = vector.shape_cast %247 : vector<16xf32> to vector<16x1xf32>
    %249 = tpu.reciprocal %248 {approx = true} : vector<16x1xf32> -> vector<16x1xf32>
    %250 = vector.broadcast %249 : vector<16x1xf32> to vector<16x16xf32>
    %251 = arith.mulf %246, %250 : vector<16x16xf32>
    %252 = arith.truncf %251 : vector<16x16xf32> to vector<16x16xbf16>
    %253 = arith.truncf %236 : vector<16x2xf32> to vector<16x2xbf16>
    %cst_104 = arith.constant dense<0.000000e+00> : vector<16x2xf32>
    %254 = tpu.matmul %252, %253, %cst_104 {dimension_numbers = #tpu.dot_dimension_numbers<[1], [0], [0], [1], [0, 0, 1, 1], [], []>} : vector<16x16xbf16>, vector<16x2xbf16>, vector<16x2xf32> -> vector<16x2xf32>
    %255 = tpu.concatenate %231, %254 in 1 : vector<16x2xf32>, vector<16x2xf32> -> vector<16x4xf32>
    %c1_105 = arith.constant 1 : index
    %c0_106 = arith.constant 0 : index
    %c0_107 = arith.constant 0 : index
    %256 = vector.load %arg6[%c1_105, %c0_106, %c0_107] : memref<2x4x4xbf16, #tpu.memory_space<vmem>>, vector<1x4x4xbf16>
    %257 = vector.shape_cast %256 : vector<1x4x4xbf16> to vector<4x4xbf16>
    %258 = arith.truncf %255 : vector<16x4xf32> to vector<16x4xbf16>
    %cst_108 = arith.constant dense<0.000000e+00> : vector<16x4xf32>
    %259 = tpu.matmul %258, %257, %cst_108 {dimension_numbers = #tpu.dot_dimension_numbers<[1], [0], [0], [1], [0, 0, 1, 1], [], []>} : vector<16x4xbf16>, vector<4x4xbf16>, vector<16x4xf32> -> vector<16x4xf32>
    %c1_109 = arith.constant 1 : index
    %c0_110 = arith.constant 0 : index
    %c0_111 = arith.constant 0 : index
    %260 = vector.load %arg7[%c1_109, %c0_110, %c0_111] : memref<2x1x4xf32, #tpu.memory_space<vmem>>, vector<1x1x4xf32>
    %261 = vector.shape_cast %260 : vector<1x1x4xf32> to vector<1x4xf32>
    %262 = vector.broadcast %261 : vector<1x4xf32> to vector<16x4xf32>
    %263 = arith.addf %259, %262 : vector<16x4xf32>
    %264 = arith.addf %197, %263 : vector<16x4xf32>
    %c1_112 = arith.constant 1 : index
    %c0_113 = arith.constant 0 : index
    %c0_114 = arith.constant 0 : index
    %c0_115 = arith.constant 0 : index
    %265 = vector.load %arg8[%c1_112, %c0_113, %c0_114, %c0_115] : memref<2x2x1x4xf32, #tpu.memory_space<vmem>>, vector<1x1x1x4xf32>
    %266 = vector.shape_cast %265 : vector<1x1x1x4xf32> to vector<1x4xf32>
    %c1_116 = arith.constant 1 : index
    %c0_117 = arith.constant 0 : index
    %c0_118 = arith.constant 0 : index
    %c0_119 = arith.constant 0 : index
    %267 = vector.load %arg9[%c1_116, %c0_117, %c0_118, %c0_119] : memref<2x2x1x4xf32, #tpu.memory_space<vmem>>, vector<1x1x1x4xf32>
    %268 = vector.shape_cast %267 : vector<1x1x1x4xf32> to vector<1x4xf32>
    %cst_120 = arith.constant dense<0.000000e+00> : vector<16xf32>
    %269 = vector.multi_reduction <add>, %264, %cst_120 [1] : vector<16x4xf32> to vector<16xf32>
    %270 = vector.shape_cast %269 : vector<16xf32> to vector<16x1xf32>
    %cst_121 = arith.constant 4.000000e+00 : f32
    %271 = vector.broadcast %cst_121 : f32 to vector<16x1xf32>
    %272 = arith.divf %270, %271 : vector<16x1xf32>
    %273 = vector.broadcast %272 : vector<16x1xf32> to vector<16x4xf32>
    %274 = arith.subf %264, %273 : vector<16x4xf32>
    %275 = arith.mulf %274, %274 : vector<16x4xf32>
    %cst_122 = arith.constant dense<0.000000e+00> : vector<16xf32>
    %276 = vector.multi_reduction <add>, %275, %cst_122 [1] : vector<16x4xf32> to vector<16xf32>
    %277 = vector.shape_cast %276 : vector<16xf32> to vector<16x1xf32>
    %cst_123 = arith.constant 4.000000e+00 : f32
    %278 = vector.broadcast %cst_123 : f32 to vector<16x1xf32>
    %279 = arith.divf %277, %278 : vector<16x1xf32>
    %cst_124 = arith.constant 9.99999974E-6 : f32
    %280 = vector.broadcast %cst_124 : f32 to vector<16x1xf32>
    %281 = arith.addf %279, %280 : vector<16x1xf32>
    %282 = math.rsqrt %281 : vector<16x1xf32>
    %283 = vector.broadcast %282 : vector<16x1xf32> to vector<16x4xf32>
    %284 = arith.mulf %274, %283 : vector<16x4xf32>
    %285 = vector.broadcast %266 : vector<1x4xf32> to vector<16x4xf32>
    %286 = arith.mulf %284, %285 : vector<16x4xf32>
    %287 = vector.broadcast %268 : vector<1x4xf32> to vector<16x4xf32>
    %288 = arith.addf %286, %287 : vector<16x4xf32>
    %289 = vector.broadcast %4 : vector<16x1xf32> to vector<16x4xf32>
    %290 = arith.mulf %288, %289 : vector<16x4xf32>
    %c1_125 = arith.constant 1 : index
    %c0_126 = arith.constant 0 : index
    %c0_127 = arith.constant 0 : index
    %291 = vector.load %arg10[%c1_125, %c0_126, %c0_127] : memref<2x12x4xbf16, #tpu.memory_space<vmem>>, vector<1x12x4xbf16>
    %292 = vector.shape_cast %291 : vector<1x12x4xbf16> to vector<12x4xbf16>
    %c1_128 = arith.constant 1 : index
    %c0_129 = arith.constant 0 : index
    %c0_130 = arith.constant 0 : index
    %293 = vector.load %arg11[%c1_128, %c0_129, %c0_130] : memref<2x1x4xf32, #tpu.memory_space<vmem>>, vector<1x1x4xf32>
    %294 = vector.shape_cast %293 : vector<1x1x4xf32> to vector<1x4xf32>
    %c1_i32_131 = arith.constant 1 : i32
    %295 = tpu.dynamic_rotate %290 by %c1_i32_131 dim 0 : vector<16x4xf32>, i32 -> vector<16x4xf32>
    %cst_132 = arith.constant 0.000000e+00 : f32
    %296 = vector.shape_cast %124 : vector<16x1xi1> to vector<16x1xi1>
    %297 = vector.broadcast %296 : vector<16x1xi1> to vector<16x4xi1>
    %298 = vector.broadcast %cst_132 : f32 to vector<16x4xf32>
    %299 = arith.select %297, %295, %298 : vector<16x4xi1>, vector<16x4xf32>
    %c15_i32_133 = arith.constant 15 : i32
    %300 = tpu.dynamic_rotate %290 by %c15_i32_133 dim 0 : vector<16x4xf32>, i32 -> vector<16x4xf32>
    %cst_134 = arith.constant 0.000000e+00 : f32
    %301 = vector.shape_cast %138 : vector<16x1xi1> to vector<16x1xi1>
    %302 = vector.broadcast %301 : vector<16x1xi1> to vector<16x4xi1>
    %303 = vector.broadcast %cst_134 : f32 to vector<16x4xf32>
    %304 = arith.select %302, %300, %303 : vector<16x4xi1>, vector<16x4xf32>
    %305 = tpu.concatenate %299, %290, %304 in 1 : vector<16x4xf32>, vector<16x4xf32>, vector<16x4xf32> -> vector<16x12xf32>
    %306 = arith.truncf %305 : vector<16x12xf32> to vector<16x12xbf16>
    %cst_135 = arith.constant dense<0.000000e+00> : vector<16x4xf32>
    %307 = tpu.matmul %306, %292, %cst_135 {dimension_numbers = #tpu.dot_dimension_numbers<[1], [0], [0], [1], [0, 0, 1, 1], [], []>} : vector<16x12xbf16>, vector<12x4xbf16>, vector<16x4xf32> -> vector<16x4xf32>
    %308 = vector.broadcast %294 : vector<1x4xf32> to vector<16x4xf32>
    %309 = arith.addf %307, %308 : vector<16x4xf32>
    %cst_136 = arith.constant 0.000000e+00 : f32
    %310 = vector.broadcast %cst_136 : f32 to vector<16x4xf32>
    %311 = arith.maximumf %309, %310 : vector<16x4xf32>
    %312 = vector.broadcast %4 : vector<16x1xf32> to vector<16x4xf32>
    %313 = arith.mulf %311, %312 : vector<16x4xf32>
    %c1_137 = arith.constant 1 : index
    %c0_138 = arith.constant 0 : index
    %c0_139 = arith.constant 0 : index
    %314 = vector.load %arg12[%c1_137, %c0_138, %c0_139] : memref<2x12x4xbf16, #tpu.memory_space<vmem>>, vector<1x12x4xbf16>
    %315 = vector.shape_cast %314 : vector<1x12x4xbf16> to vector<12x4xbf16>
    %c1_140 = arith.constant 1 : index
    %c0_141 = arith.constant 0 : index
    %c0_142 = arith.constant 0 : index
    %316 = vector.load %arg13[%c1_140, %c0_141, %c0_142] : memref<2x1x4xf32, #tpu.memory_space<vmem>>, vector<1x1x4xf32>
    %317 = vector.shape_cast %316 : vector<1x1x4xf32> to vector<1x4xf32>
    %c1_i32_143 = arith.constant 1 : i32
    %318 = tpu.dynamic_rotate %313 by %c1_i32_143 dim 0 : vector<16x4xf32>, i32 -> vector<16x4xf32>
    %cst_144 = arith.constant 0.000000e+00 : f32
    %319 = vector.shape_cast %124 : vector<16x1xi1> to vector<16x1xi1>
    %320 = vector.broadcast %319 : vector<16x1xi1> to vector<16x4xi1>
    %321 = vector.broadcast %cst_144 : f32 to vector<16x4xf32>
    %322 = arith.select %320, %318, %321 : vector<16x4xi1>, vector<16x4xf32>
    %c15_i32_145 = arith.constant 15 : i32
    %323 = tpu.dynamic_rotate %313 by %c15_i32_145 dim 0 : vector<16x4xf32>, i32 -> vector<16x4xf32>
    %cst_146 = arith.constant 0.000000e+00 : f32
    %324 = vector.shape_cast %138 : vector<16x1xi1> to vector<16x1xi1>
    %325 = vector.broadcast %324 : vector<16x1xi1> to vector<16x4xi1>
    %326 = vector.broadcast %cst_146 : f32 to vector<16x4xf32>
    %327 = arith.select %325, %323, %326 : vector<16x4xi1>, vector<16x4xf32>
    %328 = tpu.concatenate %322, %313, %327 in 1 : vector<16x4xf32>, vector<16x4xf32>, vector<16x4xf32> -> vector<16x12xf32>
    %329 = arith.truncf %328 : vector<16x12xf32> to vector<16x12xbf16>
    %cst_147 = arith.constant dense<0.000000e+00> : vector<16x4xf32>
    %330 = tpu.matmul %329, %315, %cst_147 {dimension_numbers = #tpu.dot_dimension_numbers<[1], [0], [0], [1], [0, 0, 1, 1], [], []>} : vector<16x12xbf16>, vector<12x4xbf16>, vector<16x4xf32> -> vector<16x4xf32>
    %331 = vector.broadcast %317 : vector<1x4xf32> to vector<16x4xf32>
    %332 = arith.addf %330, %331 : vector<16x4xf32>
    %333 = vector.broadcast %4 : vector<16x1xf32> to vector<16x4xf32>
    %334 = arith.mulf %332, %333 : vector<16x4xf32>
    %335 = arith.addf %288, %334 : vector<16x4xf32>
    %c1_148 = arith.constant 1 : index
    %c1_149 = arith.constant 1 : index
    %c0_150 = arith.constant 0 : index
    %c0_151 = arith.constant 0 : index
    %336 = vector.load %arg8[%c1_148, %c1_149, %c0_150, %c0_151] : memref<2x2x1x4xf32, #tpu.memory_space<vmem>>, vector<1x1x1x4xf32>
    %337 = vector.shape_cast %336 : vector<1x1x1x4xf32> to vector<1x4xf32>
    %c1_152 = arith.constant 1 : index
    %c1_153 = arith.constant 1 : index
    %c0_154 = arith.constant 0 : index
    %c0_155 = arith.constant 0 : index
    %338 = vector.load %arg9[%c1_152, %c1_153, %c0_154, %c0_155] : memref<2x2x1x4xf32, #tpu.memory_space<vmem>>, vector<1x1x1x4xf32>
    %339 = vector.shape_cast %338 : vector<1x1x1x4xf32> to vector<1x4xf32>
    %cst_156 = arith.constant dense<0.000000e+00> : vector<16xf32>
    %340 = vector.multi_reduction <add>, %335, %cst_156 [1] : vector<16x4xf32> to vector<16xf32>
    %341 = vector.shape_cast %340 : vector<16xf32> to vector<16x1xf32>
    %cst_157 = arith.constant 4.000000e+00 : f32
    %342 = vector.broadcast %cst_157 : f32 to vector<16x1xf32>
    %343 = arith.divf %341, %342 : vector<16x1xf32>
    %344 = vector.broadcast %343 : vector<16x1xf32> to vector<16x4xf32>
    %345 = arith.subf %335, %344 : vector<16x4xf32>
    %346 = arith.mulf %345, %345 : vector<16x4xf32>
    %cst_158 = arith.constant dense<0.000000e+00> : vector<16xf32>
    %347 = vector.multi_reduction <add>, %346, %cst_158 [1] : vector<16x4xf32> to vector<16xf32>
    %348 = vector.shape_cast %347 : vector<16xf32> to vector<16x1xf32>
    %cst_159 = arith.constant 4.000000e+00 : f32
    %349 = vector.broadcast %cst_159 : f32 to vector<16x1xf32>
    %350 = arith.divf %348, %349 : vector<16x1xf32>
    %cst_160 = arith.constant 9.99999974E-6 : f32
    %351 = vector.broadcast %cst_160 : f32 to vector<16x1xf32>
    %352 = arith.addf %350, %351 : vector<16x1xf32>
    %353 = math.rsqrt %352 : vector<16x1xf32>
    %354 = vector.broadcast %353 : vector<16x1xf32> to vector<16x4xf32>
    %355 = arith.mulf %345, %354 : vector<16x4xf32>
    %356 = vector.broadcast %337 : vector<1x4xf32> to vector<16x4xf32>
    %357 = arith.mulf %355, %356 : vector<16x4xf32>
    %358 = vector.broadcast %339 : vector<1x4xf32> to vector<16x4xf32>
    %359 = arith.addf %357, %358 : vector<16x4xf32>
    %360 = vector.broadcast %4 : vector<16x1xf32> to vector<16x4xf32>
    %361 = arith.mulf %359, %360 : vector<16x4xf32>
    %362 = arith.addf %361, %7 : vector<16x4xf32>
    %c0_161 = arith.constant 0 : index
    %c0_162 = arith.constant 0 : index
    %363 = vector.load %arg14[%c0_161, %c0_162] : memref<4x16xbf16, #tpu.memory_space<vmem>>, vector<4x16xbf16>
    %364 = arith.truncf %362 : vector<16x4xf32> to vector<16x4xbf16>
    %cst_163 = arith.constant dense<0.000000e+00> : vector<16x16xf32>
    %365 = tpu.matmul %364, %363, %cst_163 {dimension_numbers = #tpu.dot_dimension_numbers<[1], [0], [0], [1], [0, 0, 1, 1], [], []>} : vector<16x4xbf16>, vector<4x16xbf16>, vector<16x16xf32> -> vector<16x16xf32>
    %c0_164 = arith.constant 0 : index
    %c0_165 = arith.constant 0 : index
    %366 = vector.load %arg15[%c0_164, %c0_165] : memref<1x16xf32, #tpu.memory_space<vmem>>, vector<1x16xf32>
    %367 = vector.broadcast %366 : vector<1x16xf32> to vector<16x16xf32>
    %368 = arith.addf %365, %367 : vector<16x16xf32>
    %369 = vector.broadcast %4 : vector<16x1xf32> to vector<16x16xf32>
    %370 = arith.mulf %368, %369 : vector<16x16xf32>
    %cst_166 = arith.constant 0.000000e+00 : f32
    %371 = vector.broadcast %cst_166 : f32 to vector<16x16xf32>
    %c0_167 = arith.constant 0 : index
    %c0_168 = arith.constant 0 : index
    %c0_169 = arith.constant 0 : index
    %372 = vector.load %arg16[%c0_167, %c0_168, %c0_169] : memref<3x48x32xbf16, #tpu.memory_space<vmem>>, vector<1x48x32xbf16>
    %373 = vector.shape_cast %372 : vector<1x48x32xbf16> to vector<48x32xbf16>
    %c0_170 = arith.constant 0 : index
    %c0_171 = arith.constant 0 : index
    %c0_172 = arith.constant 0 : index
    %374 = vector.load %arg17[%c0_170, %c0_171, %c0_172] : memref<3x1x32xf32, #tpu.memory_space<vmem>>, vector<1x1x32xf32>
    %375 = vector.shape_cast %374 : vector<1x1x32xf32> to vector<1x32xf32>
    %c1_i32_173 = arith.constant 1 : i32
    %376 = tpu.dynamic_rotate %370 by %c1_i32_173 dim 0 : vector<16x16xf32>, i32 -> vector<16x16xf32>
    %cst_174 = arith.constant 0.000000e+00 : f32
    %377 = vector.shape_cast %124 : vector<16x1xi1> to vector<16x1xi1>
    %378 = vector.broadcast %377 : vector<16x1xi1> to vector<16x16xi1>
    %379 = vector.broadcast %cst_174 : f32 to vector<16x16xf32>
    %380 = arith.select %378, %376, %379 : vector<16x16xi1>, vector<16x16xf32>
    %c15_i32_175 = arith.constant 15 : i32
    %381 = tpu.dynamic_rotate %370 by %c15_i32_175 dim 0 : vector<16x16xf32>, i32 -> vector<16x16xf32>
    %cst_176 = arith.constant 0.000000e+00 : f32
    %382 = vector.shape_cast %138 : vector<16x1xi1> to vector<16x1xi1>
    %383 = vector.broadcast %382 : vector<16x1xi1> to vector<16x16xi1>
    %384 = vector.broadcast %cst_176 : f32 to vector<16x16xf32>
    %385 = arith.select %383, %381, %384 : vector<16x16xi1>, vector<16x16xf32>
    %386 = tpu.concatenate %380, %370, %385 in 1 : vector<16x16xf32>, vector<16x16xf32>, vector<16x16xf32> -> vector<16x48xf32>
    %387 = arith.truncf %386 : vector<16x48xf32> to vector<16x48xbf16>
    %cst_177 = arith.constant dense<0.000000e+00> : vector<16x32xf32>
    %388 = tpu.matmul %387, %373, %cst_177 {dimension_numbers = #tpu.dot_dimension_numbers<[1], [0], [0], [1], [0, 0, 1, 1], [], []>} : vector<16x48xbf16>, vector<48x32xbf16>, vector<16x32xf32> -> vector<16x32xf32>
    %389 = vector.broadcast %375 : vector<1x32xf32> to vector<16x32xf32>
    %390 = arith.addf %388, %389 : vector<16x32xf32>
    %391 = vector.extract_strided_slice %390 {offsets = [0, 0], sizes = [16, 16], strides = [1, 1]} : vector<16x32xf32> to vector<16x16xf32>
    %392 = math.tanh %391 : vector<16x16xf32>
    %393 = vector.extract_strided_slice %390 {offsets = [0, 16], sizes = [16, 16], strides = [1, 1]} : vector<16x32xf32> to vector<16x16xf32>
    %394 = arith.negf %393 : vector<16x16xf32>
    %395 = math.exp %394 : vector<16x16xf32>
    %cst_178 = arith.constant 1.000000e+00 : f32
    %396 = vector.broadcast %cst_178 : f32 to vector<16x16xf32>
    %397 = arith.addf %396, %395 : vector<16x16xf32>
    %398 = arith.divf %396, %397 : vector<16x16xf32>
    %399 = arith.mulf %392, %398 : vector<16x16xf32>
    %c0_179 = arith.constant 0 : index
    %c0_180 = arith.constant 0 : index
    %c0_181 = arith.constant 0 : index
    %400 = vector.load %arg18[%c0_179, %c0_180, %c0_181] : memref<3x16x32xbf16, #tpu.memory_space<vmem>>, vector<1x16x32xbf16>
    %401 = vector.shape_cast %400 : vector<1x16x32xbf16> to vector<16x32xbf16>
    %402 = arith.truncf %399 : vector<16x16xf32> to vector<16x16xbf16>
    %cst_182 = arith.constant dense<0.000000e+00> : vector<16x32xf32>
    %403 = tpu.matmul %402, %401, %cst_182 {dimension_numbers = #tpu.dot_dimension_numbers<[1], [0], [0], [1], [0, 0, 1, 1], [], []>} : vector<16x16xbf16>, vector<16x32xbf16>, vector<16x32xf32> -> vector<16x32xf32>
    %c0_183 = arith.constant 0 : index
    %c0_184 = arith.constant 0 : index
    %c0_185 = arith.constant 0 : index
    %404 = vector.load %arg19[%c0_183, %c0_184, %c0_185] : memref<3x1x32xf32, #tpu.memory_space<vmem>>, vector<1x1x32xf32>
    %405 = vector.shape_cast %404 : vector<1x1x32xf32> to vector<1x32xf32>
    %406 = vector.broadcast %405 : vector<1x32xf32> to vector<16x32xf32>
    %407 = arith.addf %403, %406 : vector<16x32xf32>
    %408 = vector.extract_strided_slice %407 {offsets = [0, 0], sizes = [16, 16], strides = [1, 1]} : vector<16x32xf32> to vector<16x16xf32>
    %409 = arith.addf %370, %408 : vector<16x16xf32>
    %410 = vector.broadcast %4 : vector<16x1xf32> to vector<16x16xf32>
    %411 = arith.mulf %409, %410 : vector<16x16xf32>
    %412 = vector.extract_strided_slice %407 {offsets = [0, 16], sizes = [16, 16], strides = [1, 1]} : vector<16x32xf32> to vector<16x16xf32>
    %413 = arith.addf %371, %412 : vector<16x16xf32>
    %c1_186 = arith.constant 1 : index
    %c0_187 = arith.constant 0 : index
    %c0_188 = arith.constant 0 : index
    %414 = vector.load %arg16[%c1_186, %c0_187, %c0_188] : memref<3x48x32xbf16, #tpu.memory_space<vmem>>, vector<1x48x32xbf16>
    %415 = vector.shape_cast %414 : vector<1x48x32xbf16> to vector<48x32xbf16>
    %c1_189 = arith.constant 1 : index
    %c0_190 = arith.constant 0 : index
    %c0_191 = arith.constant 0 : index
    %416 = vector.load %arg17[%c1_189, %c0_190, %c0_191] : memref<3x1x32xf32, #tpu.memory_space<vmem>>, vector<1x1x32xf32>
    %417 = vector.shape_cast %416 : vector<1x1x32xf32> to vector<1x32xf32>
    %c2_i32 = arith.constant 2 : i32
    %418 = tpu.dynamic_rotate %411 by %c2_i32 dim 0 : vector<16x16xf32>, i32 -> vector<16x16xf32>
    %c-2_i32 = arith.constant -2 : i32
    %419 = vector.broadcast %c-2_i32 : i32 to vector<16x1xi32>
    %420 = arith.addi %0, %419 : vector<16x1xi32>
    %c0_i32_192 = arith.constant 0 : i32
    %421 = vector.broadcast %c0_i32_192 : i32 to vector<16x1xi32>
    %422 = arith.cmpi sge, %420, %421 : vector<16x1xi32>
    %c-2_i32_193 = arith.constant -2 : i32
    %423 = vector.broadcast %c-2_i32_193 : i32 to vector<16x1xi32>
    %424 = arith.addi %0, %423 : vector<16x1xi32>
    %c16_i32_194 = arith.constant 16 : i32
    %425 = vector.broadcast %c16_i32_194 : i32 to vector<16x1xi32>
    %426 = arith.cmpi slt, %424, %425 : vector<16x1xi32>
    %427 = arith.andi %422, %426 : vector<16x1xi1>
    %cst_195 = arith.constant 0.000000e+00 : f32
    %428 = vector.shape_cast %427 : vector<16x1xi1> to vector<16x1xi1>
    %429 = vector.broadcast %428 : vector<16x1xi1> to vector<16x16xi1>
    %430 = vector.broadcast %cst_195 : f32 to vector<16x16xf32>
    %431 = arith.select %429, %418, %430 : vector<16x16xi1>, vector<16x16xf32>
    %c14_i32 = arith.constant 14 : i32
    %432 = tpu.dynamic_rotate %411 by %c14_i32 dim 0 : vector<16x16xf32>, i32 -> vector<16x16xf32>
    %c2_i32_196 = arith.constant 2 : i32
    %433 = vector.broadcast %c2_i32_196 : i32 to vector<16x1xi32>
    %434 = arith.addi %0, %433 : vector<16x1xi32>
    %c0_i32_197 = arith.constant 0 : i32
    %435 = vector.broadcast %c0_i32_197 : i32 to vector<16x1xi32>
    %436 = arith.cmpi sge, %434, %435 : vector<16x1xi32>
    %c2_i32_198 = arith.constant 2 : i32
    %437 = vector.broadcast %c2_i32_198 : i32 to vector<16x1xi32>
    %438 = arith.addi %0, %437 : vector<16x1xi32>
    %c16_i32_199 = arith.constant 16 : i32
    %439 = vector.broadcast %c16_i32_199 : i32 to vector<16x1xi32>
    %440 = arith.cmpi slt, %438, %439 : vector<16x1xi32>
    %441 = arith.andi %436, %440 : vector<16x1xi1>
    %cst_200 = arith.constant 0.000000e+00 : f32
    %442 = vector.shape_cast %441 : vector<16x1xi1> to vector<16x1xi1>
    %443 = vector.broadcast %442 : vector<16x1xi1> to vector<16x16xi1>
    %444 = vector.broadcast %cst_200 : f32 to vector<16x16xf32>
    %445 = arith.select %443, %432, %444 : vector<16x16xi1>, vector<16x16xf32>
    %446 = tpu.concatenate %431, %411, %445 in 1 : vector<16x16xf32>, vector<16x16xf32>, vector<16x16xf32> -> vector<16x48xf32>
    %447 = arith.truncf %446 : vector<16x48xf32> to vector<16x48xbf16>
    %cst_201 = arith.constant dense<0.000000e+00> : vector<16x32xf32>
    %448 = tpu.matmul %447, %415, %cst_201 {dimension_numbers = #tpu.dot_dimension_numbers<[1], [0], [0], [1], [0, 0, 1, 1], [], []>} : vector<16x48xbf16>, vector<48x32xbf16>, vector<16x32xf32> -> vector<16x32xf32>
    %449 = vector.broadcast %417 : vector<1x32xf32> to vector<16x32xf32>
    %450 = arith.addf %448, %449 : vector<16x32xf32>
    %451 = vector.extract_strided_slice %450 {offsets = [0, 0], sizes = [16, 16], strides = [1, 1]} : vector<16x32xf32> to vector<16x16xf32>
    %452 = math.tanh %451 : vector<16x16xf32>
    %453 = vector.extract_strided_slice %450 {offsets = [0, 16], sizes = [16, 16], strides = [1, 1]} : vector<16x32xf32> to vector<16x16xf32>
    %454 = arith.negf %453 : vector<16x16xf32>
    %455 = math.exp %454 : vector<16x16xf32>
    %cst_202 = arith.constant 1.000000e+00 : f32
    %456 = vector.broadcast %cst_202 : f32 to vector<16x16xf32>
    %457 = arith.addf %456, %455 : vector<16x16xf32>
    %458 = arith.divf %456, %457 : vector<16x16xf32>
    %459 = arith.mulf %452, %458 : vector<16x16xf32>
    %c1_203 = arith.constant 1 : index
    %c0_204 = arith.constant 0 : index
    %c0_205 = arith.constant 0 : index
    %460 = vector.load %arg18[%c1_203, %c0_204, %c0_205] : memref<3x16x32xbf16, #tpu.memory_space<vmem>>, vector<1x16x32xbf16>
    %461 = vector.shape_cast %460 : vector<1x16x32xbf16> to vector<16x32xbf16>
    %462 = arith.truncf %459 : vector<16x16xf32> to vector<16x16xbf16>
    %cst_206 = arith.constant dense<0.000000e+00> : vector<16x32xf32>
    %463 = tpu.matmul %462, %461, %cst_206 {dimension_numbers = #tpu.dot_dimension_numbers<[1], [0], [0], [1], [0, 0, 1, 1], [], []>} : vector<16x16xbf16>, vector<16x32xbf16>, vector<16x32xf32> -> vector<16x32xf32>
    %c1_207 = arith.constant 1 : index
    %c0_208 = arith.constant 0 : index
    %c0_209 = arith.constant 0 : index
    %464 = vector.load %arg19[%c1_207, %c0_208, %c0_209] : memref<3x1x32xf32, #tpu.memory_space<vmem>>, vector<1x1x32xf32>
    %465 = vector.shape_cast %464 : vector<1x1x32xf32> to vector<1x32xf32>
    %466 = vector.broadcast %465 : vector<1x32xf32> to vector<16x32xf32>
    %467 = arith.addf %463, %466 : vector<16x32xf32>
    %468 = vector.extract_strided_slice %467 {offsets = [0, 0], sizes = [16, 16], strides = [1, 1]} : vector<16x32xf32> to vector<16x16xf32>
    %469 = arith.addf %411, %468 : vector<16x16xf32>
    %470 = vector.broadcast %4 : vector<16x1xf32> to vector<16x16xf32>
    %471 = arith.mulf %469, %470 : vector<16x16xf32>
    %472 = vector.extract_strided_slice %467 {offsets = [0, 16], sizes = [16, 16], strides = [1, 1]} : vector<16x32xf32> to vector<16x16xf32>
    %473 = arith.addf %413, %472 : vector<16x16xf32>
    %c2 = arith.constant 2 : index
    %c0_210 = arith.constant 0 : index
    %c0_211 = arith.constant 0 : index
    %474 = vector.load %arg16[%c2, %c0_210, %c0_211] : memref<3x48x32xbf16, #tpu.memory_space<vmem>>, vector<1x48x32xbf16>
    %475 = vector.shape_cast %474 : vector<1x48x32xbf16> to vector<48x32xbf16>
    %c2_212 = arith.constant 2 : index
    %c0_213 = arith.constant 0 : index
    %c0_214 = arith.constant 0 : index
    %476 = vector.load %arg17[%c2_212, %c0_213, %c0_214] : memref<3x1x32xf32, #tpu.memory_space<vmem>>, vector<1x1x32xf32>
    %477 = vector.shape_cast %476 : vector<1x1x32xf32> to vector<1x32xf32>
    %c4_i32 = arith.constant 4 : i32
    %478 = tpu.dynamic_rotate %471 by %c4_i32 dim 0 : vector<16x16xf32>, i32 -> vector<16x16xf32>
    %c-4_i32 = arith.constant -4 : i32
    %479 = vector.broadcast %c-4_i32 : i32 to vector<16x1xi32>
    %480 = arith.addi %0, %479 : vector<16x1xi32>
    %c0_i32_215 = arith.constant 0 : i32
    %481 = vector.broadcast %c0_i32_215 : i32 to vector<16x1xi32>
    %482 = arith.cmpi sge, %480, %481 : vector<16x1xi32>
    %c-4_i32_216 = arith.constant -4 : i32
    %483 = vector.broadcast %c-4_i32_216 : i32 to vector<16x1xi32>
    %484 = arith.addi %0, %483 : vector<16x1xi32>
    %c16_i32_217 = arith.constant 16 : i32
    %485 = vector.broadcast %c16_i32_217 : i32 to vector<16x1xi32>
    %486 = arith.cmpi slt, %484, %485 : vector<16x1xi32>
    %487 = arith.andi %482, %486 : vector<16x1xi1>
    %cst_218 = arith.constant 0.000000e+00 : f32
    %488 = vector.shape_cast %487 : vector<16x1xi1> to vector<16x1xi1>
    %489 = vector.broadcast %488 : vector<16x1xi1> to vector<16x16xi1>
    %490 = vector.broadcast %cst_218 : f32 to vector<16x16xf32>
    %491 = arith.select %489, %478, %490 : vector<16x16xi1>, vector<16x16xf32>
    %c12_i32 = arith.constant 12 : i32
    %492 = tpu.dynamic_rotate %471 by %c12_i32 dim 0 : vector<16x16xf32>, i32 -> vector<16x16xf32>
    %c4_i32_219 = arith.constant 4 : i32
    %493 = vector.broadcast %c4_i32_219 : i32 to vector<16x1xi32>
    %494 = arith.addi %0, %493 : vector<16x1xi32>
    %c0_i32_220 = arith.constant 0 : i32
    %495 = vector.broadcast %c0_i32_220 : i32 to vector<16x1xi32>
    %496 = arith.cmpi sge, %494, %495 : vector<16x1xi32>
    %c4_i32_221 = arith.constant 4 : i32
    %497 = vector.broadcast %c4_i32_221 : i32 to vector<16x1xi32>
    %498 = arith.addi %0, %497 : vector<16x1xi32>
    %c16_i32_222 = arith.constant 16 : i32
    %499 = vector.broadcast %c16_i32_222 : i32 to vector<16x1xi32>
    %500 = arith.cmpi slt, %498, %499 : vector<16x1xi32>
    %501 = arith.andi %496, %500 : vector<16x1xi1>
    %cst_223 = arith.constant 0.000000e+00 : f32
    %502 = vector.shape_cast %501 : vector<16x1xi1> to vector<16x1xi1>
    %503 = vector.broadcast %502 : vector<16x1xi1> to vector<16x16xi1>
    %504 = vector.broadcast %cst_223 : f32 to vector<16x16xf32>
    %505 = arith.select %503, %492, %504 : vector<16x16xi1>, vector<16x16xf32>
    %506 = tpu.concatenate %491, %471, %505 in 1 : vector<16x16xf32>, vector<16x16xf32>, vector<16x16xf32> -> vector<16x48xf32>
    %507 = arith.truncf %506 : vector<16x48xf32> to vector<16x48xbf16>
    %cst_224 = arith.constant dense<0.000000e+00> : vector<16x32xf32>
    %508 = tpu.matmul %507, %475, %cst_224 {dimension_numbers = #tpu.dot_dimension_numbers<[1], [0], [0], [1], [0, 0, 1, 1], [], []>} : vector<16x48xbf16>, vector<48x32xbf16>, vector<16x32xf32> -> vector<16x32xf32>
    %509 = vector.broadcast %477 : vector<1x32xf32> to vector<16x32xf32>
    %510 = arith.addf %508, %509 : vector<16x32xf32>
    %511 = vector.extract_strided_slice %510 {offsets = [0, 0], sizes = [16, 16], strides = [1, 1]} : vector<16x32xf32> to vector<16x16xf32>
    %512 = math.tanh %511 : vector<16x16xf32>
    %513 = vector.extract_strided_slice %510 {offsets = [0, 16], sizes = [16, 16], strides = [1, 1]} : vector<16x32xf32> to vector<16x16xf32>
    %514 = arith.negf %513 : vector<16x16xf32>
    %515 = math.exp %514 : vector<16x16xf32>
    %cst_225 = arith.constant 1.000000e+00 : f32
    %516 = vector.broadcast %cst_225 : f32 to vector<16x16xf32>
    %517 = arith.addf %516, %515 : vector<16x16xf32>
    %518 = arith.divf %516, %517 : vector<16x16xf32>
    %519 = arith.mulf %512, %518 : vector<16x16xf32>
    %c2_226 = arith.constant 2 : index
    %c0_227 = arith.constant 0 : index
    %c0_228 = arith.constant 0 : index
    %520 = vector.load %arg18[%c2_226, %c0_227, %c0_228] : memref<3x16x32xbf16, #tpu.memory_space<vmem>>, vector<1x16x32xbf16>
    %521 = vector.shape_cast %520 : vector<1x16x32xbf16> to vector<16x32xbf16>
    %522 = arith.truncf %519 : vector<16x16xf32> to vector<16x16xbf16>
    %cst_229 = arith.constant dense<0.000000e+00> : vector<16x32xf32>
    %523 = tpu.matmul %522, %521, %cst_229 {dimension_numbers = #tpu.dot_dimension_numbers<[1], [0], [0], [1], [0, 0, 1, 1], [], []>} : vector<16x16xbf16>, vector<16x32xbf16>, vector<16x32xf32> -> vector<16x32xf32>
    %c2_230 = arith.constant 2 : index
    %c0_231 = arith.constant 0 : index
    %c0_232 = arith.constant 0 : index
    %524 = vector.load %arg19[%c2_230, %c0_231, %c0_232] : memref<3x1x32xf32, #tpu.memory_space<vmem>>, vector<1x1x32xf32>
    %525 = vector.shape_cast %524 : vector<1x1x32xf32> to vector<1x32xf32>
    %526 = vector.broadcast %525 : vector<1x32xf32> to vector<16x32xf32>
    %527 = arith.addf %523, %526 : vector<16x32xf32>
    %528 = vector.extract_strided_slice %527 {offsets = [0, 0], sizes = [16, 16], strides = [1, 1]} : vector<16x32xf32> to vector<16x16xf32>
    %529 = arith.addf %473, %528 : vector<16x16xf32>
    %530 = vector.broadcast %4 : vector<16x1xf32> to vector<16x16xf32>
    %531 = arith.mulf %529, %530 : vector<16x16xf32>
    %c0_233 = arith.constant 0 : index
    %c0_234 = arith.constant 0 : index
    %532 = vector.load %arg20[%c0_233, %c0_234] : memref<16x8xbf16, #tpu.memory_space<vmem>>, vector<16x8xbf16>
    %533 = arith.truncf %531 : vector<16x16xf32> to vector<16x16xbf16>
    %cst_235 = arith.constant dense<0.000000e+00> : vector<16x8xf32>
    %534 = tpu.matmul %533, %532, %cst_235 {dimension_numbers = #tpu.dot_dimension_numbers<[1], [0], [0], [1], [0, 0, 1, 1], [], []>} : vector<16x16xbf16>, vector<16x8xbf16>, vector<16x8xf32> -> vector<16x8xf32>
    %c0_236 = arith.constant 0 : index
    %c0_237 = arith.constant 0 : index
    %535 = vector.load %arg21[%c0_236, %c0_237] : memref<1x8xf32, #tpu.memory_space<vmem>>, vector<1x8xf32>
    %536 = vector.broadcast %535 : vector<1x8xf32> to vector<16x8xf32>
    %537 = arith.addf %534, %536 : vector<16x8xf32>
    %538 = vector.broadcast %4 : vector<16x1xf32> to vector<16x8xf32>
    %539 = arith.mulf %537, %538 : vector<16x8xf32>
    %540 = vector.extract_strided_slice %539 {offsets = [0, 0], sizes = [16, 4], strides = [1, 1]} : vector<16x8xf32> to vector<16x4xf32>
    %541 = vector.extract_strided_slice %539 {offsets = [0, 4], sizes = [16, 4], strides = [1, 1]} : vector<16x8xf32> to vector<16x4xf32>
    %542 = math.exp %541 : vector<16x4xf32>
    %543 = arith.mulf %8, %542 : vector<16x4xf32>
    %544 = vector.broadcast %4 : vector<16x1xf32> to vector<16x4xf32>
    %545 = arith.mulf %543, %544 : vector<16x4xf32>
    %546 = arith.addf %540, %545 : vector<16x4xf32>
    %cst_238 = arith.constant dense<0.000000e+00> : vector<16xf32>
    %547 = vector.multi_reduction <add>, %541, %cst_238 [1] : vector<16x4xf32> to vector<16xf32>
    %548 = vector.shape_cast %547 : vector<16xf32> to vector<16x1xf32>
    %cst_239 = arith.constant dense<0.000000e+00> : vector<1xf32>
    %549 = vector.multi_reduction <add>, %548, %cst_239 [0] : vector<16x1xf32> to vector<1xf32>
    %550 = vector.shape_cast %549 : vector<1xf32> to vector<1x1xf32>
    %551 = vector.shape_cast %550 : vector<1x1xf32> to vector<1x1xf32>
    %552 = vector.broadcast %551 : vector<1x1xf32> to vector<1x128xf32>
    %c0_240 = arith.constant 0 : index
    %c0_241 = arith.constant 0 : index
    %c0_242 = arith.constant 0 : index
    %553 = vector.load %arg23[%c0_240, %c0_241, %c0_242] : memref<1x1x128xf32, #tpu.memory_space<vmem>>, vector<1x1x128xf32>
    %554 = vector.shape_cast %553 : vector<1x1x128xf32> to vector<1x128xf32>
    %555 = vector.shape_cast %552 : vector<1x128xf32> to vector<1x1x128xf32>
    tpu.vector_store %arg23[%c0_240, %c0_241, %c0_242], %555 {strides = array<i32>} : memref<1x1x128xf32, #tpu.memory_space<vmem>>, vector<1x1x128xf32>,
    %556 = tpu.concatenate %7, %546 in 1 : vector<16x4xf32>, vector<16x4xf32> -> vector<16x8xf32>
    %c0_243 = arith.constant 0 : index
    %c0_244 = arith.constant 0 : index
    %c0_245 = arith.constant 0 : index
    %557 = vector.load %arg22[%c0_243, %c0_244, %c0_245] : memref<1x16x8xf32, #tpu.memory_space<vmem>>, vector<1x16x8xf32>
    %558 = vector.shape_cast %557 : vector<1x16x8xf32> to vector<16x8xf32>
    %559 = vector.shape_cast %556 : vector<16x8xf32> to vector<1x16x8xf32>
    tpu.vector_store %arg22[%c0_243, %c0_244, %c0_245], %559 {strides = array<i32>} : memref<1x16x8xf32, #tpu.memory_space<vmem>>, vector<1x16x8xf32>,
    return
  }
  func.func @transform_0(%arg0: i32) -> (i32, i32, i32) {
    %c0_i32 = arith.constant 0 : i32
    %c0_i32_0 = arith.constant 0 : i32
    %c0_i32_1 = arith.constant 0 : i32
    return %arg0, %c0_i32, %c0_i32_0 : i32, i32, i32
  }
  func.func @transform_1(%arg0: i32) -> (i32, i32, i32) {
    %c0_i32 = arith.constant 0 : i32
    %c0_i32_0 = arith.constant 0 : i32
    %c0_i32_1 = arith.constant 0 : i32
    return %arg0, %c0_i32, %c0_i32_0 : i32, i32, i32
  }
  func.func @transform_2(%arg0: i32) -> (i32, i32, i32) {
    %c0_i32 = arith.constant 0 : i32
    %c0_i32_0 = arith.constant 0 : i32
    %c0_i32_1 = arith.constant 0 : i32
    return %arg0, %c0_i32, %c0_i32_0 : i32, i32, i32
  }
  func.func @transform_3(%arg0: i32) -> (i32, i32, i32) {
    %c0_i32 = arith.constant 0 : i32
    %c0_i32_0 = arith.constant 0 : i32
    %c0_i32_1 = arith.constant 0 : i32
    %c0_i32_2 = arith.constant 0 : i32
    return %c0_i32, %c0_i32_0, %c0_i32_1 : i32, i32, i32
  }
  func.func @transform_4(%arg0: i32) -> (i32, i32, i32) {
    %c0_i32 = arith.constant 0 : i32
    %c0_i32_0 = arith.constant 0 : i32
    %c0_i32_1 = arith.constant 0 : i32
    %c0_i32_2 = arith.constant 0 : i32
    return %c0_i32, %c0_i32_0, %c0_i32_1 : i32, i32, i32
  }
  func.func @transform_5(%arg0: i32) -> (i32, i32, i32) {
    %c0_i32 = arith.constant 0 : i32
    %c0_i32_0 = arith.constant 0 : i32
    %c0_i32_1 = arith.constant 0 : i32
    %c0_i32_2 = arith.constant 0 : i32
    return %c0_i32, %c0_i32_0, %c0_i32_1 : i32, i32, i32
  }
  func.func @transform_6(%arg0: i32) -> (i32, i32, i32) {
    %c0_i32 = arith.constant 0 : i32
    %c0_i32_0 = arith.constant 0 : i32
    %c0_i32_1 = arith.constant 0 : i32
    %c0_i32_2 = arith.constant 0 : i32
    return %c0_i32, %c0_i32_0, %c0_i32_1 : i32, i32, i32
  }
  func.func @transform_7(%arg0: i32) -> (i32, i32, i32, i32) {
    %c0_i32 = arith.constant 0 : i32
    %c0_i32_0 = arith.constant 0 : i32
    %c0_i32_1 = arith.constant 0 : i32
    %c0_i32_2 = arith.constant 0 : i32
    %c0_i32_3 = arith.constant 0 : i32
    return %c0_i32, %c0_i32_0, %c0_i32_1, %c0_i32_2 : i32, i32, i32, i32
  }
  func.func @transform_8(%arg0: i32) -> (i32, i32, i32, i32) {
    %c0_i32 = arith.constant 0 : i32
    %c0_i32_0 = arith.constant 0 : i32
    %c0_i32_1 = arith.constant 0 : i32
    %c0_i32_2 = arith.constant 0 : i32
    %c0_i32_3 = arith.constant 0 : i32
    return %c0_i32, %c0_i32_0, %c0_i32_1, %c0_i32_2 : i32, i32, i32, i32
  }
  func.func @transform_9(%arg0: i32) -> (i32, i32, i32) {
    %c0_i32 = arith.constant 0 : i32
    %c0_i32_0 = arith.constant 0 : i32
    %c0_i32_1 = arith.constant 0 : i32
    %c0_i32_2 = arith.constant 0 : i32
    return %c0_i32, %c0_i32_0, %c0_i32_1 : i32, i32, i32
  }
  func.func @transform_10(%arg0: i32) -> (i32, i32, i32) {
    %c0_i32 = arith.constant 0 : i32
    %c0_i32_0 = arith.constant 0 : i32
    %c0_i32_1 = arith.constant 0 : i32
    %c0_i32_2 = arith.constant 0 : i32
    return %c0_i32, %c0_i32_0, %c0_i32_1 : i32, i32, i32
  }
  func.func @transform_11(%arg0: i32) -> (i32, i32, i32) {
    %c0_i32 = arith.constant 0 : i32
    %c0_i32_0 = arith.constant 0 : i32
    %c0_i32_1 = arith.constant 0 : i32
    %c0_i32_2 = arith.constant 0 : i32
    return %c0_i32, %c0_i32_0, %c0_i32_1 : i32, i32, i32
  }
  func.func @transform_12(%arg0: i32) -> (i32, i32, i32) {
    %c0_i32 = arith.constant 0 : i32
    %c0_i32_0 = arith.constant 0 : i32
    %c0_i32_1 = arith.constant 0 : i32
    %c0_i32_2 = arith.constant 0 : i32
    return %c0_i32, %c0_i32_0, %c0_i32_1 : i32, i32, i32
  }
  func.func @transform_13(%arg0: i32) -> (i32, i32) {
    %c0_i32 = arith.constant 0 : i32
    %c0_i32_0 = arith.constant 0 : i32
    %c0_i32_1 = arith.constant 0 : i32
    return %c0_i32, %c0_i32_0 : i32, i32
  }
  func.func @transform_14(%arg0: i32) -> (i32, i32) {
    %c0_i32 = arith.constant 0 : i32
    %c0_i32_0 = arith.constant 0 : i32
    %c0_i32_1 = arith.constant 0 : i32
    return %c0_i32, %c0_i32_0 : i32, i32
  }
  func.func @transform_15(%arg0: i32) -> (i32, i32, i32) {
    %c0_i32 = arith.constant 0 : i32
    %c0_i32_0 = arith.constant 0 : i32
    %c0_i32_1 = arith.constant 0 : i32
    %c0_i32_2 = arith.constant 0 : i32
    return %c0_i32, %c0_i32_0, %c0_i32_1 : i32, i32, i32
  }
  func.func @transform_16(%arg0: i32) -> (i32, i32, i32) {
    %c0_i32 = arith.constant 0 : i32
    %c0_i32_0 = arith.constant 0 : i32
    %c0_i32_1 = arith.constant 0 : i32
    %c0_i32_2 = arith.constant 0 : i32
    return %c0_i32, %c0_i32_0, %c0_i32_1 : i32, i32, i32
  }
  func.func @transform_17(%arg0: i32) -> (i32, i32, i32) {
    %c0_i32 = arith.constant 0 : i32
    %c0_i32_0 = arith.constant 0 : i32
    %c0_i32_1 = arith.constant 0 : i32
    %c0_i32_2 = arith.constant 0 : i32
    return %c0_i32, %c0_i32_0, %c0_i32_1 : i32, i32, i32
  }
  func.func @transform_18(%arg0: i32) -> (i32, i32, i32) {
    %c0_i32 = arith.constant 0 : i32
    %c0_i32_0 = arith.constant 0 : i32
    %c0_i32_1 = arith.constant 0 : i32
    %c0_i32_2 = arith.constant 0 : i32
    return %c0_i32, %c0_i32_0, %c0_i32_1 : i32, i32, i32
  }
  func.func @transform_19(%arg0: i32) -> (i32, i32) {
    %c0_i32 = arith.constant 0 : i32
    %c0_i32_0 = arith.constant 0 : i32
    %c0_i32_1 = arith.constant 0 : i32
    return %c0_i32, %c0_i32_0 : i32, i32
  }
  func.func @transform_20(%arg0: i32) -> (i32, i32) {
    %c0_i32 = arith.constant 0 : i32
    %c0_i32_0 = arith.constant 0 : i32
    %c0_i32_1 = arith.constant 0 : i32
    return %c0_i32, %c0_i32_0 : i32, i32
  }
  func.func @transform_21(%arg0: i32) -> (i32, i32, i32) {
    %c0_i32 = arith.constant 0 : i32
    %c0_i32_0 = arith.constant 0 : i32
    %c0_i32_1 = arith.constant 0 : i32
    return %arg0, %c0_i32, %c0_i32_0 : i32, i32, i32
  }
  func.func @transform_22(%arg0: i32) -> (i32, i32, i32) {
    %c0_i32 = arith.constant 0 : i32
    %c0_i32_0 = arith.constant 0 : i32
    %c0_i32_1 = arith.constant 0 : i32
    return %arg0, %c0_i32, %c0_i32_0 : i32, i32, i32
  }
}

</mosaic_0001>

<llo_original>
// kernel: tpu_custom_call.1
$region0: #{tpu_custom_call.1}
  #allocation0 [shape = 'u32[]', space=smem, size = 0x4, offset = 0x4, fixed_abs, tag = 'smem constant byte address 0x4 - core index']
  #allocation1 [shape = 'u32[144,128]{1,0:T(1,128)}', space=vmem, size = 0x12000, scoped, tag = 'internal scratch']
  %s0 = inlined_call_operand.vmem [shape: f32[2,16,8], index: 0, kind: input, shape index: {}]
  %s1 = inlined_call_operand.vmem [shape: f32[2,16,1], index: 1, kind: input, shape index: {}]
  %s2 = inlined_call_operand.vmem [shape: f32[2,1,16], index: 2, kind: input, shape index: {}]
  %s3 = inlined_call_operand.vmem [shape: bf16[2,4,12], index: 3, kind: input, shape index: {}]
  %s4 = inlined_call_operand.vmem [shape: f32[2,1,12], index: 4, kind: input, shape index: {}]
  %s5 = inlined_call_operand.vmem [shape: bf16[2,4,4], index: 5, kind: input, shape index: {}]
  %s6 = inlined_call_operand.vmem [shape: f32[2,1,4], index: 6, kind: input, shape index: {}]
  %s7 = inlined_call_operand.vmem [shape: f32[2,2,1,4], index: 7, kind: input, shape index: {}]
  %s8 = inlined_call_operand.vmem [shape: f32[2,2,1,4], index: 8, kind: input, shape index: {}]
  %s9 = inlined_call_operand.vmem [shape: bf16[2,12,4], index: 9, kind: input, shape index: {}]
  %s10 = inlined_call_operand.vmem [shape: f32[2,1,4], index: 10, kind: input, shape index: {}]
  %s11 = inlined_call_operand.vmem [shape: bf16[2,12,4], index: 11, kind: input, shape index: {}]
  %s12 = inlined_call_operand.vmem [shape: f32[2,1,4], index: 12, kind: input, shape index: {}]
  %s13 = inlined_call_operand.vmem [shape: bf16[4,16], index: 13, kind: input, shape index: {}]
  %s14 = inlined_call_operand.vmem [shape: f32[1,16], index: 14, kind: input, shape index: {}]
  %s15 = inlined_call_operand.vmem [shape: bf16[3,48,32], index: 15, kind: input, shape index: {}]
  %s16 = inlined_call_operand.vmem [shape: f32[3,1,32], index: 16, kind: input, shape index: {}]
  %s17 = inlined_call_operand.vmem [shape: bf16[3,16,32], index: 17, kind: input, shape index: {}]
  %s18 = inlined_call_operand.vmem [shape: f32[3,1,32], index: 18, kind: input, shape index: {}]
  %s19 = inlined_call_operand.vmem [shape: bf16[16,8], index: 19, kind: input, shape index: {}]
  %s20 = inlined_call_operand.vmem [shape: f32[1,8], index: 20, kind: input, shape index: {}]
  %s21 = inlined_call_operand.vmem [shape: f32[2,16,8], index: 21, kind: output, shape index: {0}]
  %s22 = inlined_call_operand.hbm [shape: f32[2,1,128], index: 22, kind: output, shape index: {1}]
  %23 = xla_tuple %s21, %s22
  %s24 = sld [smem:[#allocation0]]
  $region125: #{tpu_custom_call.1} parent=0
    _
  %s26 = ssub.s32 1, %s24
  %s27 = scalar_select 0, %s26, %s24
  $region1: #{tpu_custom_call.1} parent=0
    #allocation2 [shape = 'u8[1024]{0}', space=vmem, size = 0x400, scoped, tag = 'output window, operand 1']
    #allocation3 [shape = 's32[2]{0}', space=sflag, size = 0x8, scoped, tag = 'scoped memory for tpu_custom_call.1']
    %28 = vsyncpa [#allocation3], 0
    %s29 = scalar_lea.sflag [#allocation3], 1
    %30 = vsyncpa %s29, 0
    loop: start=0, step=1, limit=4
    $region2: #{tpu_custom_call.1} parent=1 // loop_pre_header
      _
    $region3: #{tpu_custom_call.1} parent=1 // loop_header
      %s32 = sphi 0, %s36
      %p33 = scmp.ge.s32.totalorder %s32, 4
      %s42 = sphi 0, %s44
      %s45 = sphi 0, %s42
      %s46 = sphi 0, %s45
      %s62 = sphi 0, %s46
      %s68 = sphi 0, %s70
      %s71 = sphi 0, %s68
      %s72 = sphi 0, %s71
      %s88 = sphi 0, %s72
      %s94 = sphi 0, %s96
      %s97 = sphi 0, %s94
      %s98 = sphi 0, %s97
      %s114 = sphi 0, %s98
      %s118 = sphi 0, %s118
      %s120 = sphi 0, %s118
      %s121 = sphi 0, %s120
      %s135 = sphi 0, %s121
      %s139 = sphi 0, %s139
      %s141 = sphi 0, %s139
      %s142 = sphi 0, %s141
      %s156 = sphi 0, %s142
      %s160 = sphi 0, %s160
      %s162 = sphi 0, %s160
      %s163 = sphi 0, %s162
      %s177 = sphi 0, %s163
      %s181 = sphi 0, %s181
      %s183 = sphi 0, %s181
      %s184 = sphi 0, %s183
      %s198 = sphi 0, %s184
      %s202 = sphi 0, %s202
      %s204 = sphi 0, %s202
      %s205 = sphi 0, %s204
      %s219 = sphi 0, %s205
      %s223 = sphi 0, %s223
      %s225 = sphi 0, %s223
      %s226 = sphi 0, %s225
      %s240 = sphi 0, %s226
      %s244 = sphi 0, %s244
      %s246 = sphi 0, %s244
      %s247 = sphi 0, %s246
      %s261 = sphi 0, %s247
      %s265 = sphi 0, %s265
      %s267 = sphi 0, %s265
      %s268 = sphi 0, %s267
      %s282 = sphi 0, %s268
      %s286 = sphi 0, %s286
      %s288 = sphi 0, %s286
      %s289 = sphi 0, %s288
      %s303 = sphi 0, %s289
      %s307 = sphi 0, %s307
      %s309 = sphi 0, %s307
      %s310 = sphi 0, %s309
      %s324 = sphi 0, %s310
      %s328 = sphi 0, %s328
      %s330 = sphi 0, %s328
      %s331 = sphi 0, %s330
      %s345 = sphi 0, %s331
      %s349 = sphi 0, %s349
      %s351 = sphi 0, %s349
      %s352 = sphi 0, %s351
      %s366 = sphi 0, %s352
      %s370 = sphi 0, %s370
      %s372 = sphi 0, %s370
      %s373 = sphi 0, %s372
      %s387 = sphi 0, %s373
      %s391 = sphi 0, %s391
      %s393 = sphi 0, %s391
      %s394 = sphi 0, %s393
      %s408 = sphi 0, %s394
      %s412 = sphi 0, %s412
      %s414 = sphi 0, %s412
      %s415 = sphi 0, %s414
      %s429 = sphi 0, %s415
      %s433 = sphi 0, %s433
      %s435 = sphi 0, %s433
      %s436 = sphi 0, %s435
      %s450 = sphi 0, %s436
      %s454 = sphi 0, %s454
      %s456 = sphi 0, %s454
      %s457 = sphi 0, %s456
      %s471 = sphi 0, %s457
      %s475 = sphi 0, %s475
      %s477 = sphi 0, %s475
      %s478 = sphi 0, %s477
      %s492 = sphi 0, %s478
      %s498 = sphi 0, %s500
      %s501 = sphi 0, %s498
      %s502 = sphi 0, %s501
      %s518 = sphi 0, %s502
      %s524 = sphi 0, %s526
      %s527 = sphi 0, %s524
      %s528 = sphi 0, %s527
      %s544 = sphi 0, %s528
    $region4: #{tpu_custom_call.1} parent=1 // loop_header_branch
      %35 = sbr.rel (%p33) target = $region8
    $region5: #{tpu_custom_call.1} parent=1 // loop_body
      %s37 = ssub.s32 %s32, 1
      %s38 = ssub.s32 %s32, 2
      %s39 = sadd.s32 %s32, 1
      %s40 = ssub.s32 %s32, %s39
      %p41 = scmp.eq.s32.totalorder %s40, 0
      %s43 = sadd.s32 %s42, 1
      %s44 = scalar_select %p41, %s42, %s43
      %p47 = pneg %p41
      %p48 = scmp.eq.s32.totalorder %s32, 1
      %p49 = por %p47, %p48
      %p50 = scmp.ne.s32.totalorder %s42, %s45
      %p51 = scmp.eq.s32.totalorder %s32, 0
      %p52 = por %p50, %p51
      %p53 = scmp.ne.s32.totalorder %s42, %s45
      %p54 = scmp.eq.s32.totalorder %s37, 1
      %p55 = por %p53, %p54
      %p56 = scmp.ne.s32.totalorder %s45, %s46
      %p57 = scmp.eq.s32.totalorder %s37, 0
      %p58 = por %p56, %p57
      %p59 = scmp.ne.s32.totalorder %s45, %s46
      %p60 = scmp.eq.s32.totalorder %s38, 1
      %p61 = por %p59, %p60
      %p63 = scmp.ne.s32.totalorder %s46, %s62
      %p64 = scmp.eq.s32.totalorder %s38, 0
      %p65 = por %p63, %p64
      %s66 = ssub.s32 %s32, %s39
      %p67 = scmp.eq.s32.totalorder %s66, 0
      %s69 = sadd.s32 %s68, 1
      %s70 = scalar_select %p67, %s68, %s69
      %p73 = pneg %p67
      %p74 = scmp.eq.s32.totalorder %s32, 1
      %p75 = por %p73, %p74
      %p76 = scmp.ne.s32.totalorder %s68, %s71
      %p77 = scmp.eq.s32.totalorder %s32, 0
      %p78 = por %p76, %p77
      %p79 = scmp.ne.s32.totalorder %s68, %s71
      %p80 = scmp.eq.s32.totalorder %s37, 1
      %p81 = por %p79, %p80
      %p82 = scmp.ne.s32.totalorder %s71, %s72
      %p83 = scmp.eq.s32.totalorder %s37, 0
      %p84 = por %p82, %p83
      %p85 = scmp.ne.s32.totalorder %s71, %s72
      %p86 = scmp.eq.s32.totalorder %s38, 1
      %p87 = por %p85, %p86
      %p89 = scmp.ne.s32.totalorder %s72, %s88
      %p90 = scmp.eq.s32.totalorder %s38, 0
      %p91 = por %p89, %p90
      %s92 = ssub.s32 %s32, %s39
      %p93 = scmp.eq.s32.totalorder %s92, 0
      %s95 = sadd.s32 %s94, 1
      %s96 = scalar_select %p93, %s94, %s95
      %p99 = pneg %p93
      %p100 = scmp.eq.s32.totalorder %s32, 1
      %p101 = por %p99, %p100
      %p102 = scmp.ne.s32.totalorder %s94, %s97
      %p103 = scmp.eq.s32.totalorder %s32, 0
      %p104 = por %p102, %p103
      %p105 = scmp.ne.s32.totalorder %s94, %s97
      %p106 = scmp.eq.s32.totalorder %s37, 1
      %p107 = por %p105, %p106
      %p108 = scmp.ne.s32.totalorder %s97, %s98
      %p109 = scmp.eq.s32.totalorder %s37, 0
      %p110 = por %p108, %p109
      %p111 = scmp.ne.s32.totalorder %s97, %s98
      %p112 = scmp.eq.s32.totalorder %s38, 1
      %p113 = por %p111, %p112
      %p115 = scmp.ne.s32.totalorder %s98, %s114
      %p116 = scmp.eq.s32.totalorder %s38, 0
      %p117 = por %p115, %p116
      %s119 = sadd.s32 %s118, 1
      %p122 = scmp.eq.s32.totalorder %s32, 1
      %p123 = scmp.ne.s32.totalorder %s118, %s120
      %p124 = scmp.eq.s32.totalorder %s32, 0
      %p125 = por %p123, %p124
      %p126 = scmp.ne.s32.totalorder %s118, %s120
      %p127 = scmp.eq.s32.totalorder %s37, 1
      %p128 = por %p126, %p127
      %p129 = scmp.ne.s32.totalorder %s120, %s121
      %p130 = scmp.eq.s32.totalorder %s37, 0
      %p131 = por %p129, %p130
      %p132 = scmp.ne.s32.totalorder %s120, %s121
      %p133 = scmp.eq.s32.totalorder %s38, 1
      %p134 = por %p132, %p133
      %p136 = scmp.ne.s32.totalorder %s121, %s135
      %p137 = scmp.eq.s32.totalorder %s38, 0
      %p138 = por %p136, %p137
      %s140 = sadd.s32 %s139, 1
      %p143 = scmp.eq.s32.totalorder %s32, 1
      %p144 = scmp.ne.s32.totalorder %s139, %s141
      %p145 = scmp.eq.s32.totalorder %s32, 0
      %p146 = por %p144, %p145
      %p147 = scmp.ne.s32.totalorder %s139, %s141
      %p148 = scmp.eq.s32.totalorder %s37, 1
      %p149 = por %p147, %p148
      %p150 = scmp.ne.s32.totalorder %s141, %s142
      %p151 = scmp.eq.s32.totalorder %s37, 0
      %p152 = por %p150, %p151
      %p153 = scmp.ne.s32.totalorder %s141, %s142
      %p154 = scmp.eq.s32.totalorder %s38, 1
      %p155 = por %p153, %p154
      %p157 = scmp.ne.s32.totalorder %s142, %s156
      %p158 = scmp.eq.s32.totalorder %s38, 0
      %p159 = por %p157, %p158
      %s161 = sadd.s32 %s160, 1
      %p164 = scmp.eq.s32.totalorder %s32, 1
      %p165 = scmp.ne.s32.totalorder %s160, %s162
      %p166 = scmp.eq.s32.totalorder %s32, 0
      %p167 = por %p165, %p166
      %p168 = scmp.ne.s32.totalorder %s160, %s162
      %p169 = scmp.eq.s32.totalorder %s37, 1
      %p170 = por %p168, %p169
      %p171 = scmp.ne.s32.totalorder %s162, %s163
      %p172 = scmp.eq.s32.totalorder %s37, 0
      %p173 = por %p171, %p172
      %p174 = scmp.ne.s32.totalorder %s162, %s163
      %p175 = scmp.eq.s32.totalorder %s38, 1
      %p176 = por %p174, %p175
      %p178 = scmp.ne.s32.totalorder %s163, %s177
      %p179 = scmp.eq.s32.totalorder %s38, 0
      %p180 = por %p178, %p179
      %s182 = sadd.s32 %s181, 1
      %p185 = scmp.eq.s32.totalorder %s32, 1
      %p186 = scmp.ne.s32.totalorder %s181, %s183
      %p187 = scmp.eq.s32.totalorder %s32, 0
      %p188 = por %p186, %p187
      %p189 = scmp.ne.s32.totalorder %s181, %s183
      %p190 = scmp.eq.s32.totalorder %s37, 1
      %p191 = por %p189, %p190
      %p192 = scmp.ne.s32.totalorder %s183, %s184
      %p193 = scmp.eq.s32.totalorder %s37, 0
      %p194 = por %p192, %p193
      %p195 = scmp.ne.s32.totalorder %s183, %s184
      %p196 = scmp.eq.s32.totalorder %s38, 1
      %p197 = por %p195, %p196
      %p199 = scmp.ne.s32.totalorder %s184, %s198
      %p200 = scmp.eq.s32.totalorder %s38, 0
      %p201 = por %p199, %p200
      %s203 = sadd.s32 %s202, 1
      %p206 = scmp.eq.s32.totalorder %s32, 1
      %p207 = scmp.ne.s32.totalorder %s202, %s204
      %p208 = scmp.eq.s32.totalorder %s32, 0
      %p209 = por %p207, %p208
      %p210 = scmp.ne.s32.totalorder %s202, %s204
      %p211 = scmp.eq.s32.totalorder %s37, 1
      %p212 = por %p210, %p211
      %p213 = scmp.ne.s32.totalorder %s204, %s205
      %p214 = scmp.eq.s32.totalorder %s37, 0
      %p215 = por %p213, %p214
      %p216 = scmp.ne.s32.totalorder %s204, %s205
      %p217 = scmp.eq.s32.totalorder %s38, 1
      %p218 = por %p216, %p217
      %p220 = scmp.ne.s32.totalorder %s205, %s219
      %p221 = scmp.eq.s32.totalorder %s38, 0
      %p222 = por %p220, %p221
      %s224 = sadd.s32 %s223, 1
      %p227 = scmp.eq.s32.totalorder %s32, 1
      %p228 = scmp.ne.s32.totalorder %s223, %s225
      %p229 = scmp.eq.s32.totalorder %s32, 0
      %p230 = por %p228, %p229
      %p231 = scmp.ne.s32.totalorder %s223, %s225
      %p232 = scmp.eq.s32.totalorder %s37, 1
      %p233 = por %p231, %p232
      %p234 = scmp.ne.s32.totalorder %s225, %s226
      %p235 = scmp.eq.s32.totalorder %s37, 0
      %p236 = por %p234, %p235
      %p237 = scmp.ne.s32.totalorder %s225, %s226
      %p238 = scmp.eq.s32.totalorder %s38, 1
      %p239 = por %p237, %p238
      %p241 = scmp.ne.s32.totalorder %s226, %s240
      %p242 = scmp.eq.s32.totalorder %s38, 0
      %p243 = por %p241, %p242
      %s245 = sadd.s32 %s244, 1
      %p248 = scmp.eq.s32.totalorder %s32, 1
      %p249 = scmp.ne.s32.totalorder %s244, %s246
      %p250 = scmp.eq.s32.totalorder %s32, 0
      %p251 = por %p249, %p250
      %p252 = scmp.ne.s32.totalorder %s244, %s246
      %p253 = scmp.eq.s32.totalorder %s37, 1
      %p254 = por %p252, %p253
      %p255 = scmp.ne.s32.totalorder %s246, %s247
      %p256 = scmp.eq.s32.totalorder %s37, 0
      %p257 = por %p255, %p256
      %p258 = scmp.ne.s32.totalorder %s246, %s247
      %p259 = scmp.eq.s32.totalorder %s38, 1
      %p260 = por %p258, %p259
      %p262 = scmp.ne.s32.totalorder %s247, %s261
      %p263 = scmp.eq.s32.totalorder %s38, 0
      %p264 = por %p262, %p263
      %s266 = sadd.s32 %s265, 1
      %p269 = scmp.eq.s32.totalorder %s32, 1
      %p270 = scmp.ne.s32.totalorder %s265, %s267
      %p271 = scmp.eq.s32.totalorder %s32, 0
      %p272 = por %p270, %p271
      %p273 = scmp.ne.s32.totalorder %s265, %s267
      %p274 = scmp.eq.s32.totalorder %s37, 1
      %p275 = por %p273, %p274
      %p276 = scmp.ne.s32.totalorder %s267, %s268
      %p277 = scmp.eq.s32.totalorder %s37, 0
      %p278 = por %p276, %p277
      %p279 = scmp.ne.s32.totalorder %s267, %s268
      %p280 = scmp.eq.s32.totalorder %s38, 1
      %p281 = por %p279, %p280
      %p283 = scmp.ne.s32.totalorder %s268, %s282
      %p284 = scmp.eq.s32.totalorder %s38, 0
      %p285 = por %p283, %p284
      %s287 = sadd.s32 %s286, 1
      %p290 = scmp.eq.s32.totalorder %s32, 1
      %p291 = scmp.ne.s32.totalorder %s286, %s288
      %p292 = scmp.eq.s32.totalorder %s32, 0
      %p293 = por %p291, %p292
      %p294 = scmp.ne.s32.totalorder %s286, %s288
      %p295 = scmp.eq.s32.totalorder %s37, 1
      %p296 = por %p294, %p295
      %p297 = scmp.ne.s32.totalorder %s288, %s289
      %p298 = scmp.eq.s32.totalorder %s37, 0
      %p299 = por %p297, %p298
      %p300 = scmp.ne.s32.totalorder %s288, %s289
      %p301 = scmp.eq.s32.totalorder %s38, 1
      %p302 = por %p300, %p301
      %p304 = scmp.ne.s32.totalorder %s289, %s303
      %p305 = scmp.eq.s32.totalorder %s38, 0
      %p306 = por %p304, %p305
      %s308 = sadd.s32 %s307, 1
      %p311 = scmp.eq.s32.totalorder %s32, 1
      %p312 = scmp.ne.s32.totalorder %s307, %s309
      %p313 = scmp.eq.s32.totalorder %s32, 0
      %p314 = por %p312, %p313
      %p315 = scmp.ne.s32.totalorder %s307, %s309
      %p316 = scmp.eq.s32.totalorder %s37, 1
      %p317 = por %p315, %p316
      %p318 = scmp.ne.s32.totalorder %s309, %s310
      %p319 = scmp.eq.s32.totalorder %s37, 0
      %p320 = por %p318, %p319
      %p321 = scmp.ne.s32.totalorder %s309, %s310
      %p322 = scmp.eq.s32.totalorder %s38, 1
      %p323 = por %p321, %p322
      %p325 = scmp.ne.s32.totalorder %s310, %s324
      %p326 = scmp.eq.s32.totalorder %s38, 0
      %p327 = por %p325, %p326
      %s329 = sadd.s32 %s328, 1
      %p332 = scmp.eq.s32.totalorder %s32, 1
      %p333 = scmp.ne.s32.totalorder %s328, %s330
      %p334 = scmp.eq.s32.totalorder %s32, 0
      %p335 = por %p333, %p334
      %p336 = scmp.ne.s32.totalorder %s328, %s330
      %p337 = scmp.eq.s32.totalorder %s37, 1
      %p338 = por %p336, %p337
      %p339 = scmp.ne.s32.totalorder %s330, %s331
      %p340 = scmp.eq.s32.totalorder %s37, 0
      %p341 = por %p339, %p340
      %p342 = scmp.ne.s32.totalorder %s330, %s331
      %p343 = scmp.eq.s32.totalorder %s38, 1
      %p344 = por %p342, %p343
      %p346 = scmp.ne.s32.totalorder %s331, %s345
      %p347 = scmp.eq.s32.totalorder %s38, 0
      %p348 = por %p346, %p347
      %s350 = sadd.s32 %s349, 1
      %p353 = scmp.eq.s32.totalorder %s32, 1
      %p354 = scmp.ne.s32.totalorder %s349, %s351
      %p355 = scmp.eq.s32.totalorder %s32, 0
      %p356 = por %p354, %p355
      %p357 = scmp.ne.s32.totalorder %s349, %s351
      %p358 = scmp.eq.s32.totalorder %s37, 1
      %p359 = por %p357, %p358
      %p360 = scmp.ne.s32.totalorder %s351, %s352
      %p361 = scmp.eq.s32.totalorder %s37, 0
      %p362 = por %p360, %p361
      %p363 = scmp.ne.s32.totalorder %s351, %s352
      %p364 = scmp.eq.s32.totalorder %s38, 1
      %p365 = por %p363, %p364
      %p367 = scmp.ne.s32.totalorder %s352, %s366
      %p368 = scmp.eq.s32.totalorder %s38, 0
      %p369 = por %p367, %p368
      %s371 = sadd.s32 %s370, 1
      %p374 = scmp.eq.s32.totalorder %s32, 1
      %p375 = scmp.ne.s32.totalorder %s370, %s372
      %p376 = scmp.eq.s32.totalorder %s32, 0
      %p377 = por %p375, %p376
      %p378 = scmp.ne.s32.totalorder %s370, %s372
      %p379 = scmp.eq.s32.totalorder %s37, 1
      %p380 = por %p378, %p379
      %p381 = scmp.ne.s32.totalorder %s372, %s373
      %p382 = scmp.eq.s32.totalorder %s37, 0
      %p383 = por %p381, %p382
      %p384 = scmp.ne.s32.totalorder %s372, %s373
      %p385 = scmp.eq.s32.totalorder %s38, 1
      %p386 = por %p384, %p385
      %p388 = scmp.ne.s32.totalorder %s373, %s387
      %p389 = scmp.eq.s32.totalorder %s38, 0
      %p390 = por %p388, %p389
      %s392 = sadd.s32 %s391, 1
      %p395 = scmp.eq.s32.totalorder %s32, 1
      %p396 = scmp.ne.s32.totalorder %s391, %s393
      %p397 = scmp.eq.s32.totalorder %s32, 0
      %p398 = por %p396, %p397
      %p399 = scmp.ne.s32.totalorder %s391, %s393
      %p400 = scmp.eq.s32.totalorder %s37, 1
      %p401 = por %p399, %p400
      %p402 = scmp.ne.s32.totalorder %s393, %s394
      %p403 = scmp.eq.s32.totalorder %s37, 0
      %p404 = por %p402, %p403
      %p405 = scmp.ne.s32.totalorder %s393, %s394
      %p406 = scmp.eq.s32.totalorder %s38, 1
      %p407 = por %p405, %p406
      %p409 = scmp.ne.s32.totalorder %s394, %s408
      %p410 = scmp.eq.s32.totalorder %s38, 0
      %p411 = por %p409, %p410
      %s413 = sadd.s32 %s412, 1
      %p416 = scmp.eq.s32.totalorder %s32, 1
      %p417 = scmp.ne.s32.totalorder %s412, %s414
      %p418 = scmp.eq.s32.totalorder %s32, 0
      %p419 = por %p417, %p418
      %p420 = scmp.ne.s32.totalorder %s412, %s414
      %p421 = scmp.eq.s32.totalorder %s37, 1
      %p422 = por %p420, %p421
      %p423 = scmp.ne.s32.totalorder %s414, %s415
      %p424 = scmp.eq.s32.totalorder %s37, 0
      %p425 = por %p423, %p424
      %p426 = scmp.ne.s32.totalorder %s414, %s415
      %p427 = scmp.eq.s32.totalorder %s38, 1
      %p428 = por %p426, %p427
      %p430 = scmp.ne.s32.totalorder %s415, %s429
      %p431 = scmp.eq.s32.totalorder %s38, 0
      %p432 = por %p430, %p431
      %s434 = sadd.s32 %s433, 1
      %p437 = scmp.eq.s32.totalorder %s32, 1
      %p438 = scmp.ne.s32.totalorder %s433, %s435
      %p439 = scmp.eq.s32.totalorder %s32, 0
      %p440 = por %p438, %p439
      %p441 = scmp.ne.s32.totalorder %s433, %s435
      %p442 = scmp.eq.s32.totalorder %s37, 1
      %p443 = por %p441, %p442
      %p444 = scmp.ne.s32.totalorder %s435, %s436
      %p445 = scmp.eq.s32.totalorder %s37, 0
      %p446 = por %p444, %p445
      %p447 = scmp.ne.s32.totalorder %s435, %s436
      %p448 = scmp.eq.s32.totalorder %s38, 1
      %p449 = por %p447, %p448
      %p451 = scmp.ne.s32.totalorder %s436, %s450
      %p452 = scmp.eq.s32.totalorder %s38, 0
      %p453 = por %p451, %p452
      %s455 = sadd.s32 %s454, 1
      %p458 = scmp.eq.s32.totalorder %s32, 1
      %p459 = scmp.ne.s32.totalorder %s454, %s456
      %p460 = scmp.eq.s32.totalorder %s32, 0
      %p461 = por %p459, %p460
      %p462 = scmp.ne.s32.totalorder %s454, %s456
      %p463 = scmp.eq.s32.totalorder %s37, 1
      %p464 = por %p462, %p463
      %p465 = scmp.ne.s32.totalorder %s456, %s457
      %p466 = scmp.eq.s32.totalorder %s37, 0
      %p467 = por %p465, %p466
      %p468 = scmp.ne.s32.totalorder %s456, %s457
      %p469 = scmp.eq.s32.totalorder %s38, 1
      %p470 = por %p468, %p469
      %p472 = scmp.ne.s32.totalorder %s457, %s471
      %p473 = scmp.eq.s32.totalorder %s38, 0
      %p474 = por %p472, %p473
      %s476 = sadd.s32 %s475, 1
      %p479 = scmp.eq.s32.totalorder %s32, 1
      %p480 = scmp.ne.s32.totalorder %s475, %s477
      %p481 = scmp.eq.s32.totalorder %s32, 0
      %p482 = por %p480, %p481
      %p483 = scmp.ne.s32.totalorder %s475, %s477
      %p484 = scmp.eq.s32.totalorder %s37, 1
      %p485 = por %p483, %p484
      %p486 = scmp.ne.s32.totalorder %s477, %s478
      %p487 = scmp.eq.s32.totalorder %s37, 0
      %p488 = por %p486, %p487
      %p489 = scmp.ne.s32.totalorder %s477, %s478
      %p490 = scmp.eq.s32.totalorder %s38, 1
      %p491 = por %p489, %p490
      %p493 = scmp.ne.s32.totalorder %s478, %s492
      %p494 = scmp.eq.s32.totalorder %s38, 0
      %p495 = por %p493, %p494
      %s496 = ssub.s32 %s32, %s39
      %p497 = scmp.eq.s32.totalorder %s496, 0
      %s499 = sadd.s32 %s498, 1
      %s500 = scalar_select %p497, %s498, %s499
      %p503 = pneg %p497
      %p504 = scmp.eq.s32.totalorder %s32, 1
      %p505 = por %p503, %p504
      %p506 = scmp.ne.s32.totalorder %s498, %s501
      %p507 = scmp.eq.s32.totalorder %s32, 0
      %p508 = por %p506, %p507
      %p509 = scmp.ne.s32.totalorder %s498, %s501
      %p510 = scmp.eq.s32.totalorder %s37, 1
      %p511 = por %p509, %p510
      %p512 = scmp.ne.s32.totalorder %s501, %s502
      %p513 = scmp.eq.s32.totalorder %s37, 0
      %p514 = por %p512, %p513
      %p515 = scmp.ne.s32.totalorder %s501, %s502
      %p516 = scmp.eq.s32.totalorder %s38, 1
      %p517 = por %p515, %p516
      %p519 = scmp.ne.s32.totalorder %s502, %s518
      %p520 = scmp.eq.s32.totalorder %s38, 0
      %p521 = por %p519, %p520
      %s522 = ssub.s32 %s32, %s39
      %p523 = scmp.eq.s32.totalorder %s522, 0
      %s525 = sadd.s32 %s524, 1
      %s526 = scalar_select %p523, %s524, %s525
      %p529 = pneg %p523
      %p530 = scmp.eq.s32.totalorder %s32, 1
      %p531 = por %p529, %p530
      %p532 = scmp.ne.s32.totalorder %s524, %s527
      %p533 = scmp.eq.s32.totalorder %s32, 0
      %p534 = por %p532, %p533
      %p535 = scmp.ne.s32.totalorder %s524, %s527
      %p536 = scmp.eq.s32.totalorder %s37, 1
      %p537 = por %p535, %p536
      %p538 = scmp.ne.s32.totalorder %s527, %s528
      %p539 = scmp.eq.s32.totalorder %s37, 0
      %p540 = por %p538, %p539
      %p541 = scmp.ne.s32.totalorder %s527, %s528
      %p542 = scmp.eq.s32.totalorder %s38, 1
      %p543 = por %p541, %p542
      %p545 = scmp.ne.s32.totalorder %s528, %s544
      %p546 = scmp.eq.s32.totalorder %s38, 0
      %p547 = por %p545, %p546
      %p548 = scmp.le.s32.totalorder 1, %s32
      %p549 = scmp.lt.s32.totalorder %s32, 3
      %p550 = pnand %p548, %p549
      %p551 = pneg %p550
      // Predicated region
      $region9: #{tpu_custom_call.1} parent=5 // pred_check
        _
      $region10: #{tpu_custom_call.1} parent=5 // pred_check_branch
        %553 = sbr.rel (%p550) target = $region12
      $region11: #{tpu_custom_call.1} parent=5 // pred_region
        %s554 = ssub.s32 %s32, 1
        // Predicated region
        $region13: #{tpu_custom_call.1} parent=11 // pred_check
          %p555 = pneg %p131
        $region14: #{tpu_custom_call.1} parent=11 // pred_check_branch
          %557 = sbr.rel (%p555) target = $region16
        $region15: #{tpu_custom_call.1} parent=11 // pred_region
          _
        $region16: #{tpu_custom_call.1} parent=11 // pred_fallthru
          _
        // Predicated region
        $region17: #{tpu_custom_call.1} parent=11 // pred_check
          %p558 = pneg %p152
        $region18: #{tpu_custom_call.1} parent=11 // pred_check_branch
          %560 = sbr.rel (%p558) target = $region20
        $region19: #{tpu_custom_call.1} parent=11 // pred_region
          _
        $region20: #{tpu_custom_call.1} parent=11 // pred_fallthru
          _
        // Predicated region
        $region21: #{tpu_custom_call.1} parent=11 // pred_check
          %p561 = pneg %p173
        $region22: #{tpu_custom_call.1} parent=11 // pred_check_branch
          %563 = sbr.rel (%p561) target = $region24
        $region23: #{tpu_custom_call.1} parent=11 // pred_region
          _
        $region24: #{tpu_custom_call.1} parent=11 // pred_fallthru
          _
        // Predicated region
        $region25: #{tpu_custom_call.1} parent=11 // pred_check
          %p564 = pneg %p194
        $region26: #{tpu_custom_call.1} parent=11 // pred_check_branch
          %566 = sbr.rel (%p564) target = $region28
        $region27: #{tpu_custom_call.1} parent=11 // pred_region
          _
        $region28: #{tpu_custom_call.1} parent=11 // pred_fallthru
          _
        // Predicated region
        $region29: #{tpu_custom_call.1} parent=11 // pred_check
          %p567 = pneg %p215
        $region30: #{tpu_custom_call.1} parent=11 // pred_check_branch
          %569 = sbr.rel (%p567) target = $region32
        $region31: #{tpu_custom_call.1} parent=11 // pred_region
          _
        $region32: #{tpu_custom_call.1} parent=11 // pred_fallthru
          _
        // Predicated region
        $region33: #{tpu_custom_call.1} parent=11 // pred_check
          %p570 = pneg %p236
        $region34: #{tpu_custom_call.1} parent=11 // pred_check_branch
          %572 = sbr.rel (%p570) target = $region36
        $region35: #{tpu_custom_call.1} parent=11 // pred_region
          _
        $region36: #{tpu_custom_call.1} parent=11 // pred_fallthru
          _
        // Predicated region
        $region37: #{tpu_custom_call.1} parent=11 // pred_check
          %p573 = pneg %p257
        $region38: #{tpu_custom_call.1} parent=11 // pred_check_branch
          %575 = sbr.rel (%p573) target = $region40
        $region39: #{tpu_custom_call.1} parent=11 // pred_region
          _
        $region40: #{tpu_custom_call.1} parent=11 // pred_fallthru
          _
        // Predicated region
        $region41: #{tpu_custom_call.1} parent=11 // pred_check
          %p576 = pneg %p278
        $region42: #{tpu_custom_call.1} parent=11 // pred_check_branch
          %578 = sbr.rel (%p576) target = $region44
        $region43: #{tpu_custom_call.1} parent=11 // pred_region
          _
        $region44: #{tpu_custom_call.1} parent=11 // pred_fallthru
          _
        // Predicated region
        $region45: #{tpu_custom_call.1} parent=11 // pred_check
          %p579 = pneg %p299
        $region46: #{tpu_custom_call.1} parent=11 // pred_check_branch
          %581 = sbr.rel (%p579) target = $region48
        $region47: #{tpu_custom_call.1} parent=11 // pred_region
          _
        $region48: #{tpu_custom_call.1} parent=11 // pred_fallthru
          _
        // Predicated region
        $region49: #{tpu_custom_call.1} parent=11 // pred_check
          %p582 = pneg %p320
        $region50: #{tpu_custom_call.1} parent=11 // pred_check_branch
          %584 = sbr.rel (%p582) target = $region52
        $region51: #{tpu_custom_call.1} parent=11 // pred_region
          _
        $region52: #{tpu_custom_call.1} parent=11 // pred_fallthru
          _
        // Predicated region
        $region53: #{tpu_custom_call.1} parent=11 // pred_check
          %p585 = pneg %p341
        $region54: #{tpu_custom_call.1} parent=11 // pred_check_branch
          %587 = sbr.rel (%p585) target = $region56
        $region55: #{tpu_custom_call.1} parent=11 // pred_region
          _
        $region56: #{tpu_custom_call.1} parent=11 // pred_fallthru
          _
        // Predicated region
        $region57: #{tpu_custom_call.1} parent=11 // pred_check
          %p588 = pneg %p362
        $region58: #{tpu_custom_call.1} parent=11 // pred_check_branch
          %590 = sbr.rel (%p588) target = $region60
        $region59: #{tpu_custom_call.1} parent=11 // pred_region
          _
        $region60: #{tpu_custom_call.1} parent=11 // pred_fallthru
          _
        // Predicated region
        $region61: #{tpu_custom_call.1} parent=11 // pred_check
          %p591 = pneg %p383
        $region62: #{tpu_custom_call.1} parent=11 // pred_check_branch
          %593 = sbr.rel (%p591) target = $region64
        $region63: #{tpu_custom_call.1} parent=11 // pred_region
          _
        $region64: #{tpu_custom_call.1} parent=11 // pred_fallthru
          _
        // Predicated region
        $region65: #{tpu_custom_call.1} parent=11 // pred_check
          %p594 = pneg %p404
        $region66: #{tpu_custom_call.1} parent=11 // pred_check_branch
          %596 = sbr.rel (%p594) target = $region68
        $region67: #{tpu_custom_call.1} parent=11 // pred_region
          _
        $region68: #{tpu_custom_call.1} parent=11 // pred_fallthru
          _
        // Predicated region
        $region69: #{tpu_custom_call.1} parent=11 // pred_check
          %p597 = pneg %p425
        $region70: #{tpu_custom_call.1} parent=11 // pred_check_branch
          %599 = sbr.rel (%p597) target = $region72
        $region71: #{tpu_custom_call.1} parent=11 // pred_region
          _
        $region72: #{tpu_custom_call.1} parent=11 // pred_fallthru
          _
        // Predicated region
        $region73: #{tpu_custom_call.1} parent=11 // pred_check
          %p600 = pneg %p446
        $region74: #{tpu_custom_call.1} parent=11 // pred_check_branch
          %602 = sbr.rel (%p600) target = $region76
        $region75: #{tpu_custom_call.1} parent=11 // pred_region
          _
        $region76: #{tpu_custom_call.1} parent=11 // pred_fallthru
          _
        // Predicated region
        $region77: #{tpu_custom_call.1} parent=11 // pred_check
          %p603 = pneg %p467
        $region78: #{tpu_custom_call.1} parent=11 // pred_check_branch
          %605 = sbr.rel (%p603) target = $region80
        $region79: #{tpu_custom_call.1} parent=11 // pred_region
          _
        $region80: #{tpu_custom_call.1} parent=11 // pred_fallthru
          _
        // Predicated region
        $region81: #{tpu_custom_call.1} parent=11 // pred_check
          %p606 = pneg %p488
        $region82: #{tpu_custom_call.1} parent=11 // pred_check_branch
          %608 = sbr.rel (%p606) target = $region84
        $region83: #{tpu_custom_call.1} parent=11 // pred_region
          _
        $region84: #{tpu_custom_call.1} parent=11 // pred_fallthru
          _
      $region12: #{tpu_custom_call.1} parent=5 // pred_fallthru
        _
      %p609 = scmp.lt.s32.totalorder %s32, 2
      // Predicated region
      $region85: #{tpu_custom_call.1} parent=5 // pred_check
        %p610 = pneg %p609
      $region86: #{tpu_custom_call.1} parent=5 // pred_check_branch
        %612 = sbr.rel (%p610) target = $region88
      $region87: #{tpu_custom_call.1} parent=5 // pred_region
        // Predicated region
        $region89: #{tpu_custom_call.1} parent=87 // pred_check
          %p613 = pneg %p52
        $region90: #{tpu_custom_call.1} parent=87 // pred_check_branch
          %615 = sbr.rel (%p613) target = $region92
        $region91: #{tpu_custom_call.1} parent=87 // pred_region
          %p616 = scmp.lt.s32.totalorder %s32, 1
          %s617 = scalar_select %p616, %s32, 1
          %s618 = smul.addr %s617, 2
          %s619 = smul.addr %s618, 8
          %s620 = scalar_lea.vmem %s0, %s619
        $region92: #{tpu_custom_call.1} parent=87 // pred_fallthru
          _
        // Predicated region
        $region93: #{tpu_custom_call.1} parent=87 // pred_check
          %p621 = pneg %p78
        $region94: #{tpu_custom_call.1} parent=87 // pred_check_branch
          %623 = sbr.rel (%p621) target = $region96
        $region95: #{tpu_custom_call.1} parent=87 // pred_region
          %p624 = scmp.lt.s32.totalorder %s32, 1
          %s625 = scalar_select %p624, %s32, 1
          %s626 = smul.addr %s625, 2
          %s627 = smul.addr %s626, 8
          %s628 = scalar_lea.vmem %s1, %s627
        $region96: #{tpu_custom_call.1} parent=87 // pred_fallthru
          _
        // Predicated region
        $region97: #{tpu_custom_call.1} parent=87 // pred_check
          %p629 = pneg %p104
        $region98: #{tpu_custom_call.1} parent=87 // pred_check_branch
          %631 = sbr.rel (%p629) target = $region100
        $region99: #{tpu_custom_call.1} parent=87 // pred_region
          %p632 = scmp.lt.s32.totalorder %s32, 1
          %s633 = scalar_select %p632, %s32, 1
          %s634 = scalar_lea.vmem %s2, %s633
        $region100: #{tpu_custom_call.1} parent=87 // pred_fallthru
          _
      $region88: #{tpu_custom_call.1} parent=5 // pred_fallthru
        _
      %p635 = scmp.le.s32.totalorder 1, %s32
      %p636 = scmp.lt.s32.totalorder %s32, 3
      %p637 = pnand %p635, %p636
      %p638 = pneg %p637
      // Predicated region
      $region101: #{tpu_custom_call.1} parent=5 // pred_check
        _
      $region102: #{tpu_custom_call.1} parent=5 // pred_check_branch
        %640 = sbr.rel (%p637) target = $region104
      $region103: #{tpu_custom_call.1} parent=5 // pred_region
        %s641 = ssub.s32 %s32, 1
        %p642 = scmp.lt.s32.totalorder %s37, 1
        %s643 = scalar_select %p642, %s37, 1
        %s644 = smul.addr %s643, 2
        %s645 = smul.addr %s644, 8
        %s646 = scalar_lea.vmem %s0, %s645
        %p647 = pneg %p58
        %p648 = pneg %p55
        %p649 = scmp.lt.s32.totalorder %s37, 1
        %s650 = scalar_select %p649, %s37, 1
        %s651 = smul.addr %s650, 2
        %s652 = smul.addr %s651, 8
        %s653 = scalar_lea.vmem %s1, %s652
        %p654 = pneg %p84
        %p655 = pneg %p81
        %p656 = scmp.lt.s32.totalorder %s37, 1
        %s657 = scalar_select %p656, %s37, 1
        %s658 = scalar_lea.vmem %s2, %s657
        %p659 = pneg %p110
        %p660 = pneg %p107
        %p661 = pneg %p131
        %p662 = pneg %p128
        %p663 = pneg %p152
        %p664 = pneg %p149
        %p665 = pneg %p173
        %p666 = pneg %p170
        %p667 = pneg %p194
        %p668 = pneg %p191
        %p669 = pneg %p215
        %p670 = pneg %p212
        %p671 = pneg %p236
        %p672 = pneg %p233
        %p673 = pneg %p257
        %p674 = pneg %p254
        %p675 = pneg %p278
        %p676 = pneg %p275
        %p677 = pneg %p299
        %p678 = pneg %p296
        %p679 = pneg %p320
        %p680 = pneg %p317
        %p681 = pneg %p341
        %p682 = pneg %p338
        %p683 = pneg %p362
        %p684 = pneg %p359
        %p685 = pneg %p383
        %p686 = pneg %p380
        %p687 = pneg %p404
        %p688 = pneg %p401
        %p689 = pneg %p425
        %p690 = pneg %p422
        %p691 = pneg %p446
        %p692 = pneg %p443
        %p693 = pneg %p467
        %p694 = pneg %p464
        %p695 = pneg %p488
        %p696 = pneg %p485
        %p697 = pneg %p514
        %p698 = pneg %p511
        %p699 = scmp.lt.s32.totalorder %s37, 1
        %s700 = scalar_select %p699, %s37, 1
        %s701 = smul.addr %s700, 2
        %s702 = smul.addr %s701, 8
        %s703 = scalar_lea.vmem %s21, %s702
        %p704 = pneg %p540
        %p705 = pneg %p537
        %s706 = sand.u32 %s527, 1
        %s707 = scalar_lea.sflag [#allocation3], %s706
        %s708 = sand.u32 %s527, 1
        %s709 = scalar_lea.vmem [#allocation2], %s708
        %p710 = scmp.lt.s32.totalorder %s37, 1
        %s711 = scalar_select %p710, %s37, 1
        %s712 = smul.addr %s711, 2
        %s713 = smul.addr %s712, 8
        %s714 = scalar_lea.vmem %s0, %s713
        %p715 = scmp.lt.s32.totalorder %s37, 1
        %s716 = scalar_select %p715, %s37, 1
        %s717 = smul.addr %s716, 2
        %s718 = smul.addr %s717, 8
        %s719 = scalar_lea.vmem %s1, %s718
        %p720 = scmp.lt.s32.totalorder %s37, 1
        %s721 = scalar_select %p720, %s37, 1
        %s722 = scalar_lea.vmem %s2, %s721
        %p723 = scmp.lt.s32.totalorder %s37, 1
        %s724 = scalar_select %p723, %s37, 1
        %s725 = smul.addr %s724, 2
        %s726 = smul.addr %s725, 8
        %s727 = scalar_lea.vmem %s21, %s726
        %v729 = vlaneseq
        %v730 = vshrl.u32 %v729, 7
        %v731 = vadd.s32 %v730, 8
        %v732 = vld [vmem:[%s714] sm:$0xff]
        %v733 = vld [vmem:[%s714 + $0x8] sm:$0xff]
        %v734 = vld [vmem:[%s719] sm:$0xff]
        %v735 = vld [vmem:[%s719 + $0x8] sm:$0xff]
        %v736 = vld [vmem:[%s722] sm:$0x1]
        %vm737 = vcmp.gt.f32.partialorder %v734, 0.0
        %vm738 = vcmp.gt.f32.partialorder %v735, 0.0
        %vm739 = vcmp.gt.f32.partialorder %v736, 0.0
        %v740 = vsel %vm737, 1, 0
        %v741 = vsel %vm738, 1, 0
        %742 = vset.pattern.permute.xlu0 0
        %743 = vperm.xlu0 %742, %v740
        %v744 = vpop.permute.xlu0 %743
        %745 = vset.pattern.permute.xlu0 0
        %746 = vperm.xlu0 %745, %v741
        %v747 = vpop.permute.xlu0 %746
        %vm748 = vcmp.eq.s32.totalorder %v744, 1
        %vm749 = vcmp.eq.s32.totalorder %v747, 1
        %v750 = vsel %vm739, 1, 0
        %v751 = vlaneseq
        %v752 = vshrl.u32 %v751, 7
        %v753 = vsub.s32 0, %v752
        %v754 = vrot.slane %v750, %v753
        %vm755 = vcmp.eq.s32.totalorder %v754, 1
        %vm756 = vmand %vm748, %vm755
        %vm757 = vmand %vm749, %vm755
        %759 = vset.pattern.permute.xlu0 0
        %760 = vperm.xlu0 %759, %v734
        %v761 = vpop.permute.xlu0 %760
        %764 = vset.pattern.permute.xlu0 0
        %765 = vperm.xlu0 %764, %v735
        %v766 = vpop.permute.xlu0 %765
        %v768 = vmul.f32 %v732, %v761
        %v769 = vmul.f32 %v733, %v766
        %v770 = vld [vmem:[%s3] sm:$0x3]
        %v771 = vpack.c.bf16 %v769, %v768
        %v772 = vld [vmem:[%s4] sm:$0x1]
        %v774 = vlaneseq
        %v775 = vshrl.u32 %v774, 7
        %v776 = vsub.s32 0, %v775
        %v777 = vrot.slane %v772, %v776
        %vm779 = vcmask 31744
        %v781 = vsel %vm779, %v771, 0
        %vm783 = vcmask 1041408
        %v785 = vsel %vm783, %v770, 0
        %787 = vmatprep.subr.bf16.mxu0 0
        %788 = vmatpush1.bf16.msra.mxu0 0
        %789 = vmatprep.subr.bf16.mxu0 0
        %790 = vmatpush1.bf16.msra.mxu0 0
        %791 = vmatprep.subr.bf16.mxu0 0
        %792 = vmatpush1.bf16.msra.mxu0 0
        %793 = vmatprep.subr.bf16.mxu0 0
        %794 = vmatpush1.bf16.msra.mxu0 0
        %795 = vmatprep.subr.bf16.mxu0 0
        %796 = vmatpush1.bf16.msra.mxu0 0
        %797 = vmatprep.subr.bf16.mxu0 0
        %798 = vmatpush1.bf16.msra.mxu0 0
        %799 = vmatprep.subr.bf16.mxu0 0
        %800 = vmatpush1.bf16.msra.mxu0 0
        %801 = vmatprep.subr.bf16.mxu0 0
        %802 = vmatpush1.bf16.msra.mxu0 %v785
        %803 = vmatprep.subr.bf16.mxu0 0
        %804 = vmatpush2.bf16.msra.mxu0 0
        %805 = vmatprep.subr.bf16.mxu0 0
        %806 = vmatpush2.bf16.msra.mxu0 0
        %807 = vmatprep.subr.bf16.mxu0 0
        %808 = vmatpush2.bf16.msra.mxu0 0
        %809 = vmatprep.subr.bf16.mxu0 0
        %810 = vmatpush2.bf16.msra.mxu0 0
        %811 = vmatprep.subr.bf16.mxu0 0
        %812 = vmatpush2.bf16.msra.mxu0 0
        %813 = vmatprep.subr.bf16.mxu0 0
        %814 = vmatpush2.bf16.msra.mxu0 0
        %815 = vmatprep.subr.bf16.mxu0 0
        %816 = vmatpush2.bf16.msra.mxu0 0
        %817 = vmatprep.subr.bf16.mxu0 0
        %818 = vmatpush2.bf16.msra.mxu0 0
        %819 = vmatprep.mubr.bf16.mxu0 0
        %820 = vmatmul.mubr.bf16.gmra.mxu0 %v781
        %v821 = vpop.f32.mrf.mxu0
        %v822 = vadd.f32 %v777, %v821
        %v823 = vpop.f32.mrf.mxu0
        %v824 = vpop.f32.mrf.mxu0
        %v825 = vadd.f32 %v777, %v824
        %v826 = vpop.f32.mrf.mxu0
        %827 = vdwg.mxu0
        %v828 = vmul.f32 %v822, 0.70710677
        %v829 = vmul.f32 %v825, 0.70710677
        %v830 = vpack.c.bf16 %v829, %v828
        %v831 = vpack.c.bf16 %v825, %v822
        %833 = vrot.lane.b32.xlu0 %v831, 124
        %v834 = vpop.permute.xlu0 %833
        %vm835 = vcmask 15360
        %v837 = vsel %vm835, %v830, 0
        %v840 = vsel %vm835, %v834, 0
        %842 = vmatprep.subr.bf16.mxu0 0
        %843 = vmatpush1.bf16.xpose.msra.mxu0 0
        %844 = vmatprep.subr.bf16.mxu0 0
        %845 = vmatpush1.bf16.xpose.msra.mxu0 0
        %846 = vmatprep.subr.bf16.mxu0 0
        %847 = vmatpush1.bf16.xpose.msra.mxu0 0
        %848 = vmatprep.subr.bf16.mxu0 0
        %849 = vmatpush1.bf16.xpose.msra.mxu0 0
        %850 = vmatprep.subr.bf16.mxu0 0
        %851 = vmatpush1.bf16.xpose.msra.mxu0 0
        %852 = vmatprep.subr.bf16.mxu0 0
        %853 = vmatpush1.bf16.xpose.msra.mxu0 0
        %854 = vmatprep.subr.bf16.mxu0 0
        %855 = vmatpush1.bf16.xpose.msra.mxu0 0
        %856 = vmatprep.subr.bf16.mxu0 0
        %857 = vmatpush1.bf16.xpose.msra.mxu0 %v840
        %858 = vmatprep.subr.bf16.mxu0 0
        %859 = vmatpush2.bf16.xpose.msra.mxu0 0
        %860 = vmatprep.subr.bf16.mxu0 0
        %861 = vmatpush2.bf16.xpose.msra.mxu0 0
        %862 = vmatprep.subr.bf16.mxu0 0
        %863 = vmatpush2.bf16.xpose.msra.mxu0 0
        %864 = vmatprep.subr.bf16.mxu0 0
        %865 = vmatpush2.bf16.xpose.msra.mxu0 0
        %866 = vmatprep.subr.bf16.mxu0 0
        %867 = vmatpush2.bf16.xpose.msra.mxu0 0
        %868 = vmatprep.subr.bf16.mxu0 0
        %869 = vmatpush2.bf16.xpose.msra.mxu0 0
        %870 = vmatprep.subr.bf16.mxu0 0
        %871 = vmatpush2.bf16.xpose.msra.mxu0 0
        %872 = vmatprep.subr.bf16.mxu0 0
        %873 = vmatpush2.bf16.xpose.msra.mxu0 0
        %874 = vmatprep.mubr.bf16.mxu0 0
        %875 = vmatmul.mubr.bf16.gmra.mxu0 %v837
        %v876 = vpop.f32.mrf.mxu0
        %v877 = vadd.f32 0.0, %v876
        %v878 = vpop.f32.mrf.mxu0
        %v879 = vpop.f32.mrf.mxu0
        %v880 = vadd.f32 0.0, %v879
        %v881 = vpop.f32.mrf.mxu0
        %882 = vdwg.mxu0
        %v883 = vsel %vm756, %v877, -10000.0
        %v884 = vsel %vm757, %v880, -10000.0
        %vm885 = vcmask 130048
        %v886 = vsel %vm885, %v883, -inf
        %887 = vmax.xlane.f32.xlu0 %v886
        %v888 = vpop.xlane.xlu0 %887
        %v889 = vsel %vm885, %v884, -inf
        %890 = vmax.xlane.f32.xlu0 %v889
        %v891 = vpop.xlane.xlu0 %890
        %v892 = vsub.f32 %v883, %v888
        %v893 = vsub.f32 %v884, %v891
        %v894 = vmul.f32 %v892, 1.442695
        %v895 = vpow.pop %v894
        %v896 = vmul.f32 %v893, 1.442695
        %v897 = vpow.pop %v896
        %v898 = vsel %vm885, %v895, 0.0
        %899 = vadd.xlane.f32.xlu0 %v898
        %v900 = vpop.xlane.xlu0 %899
        %v901 = vsel %vm885, %v897, 0.0
        %902 = vadd.xlane.f32.xlu0 %v901
        %v903 = vpop.xlane.xlu0 %902
        %v904 = vrcp.pop %v900
        %v905 = vrcp.pop %v903
        %v906 = vmul.f32 %v895, %v904
        %v907 = vmul.f32 %v897, %v905
        %v908 = vpack.c.bf16 %v907, %v906
        %909 = vrot.lane.b32.xlu0 %v831, 120
        %v910 = vpop.permute.xlu0 %909
        %v913 = vsel %vm885, %v908, 0
        %915 = vmatprep.subr.bf16.mxu0 0
        %916 = vmatpush1.bf16.msra.mxu0 0
        %917 = vmatprep.subr.bf16.mxu0 0
        %918 = vmatpush1.bf16.msra.mxu0 0
        %919 = vmatprep.subr.bf16.mxu0 0
        %920 = vmatpush1.bf16.msra.mxu0 0
        %921 = vmatprep.subr.bf16.mxu0 0
        %922 = vmatpush1.bf16.msra.mxu0 0
        %923 = vmatprep.subr.bf16.mxu0 0
        %924 = vmatpush1.bf16.msra.mxu0 0
        %925 = vmatprep.subr.bf16.mxu0 0
        %926 = vmatpush1.bf16.msra.mxu0 0
        %927 = vmatprep.subr.bf16.mxu0 0
        %928 = vmatpush1.bf16.msra.mxu0 0
        %929 = vmatprep.subr.bf16.mxu0 0
        %930 = vmatpush1.bf16.msra.mxu0 %v910
        %931 = vmatprep.subr.bf16.mxu0 0
        %932 = vmatpush2.bf16.msra.mxu0 0
        %933 = vmatprep.subr.bf16.mxu0 0
        %934 = vmatpush2.bf16.msra.mxu0 0
        %935 = vmatprep.subr.bf16.mxu0 0
        %936 = vmatpush2.bf16.msra.mxu0 0
        %937 = vmatprep.subr.bf16.mxu0 0
        %938 = vmatpush2.bf16.msra.mxu0 0
        %939 = vmatprep.subr.bf16.mxu0 0
        %940 = vmatpush2.bf16.msra.mxu0 0
        %941 = vmatprep.subr.bf16.mxu0 0
        %942 = vmatpush2.bf16.msra.mxu0 0
        %943 = vmatprep.subr.bf16.mxu0 0
        %944 = vmatpush2.bf16.msra.mxu0 0
        %945 = vmatprep.subr.bf16.mxu0 0
        %946 = vmatpush2.bf16.msra.mxu0 0
        %947 = vmatprep.mubr.bf16.mxu0 0
        %948 = vmatmul.mubr.bf16.gmra.mxu0 %v913
        %v949 = vpop.f32.mrf.mxu0
        %v950 = vadd.f32 0.0, %v949
        %v951 = vpop.f32.mrf.mxu0
        %v952 = vpop.f32.mrf.mxu0
        %v953 = vadd.f32 0.0, %v952
        %v954 = vpop.f32.mrf.mxu0
        %955 = vdwg.mxu0
        %957 = vrot.lane.b32.xlu0 %v830, 126
        %v958 = vpop.permute.xlu0 %957
        %959 = vrot.lane.b32.xlu0 %v831, 122
        %v960 = vpop.permute.xlu0 %959
        %v962 = vsel %vm835, %v958, 0
        %v965 = vsel %vm835, %v960, 0
        %967 = vmatprep.subr.bf16.mxu0 0
        %968 = vmatpush1.bf16.xpose.msra.mxu0 0
        %969 = vmatprep.subr.bf16.mxu0 0
        %970 = vmatpush1.bf16.xpose.msra.mxu0 0
        %971 = vmatprep.subr.bf16.mxu0 0
        %972 = vmatpush1.bf16.xpose.msra.mxu0 0
        %973 = vmatprep.subr.bf16.mxu0 0
        %974 = vmatpush1.bf16.xpose.msra.mxu0 0
        %975 = vmatprep.subr.bf16.mxu0 0
        %976 = vmatpush1.bf16.xpose.msra.mxu0 0
        %977 = vmatprep.subr.bf16.mxu0 0
        %978 = vmatpush1.bf16.xpose.msra.mxu0 0
        %979 = vmatprep.subr.bf16.mxu0 0
        %980 = vmatpush1.bf16.xpose.msra.mxu0 0
        %981 = vmatprep.subr.bf16.mxu0 0
        %982 = vmatpush1.bf16.xpose.msra.mxu0 %v965
        %983 = vmatprep.subr.bf16.mxu0 0
        %984 = vmatpush2.bf16.xpose.msra.mxu0 0
        %985 = vmatprep.subr.bf16.mxu0 0
        %986 = vmatpush2.bf16.xpose.msra.mxu0 0
        %987 = vmatprep.subr.bf16.mxu0 0
        %988 = vmatpush2.bf16.xpose.msra.mxu0 0
        %989 = vmatprep.subr.bf16.mxu0 0
        %990 = vmatpush2.bf16.xpose.msra.mxu0 0
        %991 = vmatprep.subr.bf16.mxu0 0
        %992 = vmatpush2.bf16.xpose.msra.mxu0 0
        %993 = vmatprep.subr.bf16.mxu0 0
        %994 = vmatpush2.bf16.xpose.msra.mxu0 0
        %995 = vmatprep.subr.bf16.mxu0 0
        %996 = vmatpush2.bf16.xpose.msra.mxu0 0
        %997 = vmatprep.subr.bf16.mxu0 0
        %998 = vmatpush2.bf16.xpose.msra.mxu0 0
        %999 = vmatprep.mubr.bf16.mxu0 0
        %1000 = vmatmul.mubr.bf16.gmra.mxu0 %v962
        %v1001 = vpop.f32.mrf.mxu0
        %v1002 = vadd.f32 0.0, %v1001
        %v1003 = vpop.f32.mrf.mxu0
        %v1004 = vpop.f32.mrf.mxu0
        %v1005 = vadd.f32 0.0, %v1004
        %v1006 = vpop.f32.mrf.mxu0
        %1007 = vdwg.mxu0
        %v1008 = vsel %vm756, %v1002, -10000.0
        %v1009 = vsel %vm757, %v1005, -10000.0
        %v1010 = vsel %vm885, %v1008, -inf
        %1011 = vmax.xlane.f32.xlu0 %v1010
        %v1012 = vpop.xlane.xlu0 %1011
        %v1013 = vsel %vm885, %v1009, -inf
        %1014 = vmax.xlane.f32.xlu0 %v1013
        %v1015 = vpop.xlane.xlu0 %1014
        %v1016 = vsub.f32 %v1008, %v1012
        %v1017 = vsub.f32 %v1009, %v1015
        %v1018 = vmul.f32 %v1016, 1.442695
        %v1019 = vpow.pop %v1018
        %v1020 = vmul.f32 %v1017, 1.442695
        %v1021 = vpow.pop %v1020
        %v1022 = vsel %vm885, %v1019, 0.0
        %1023 = vadd.xlane.f32.xlu0 %v1022
        %v1024 = vpop.xlane.xlu0 %1023
        %v1025 = vsel %vm885, %v1021, 0.0
        %1026 = vadd.xlane.f32.xlu0 %v1025
        %v1027 = vpop.xlane.xlu0 %1026
        %v1028 = vrcp.pop %v1024
        %v1029 = vrcp.pop %v1027
        %v1030 = vmul.f32 %v1019, %v1028
        %v1031 = vmul.f32 %v1021, %v1029
        %v1032 = vpack.c.bf16 %v1031, %v1030
        %1033 = vrot.lane.b32.xlu0 %v831, 118
        %v1034 = vpop.permute.xlu0 %1033
        %v1037 = vsel %vm885, %v1032, 0
        %1039 = vmatprep.subr.bf16.mxu0 0
        %1040 = vmatpush1.bf16.msra.mxu0 0
        %1041 = vmatprep.subr.bf16.mxu0 0
        %1042 = vmatpush1.bf16.msra.mxu0 0
        %1043 = vmatprep.subr.bf16.mxu0 0
        %1044 = vmatpush1.bf16.msra.mxu0 0
        %1045 = vmatprep.subr.bf16.mxu0 0
        %1046 = vmatpush1.bf16.msra.mxu0 0
        %1047 = vmatprep.subr.bf16.mxu0 0
        %1048 = vmatpush1.bf16.msra.mxu0 0
        %1049 = vmatprep.subr.bf16.mxu0 0
        %1050 = vmatpush1.bf16.msra.mxu0 0
        %1051 = vmatprep.subr.bf16.mxu0 0
        %1052 = vmatpush1.bf16.msra.mxu0 0
        %1053 = vmatprep.subr.bf16.mxu0 0
        %1054 = vmatpush1.bf16.msra.mxu0 %v1034
        %1055 = vmatprep.subr.bf16.mxu0 0
        %1056 = vmatpush2.bf16.msra.mxu0 0
        %1057 = vmatprep.subr.bf16.mxu0 0
        %1058 = vmatpush2.bf16.msra.mxu0 0
        %1059 = vmatprep.subr.bf16.mxu0 0
        %1060 = vmatpush2.bf16.msra.mxu0 0
        %1061 = vmatprep.subr.bf16.mxu0 0
        %1062 = vmatpush2.bf16.msra.mxu0 0
        %1063 = vmatprep.subr.bf16.mxu0 0
        %1064 = vmatpush2.bf16.msra.mxu0 0
        %1065 = vmatprep.subr.bf16.mxu0 0
        %1066 = vmatpush2.bf16.msra.mxu0 0
        %1067 = vmatprep.subr.bf16.mxu0 0
        %1068 = vmatpush2.bf16.msra.mxu0 0
        %1069 = vmatprep.subr.bf16.mxu0 0
        %1070 = vmatpush2.bf16.msra.mxu0 0
        %1071 = vmatprep.mubr.bf16.mxu0 0
        %1072 = vmatmul.mubr.bf16.gmra.mxu0 %v1037
        %v1073 = vpop.f32.mrf.mxu0
        %v1074 = vadd.f32 0.0, %v1073
        %v1075 = vpop.f32.mrf.mxu0
        %v1076 = vpop.f32.mrf.mxu0
        %v1077 = vadd.f32 0.0, %v1076
        %v1078 = vpop.f32.mrf.mxu0
        %1079 = vdwg.mxu0
        %1082 = vrot.lane.b32.xlu0 %v1074, 2
        %v1083 = vpop.permute.xlu0 %1082
        %1084 = vrot.lane.b32.xlu0 %v1077, 2
        %v1085 = vpop.permute.xlu0 %1084
        %v1088 = vsel %vm835, %v950, %v1083
        %v1089 = vsel %vm835, %v953, %v1085
        %v1090 = vld [vmem:[%s5] sm:$0x3]
        %v1091 = vpack.c.bf16 %v1089, %v1088
        %v1092 = vld [vmem:[%s6] sm:$0x1]
        %v1094 = vlaneseq
        %v1095 = vshrl.u32 %v1094, 7
        %v1096 = vsub.s32 0, %v1095
        %v1097 = vrot.slane %v1092, %v1096
        %v1100 = vsel %vm779, %v1091, 0
        %v1103 = vsel %vm783, %v1090, 0
        %1105 = vmatprep.subr.bf16.mxu0 0
        %1106 = vmatpush1.bf16.msra.mxu0 0
        %1107 = vmatprep.subr.bf16.mxu0 0
        %1108 = vmatpush1.bf16.msra.mxu0 0
        %1109 = vmatprep.subr.bf16.mxu0 0
        %1110 = vmatpush1.bf16.msra.mxu0 0
        %1111 = vmatprep.subr.bf16.mxu0 0
        %1112 = vmatpush1.bf16.msra.mxu0 0
        %1113 = vmatprep.subr.bf16.mxu0 0
        %1114 = vmatpush1.bf16.msra.mxu0 0
        %1115 = vmatprep.subr.bf16.mxu0 0
        %1116 = vmatpush1.bf16.msra.mxu0 0
        %1117 = vmatprep.subr.bf16.mxu0 0
        %1118 = vmatpush1.bf16.msra.mxu0 0
        %1119 = vmatprep.subr.bf16.mxu0 0
        %1120 = vmatpush1.bf16.msra.mxu0 %v1103
        %1121 = vmatprep.subr.bf16.mxu0 0
        %1122 = vmatpush2.bf16.msra.mxu0 0
        %1123 = vmatprep.subr.bf16.mxu0 0
        %1124 = vmatpush2.bf16.msra.mxu0 0
        %1125 = vmatprep.subr.bf16.mxu0 0
        %1126 = vmatpush2.bf16.msra.mxu0 0
        %1127 = vmatprep.subr.bf16.mxu0 0
        %1128 = vmatpush2.bf16.msra.mxu0 0
        %1129 = vmatprep.subr.bf16.mxu0 0
        %1130 = vmatpush2.bf16.msra.mxu0 0
        %1131 = vmatprep.subr.bf16.mxu0 0
        %1132 = vmatpush2.bf16.msra.mxu0 0
        %1133 = vmatprep.subr.bf16.mxu0 0
        %1134 = vmatpush2.bf16.msra.mxu0 0
        %1135 = vmatprep.subr.bf16.mxu0 0
        %1136 = vmatpush2.bf16.msra.mxu0 0
        %1137 = vmatprep.mubr.bf16.mxu0 0
        %1138 = vmatmul.mubr.bf16.gmra.mxu0 %v1100
        %v1139 = vpop.f32.mrf.mxu0
        %v1140 = vadd.f32 %v1097, %v1139
        %v1141 = vpop.f32.mrf.mxu0
        %v1142 = vpop.f32.mrf.mxu0
        %v1143 = vadd.f32 %v1097, %v1142
        %v1144 = vpop.f32.mrf.mxu0
        %1145 = vdwg.mxu0
        %v1146 = vadd.f32 %v768, %v1140
        %v1147 = vadd.f32 %v769, %v1143
        %v1148 = vld [vmem:[%s7] sm:$0x1]
        %v1149 = vld [vmem:[%s8] sm:$0x1]
        %v1150 = vsel %vm779, %v1146, 0.0
        %1151 = vadd.xlane.f32.xlu0 %v1150
        %v1152 = vpop.xlane.xlu0 %1151
        %v1153 = vsel %vm779, %v1147, 0.0
        %1154 = vadd.xlane.f32.xlu0 %v1153
        %v1155 = vpop.xlane.xlu0 %1154
        %v1156 = vrcp.pop 4.0
        %v1157 = vmul.f32 %v1152, %v1156
        %v1158 = vmul.f32 %v1155, %v1156
        %v1159 = vsub.f32 %v1146, %v1157
        %v1160 = vsub.f32 %v1147, %v1158
        %v1161 = vmul.f32 %v1159, %v1159
        %v1162 = vmul.f32 %v1160, %v1160
        %v1163 = vsel %vm779, %v1161, 0.0
        %1164 = vadd.xlane.f32.xlu0 %v1163
        %v1165 = vpop.xlane.xlu0 %1164
        %v1166 = vsel %vm779, %v1162, 0.0
        %1167 = vadd.xlane.f32.xlu0 %v1166
        %v1168 = vpop.xlane.xlu0 %1167
        %v1169 = vmul.f32 %v1165, %v1156
        %v1170 = vmul.f32 %v1168, %v1156
        %v1171 = vadd.f32 %v1169, 1e-05
        %v1172 = vadd.f32 %v1170, 1e-05
        %v1173 = vrsqrt.pop %v1171
        %v1174 = vrsqrt.pop %v1172
        %v1175 = vmul.f32 %v1159, %v1173
        %v1176 = vmul.f32 %v1160, %v1174
        %v1178 = vlaneseq
        %v1179 = vshrl.u32 %v1178, 7
        %v1180 = vsub.s32 0, %v1179
        %v1181 = vrot.slane %v1148, %v1180
        %v1183 = vmul.f32 %v1175, %v1181
        %v1184 = vmul.f32 %v1176, %v1181
        %v1186 = vlaneseq
        %v1187 = vshrl.u32 %v1186, 7
        %v1188 = vsub.s32 0, %v1187
        %v1189 = vrot.slane %v1149, %v1188
        %v1191 = vadd.f32 %v1183, %v1189
        %v1192 = vadd.f32 %v1184, %v1189
        %v1193 = vmul.f32 %v1191, %v761
        %v1194 = vmul.f32 %v1192, %v766
        %v1195 = vld [vmem:[%s9] sm:$0xf]
        %v1196 = vld [vmem:[%s9 + $0x4] sm:$0x3]
        %v1197 = vld [vmem:[%s10] sm:$0x1]
        %v1198 = vrot.slane %v1193, 7
        %v1199 = vrot.slane %v1194, 7
        %vm1200 = vcmp.lt.s32.totalorder %v730, 1
        %v1201 = vsel %vm1200, %v1198, %v1199
        %v1202 = vsel %vm1200, %v1199, %v1198
        %v1203 = vadd.s32 %v730, 4294967295
        %v1204 = vadd.s32 %v731, 4294967295
        %vm1205 = vcmp.ge.s32.totalorder %v1203, 0
        %vm1206 = vcmp.ge.s32.totalorder %v1204, 0
        %vm1207 = vcmp.lt.s32.totalorder %v1203, 16
        %vm1208 = vcmp.lt.s32.totalorder %v1204, 16
        %vm1209 = vmand %vm1205, %vm1207
        %vm1210 = vmand %vm1206, %vm1208
        %v1211 = vsel %vm1209, 1, 0
        %v1212 = vsel %vm1210, 1, 0
        %vm1213 = vcmp.eq.s32.totalorder %v1211, 1
        %vm1214 = vcmp.eq.s32.totalorder %v1212, 1
        %v1215 = vsel %vm1213, %v1202, 0.0
        %v1216 = vsel %vm1214, %v1201, 0.0
        %v1217 = vrot.slane %v1193, 1
        %v1218 = vrot.slane %v1194, 1
        %vm1219 = vcmp.lt.s32.totalorder %v730, 7
        %v1220 = vsel %vm1219, %v1217, %v1218
        %v1221 = vsel %vm1219, %v1218, %v1217
        %v1222 = vadd.s32 %v730, 1
        %v1223 = vadd.s32 %v731, 1
        %vm1224 = vcmp.ge.s32.totalorder %v1222, 0
        %vm1225 = vcmp.ge.s32.totalorder %v1223, 0
        %vm1226 = vcmp.lt.s32.totalorder %v1222, 16
        %vm1227 = vcmp.lt.s32.totalorder %v1223, 16
        %vm1228 = vmand %vm1224, %vm1226
        %vm1229 = vmand %vm1225, %vm1227
        %v1230 = vsel %vm1228, 1, 0
        %v1231 = vsel %vm1229, 1, 0
        %vm1232 = vcmp.eq.s32.totalorder %v1230, 1
        %vm1233 = vcmp.eq.s32.totalorder %v1231, 1
        %v1234 = vsel %vm1232, %v1220, 0.0
        %v1235 = vsel %vm1233, %v1221, 0.0
        %1238 = vrot.lane.b32.xlu0 %v1193, 4
        %v1239 = vpop.permute.xlu0 %1238
        %1240 = vrot.lane.b32.xlu0 %v1194, 4
        %v1241 = vpop.permute.xlu0 %1240
        %1246 = vrot.lane.b32.xlu0 %v1234, 8
        %v1247 = vpop.permute.xlu0 %1246
        %1248 = vrot.lane.b32.xlu0 %v1235, 8
        %v1249 = vpop.permute.xlu0 %1248
        %v1252 = vsel %vm779, %v1215, %v1239
        %v1253 = vsel %vm779, %v1216, %v1241
        %vm1254 = vcmask 64512
        %v1255 = vsel %vm1254, %v1252, %v1247
        %v1256 = vsel %vm1254, %v1253, %v1249
        %v1257 = vpack.c.bf16 %v1256, %v1255
        %v1259 = vlaneseq
        %v1260 = vshrl.u32 %v1259, 7
        %v1261 = vsub.s32 0, %v1260
        %v1262 = vrot.slane %v1197, %v1261
        %v1266 = vunpack.c.l.b16 %v1195
        %v1267 = vunpack.c.l.b16 %v1196
        %v1268 = vpack.c.b16 %v1267, %v1266
        %vm1269 = vcmask 97280
        %v1271 = vsel %vm1269, %v1257, 0
        %vm1273 = vcmask 1045504
        %v1275 = vsel %vm1273, %v1268, 0
        %1277 = vmatprep.subr.bf16.mxu0 0
        %1278 = vmatpush1.bf16.msra.mxu0 0
        %1279 = vmatprep.subr.bf16.mxu0 0
        %1280 = vmatpush1.bf16.msra.mxu0 0
        %1281 = vmatprep.subr.bf16.mxu0 0
        %1282 = vmatpush1.bf16.msra.mxu0 0
        %1283 = vmatprep.subr.bf16.mxu0 0
        %1284 = vmatpush1.bf16.msra.mxu0 0
        %1285 = vmatprep.subr.bf16.mxu0 0
        %1286 = vmatpush1.bf16.msra.mxu0 0
        %1287 = vmatprep.subr.bf16.mxu0 0
        %1288 = vmatpush1.bf16.msra.mxu0 0
        %1289 = vmatprep.subr.bf16.mxu0 0
        %1290 = vmatpush1.bf16.msra.mxu0 0
        %1291 = vmatprep.subr.bf16.mxu0 0
        %1292 = vmatpush1.bf16.msra.mxu0 %v1275
        %1293 = vmatprep.subr.bf16.mxu0 0
        %1294 = vmatpush2.bf16.msra.mxu0 0
        %1295 = vmatprep.subr.bf16.mxu0 0
        %1296 = vmatpush2.bf16.msra.mxu0 0
        %1297 = vmatprep.subr.bf16.mxu0 0
        %1298 = vmatpush2.bf16.msra.mxu0 0
        %1299 = vmatprep.subr.bf16.mxu0 0
        %1300 = vmatpush2.bf16.msra.mxu0 0
        %1301 = vmatprep.subr.bf16.mxu0 0
        %1302 = vmatpush2.bf16.msra.mxu0 0
        %1303 = vmatprep.subr.bf16.mxu0 0
        %1304 = vmatpush2.bf16.msra.mxu0 0
        %1305 = vmatprep.subr.bf16.mxu0 0
        %1306 = vmatpush2.bf16.msra.mxu0 0
        %1307 = vmatprep.subr.bf16.mxu0 0
        %1308 = vmatpush2.bf16.msra.mxu0 0
        %1309 = vmatprep.mubr.bf16.mxu0 0
        %1310 = vmatmul.mubr.bf16.gmra.mxu0 %v1271
        %v1311 = vpop.f32.mrf.mxu0
        %v1312 = vadd.f32 %v1262, %v1311
        %v1313 = vpop.f32.mrf.mxu0
        %v1314 = vpop.f32.mrf.mxu0
        %v1315 = vadd.f32 %v1262, %v1314
        %v1316 = vpop.f32.mrf.mxu0
        %1317 = vdwg.mxu0
        %v1318 = vmax.f32 %v1312, 0.0
        %v1319 = vmax.f32 %v1315, 0.0
        %v1320 = vmul.f32 %v1318, %v761
        %v1321 = vmul.f32 %v1319, %v766
        %v1322 = vld [vmem:[%s11] sm:$0xf]
        %v1323 = vld [vmem:[%s11 + $0x4] sm:$0x3]
        %v1324 = vld [vmem:[%s12] sm:$0x1]
        %v1325 = vrot.slane %v1320, 7
        %v1326 = vrot.slane %v1321, 7
        %v1327 = vsel %vm1200, %v1325, %v1326
        %v1328 = vsel %vm1200, %v1326, %v1325
        %v1329 = vsel %vm1213, %v1328, 0.0
        %v1330 = vsel %vm1214, %v1327, 0.0
        %v1331 = vrot.slane %v1320, 1
        %v1332 = vrot.slane %v1321, 1
        %v1333 = vsel %vm1219, %v1331, %v1332
        %v1334 = vsel %vm1219, %v1332, %v1331
        %v1335 = vsel %vm1232, %v1333, 0.0
        %v1336 = vsel %vm1233, %v1334, 0.0
        %1339 = vrot.lane.b32.xlu0 %v1320, 4
        %v1340 = vpop.permute.xlu0 %1339
        %1341 = vrot.lane.b32.xlu0 %v1321, 4
        %v1342 = vpop.permute.xlu0 %1341
        %1347 = vrot.lane.b32.xlu0 %v1335, 8
        %v1348 = vpop.permute.xlu0 %1347
        %1349 = vrot.lane.b32.xlu0 %v1336, 8
        %v1350 = vpop.permute.xlu0 %1349
        %v1353 = vsel %vm779, %v1329, %v1340
        %v1354 = vsel %vm779, %v1330, %v1342
        %v1355 = vsel %vm1254, %v1353, %v1348
        %v1356 = vsel %vm1254, %v1354, %v1350
        %v1357 = vpack.c.bf16 %v1356, %v1355
        %v1359 = vlaneseq
        %v1360 = vshrl.u32 %v1359, 7
        %v1361 = vsub.s32 0, %v1360
        %v1362 = vrot.slane %v1324, %v1361
        %v1366 = vunpack.c.l.b16 %v1322
        %v1367 = vunpack.c.l.b16 %v1323
        %v1368 = vpack.c.b16 %v1367, %v1366
        %v1370 = vsel %vm1269, %v1357, 0
        %v1373 = vsel %vm1273, %v1368, 0
        %1375 = vmatprep.subr.bf16.mxu0 0
        %1376 = vmatpush1.bf16.msra.mxu0 0
        %1377 = vmatprep.subr.bf16.mxu0 0
        %1378 = vmatpush1.bf16.msra.mxu0 0
        %1379 = vmatprep.subr.bf16.mxu0 0
        %1380 = vmatpush1.bf16.msra.mxu0 0
        %1381 = vmatprep.subr.bf16.mxu0 0
        %1382 = vmatpush1.bf16.msra.mxu0 0
        %1383 = vmatprep.subr.bf16.mxu0 0
        %1384 = vmatpush1.bf16.msra.mxu0 0
        %1385 = vmatprep.subr.bf16.mxu0 0
        %1386 = vmatpush1.bf16.msra.mxu0 0
        %1387 = vmatprep.subr.bf16.mxu0 0
        %1388 = vmatpush1.bf16.msra.mxu0 0
        %1389 = vmatprep.subr.bf16.mxu0 0
        %1390 = vmatpush1.bf16.msra.mxu0 %v1373
        %1391 = vmatprep.subr.bf16.mxu0 0
        %1392 = vmatpush2.bf16.msra.mxu0 0
        %1393 = vmatprep.subr.bf16.mxu0 0
        %1394 = vmatpush2.bf16.msra.mxu0 0
        %1395 = vmatprep.subr.bf16.mxu0 0
        %1396 = vmatpush2.bf16.msra.mxu0 0
        %1397 = vmatprep.subr.bf16.mxu0 0
        %1398 = vmatpush2.bf16.msra.mxu0 0
        %1399 = vmatprep.subr.bf16.mxu0 0
        %1400 = vmatpush2.bf16.msra.mxu0 0
        %1401 = vmatprep.subr.bf16.mxu0 0
        %1402 = vmatpush2.bf16.msra.mxu0 0
        %1403 = vmatprep.subr.bf16.mxu0 0
        %1404 = vmatpush2.bf16.msra.mxu0 0
        %1405 = vmatprep.subr.bf16.mxu0 0
        %1406 = vmatpush2.bf16.msra.mxu0 0
        %1407 = vmatprep.mubr.bf16.mxu0 0
        %1408 = vmatmul.mubr.bf16.gmra.mxu0 %v1370
        %v1409 = vpop.f32.mrf.mxu0
        %v1410 = vadd.f32 %v1362, %v1409
        %v1411 = vpop.f32.mrf.mxu0
        %v1412 = vpop.f32.mrf.mxu0
        %v1413 = vadd.f32 %v1362, %v1412
        %v1414 = vpop.f32.mrf.mxu0
        %1415 = vdwg.mxu0
        %v1416 = vmul.f32 %v1410, %v761
        %v1417 = vmul.f32 %v1413, %v766
        %v1418 = vadd.f32 %v1191, %v1416
        %v1419 = vadd.f32 %v1192, %v1417
        %s1420 = scalar_lea.vmem %s7, 1
        %v1421 = vld [vmem:[%s1420] sm:$0x1]
        %s1422 = scalar_lea.vmem %s8, 1
        %v1423 = vld [vmem:[%s1422] sm:$0x1]
        %v1424 = vsel %vm779, %v1418, 0.0
        %1425 = vadd.xlane.f32.xlu0 %v1424
        %v1426 = vpop.xlane.xlu0 %1425
        %v1427 = vsel %vm779, %v1419, 0.0
        %1428 = vadd.xlane.f32.xlu0 %v1427
        %v1429 = vpop.xlane.xlu0 %1428
        %v1430 = vmul.f32 %v1426, %v1156
        %v1431 = vmul.f32 %v1429, %v1156
        %v1432 = vsub.f32 %v1418, %v1430
        %v1433 = vsub.f32 %v1419, %v1431
        %v1434 = vmul.f32 %v1432, %v1432
        %v1435 = vmul.f32 %v1433, %v1433
        %v1436 = vsel %vm779, %v1434, 0.0
        %1437 = vadd.xlane.f32.xlu0 %v1436
        %v1438 = vpop.xlane.xlu0 %1437
        %v1439 = vsel %vm779, %v1435, 0.0
        %1440 = vadd.xlane.f32.xlu0 %v1439
        %v1441 = vpop.xlane.xlu0 %1440
        %v1442 = vmul.f32 %v1438, %v1156
        %v1443 = vmul.f32 %v1441, %v1156
        %v1444 = vadd.f32 %v1442, 1e-05
        %v1445 = vadd.f32 %v1443, 1e-05
        %v1446 = vrsqrt.pop %v1444
        %v1447 = vrsqrt.pop %v1445
        %v1448 = vmul.f32 %v1432, %v1446
        %v1449 = vmul.f32 %v1433, %v1447
        %v1451 = vlaneseq
        %v1452 = vshrl.u32 %v1451, 7
        %v1453 = vsub.s32 0, %v1452
        %v1454 = vrot.slane %v1421, %v1453
        %v1456 = vmul.f32 %v1448, %v1454
        %v1457 = vmul.f32 %v1449, %v1454
        %v1459 = vlaneseq
        %v1460 = vshrl.u32 %v1459, 7
        %v1461 = vsub.s32 0, %v1460
        %v1462 = vrot.slane %v1423, %v1461
        %v1464 = vadd.f32 %v1456, %v1462
        %v1465 = vadd.f32 %v1457, %v1462
        %s1466 = scalar_lea.vmem %s3, 2
        %v1467 = vld [vmem:[%s1466] sm:$0x3]
        %v1468 = vpack.c.bf16 %v1465, %v1464
        %s1469 = scalar_lea.vmem %s4, 1
        %v1470 = vld [vmem:[%s1469] sm:$0x1]
        %v1472 = vlaneseq
        %v1473 = vshrl.u32 %v1472, 7
        %v1474 = vsub.s32 0, %v1473
        %v1475 = vrot.slane %v1470, %v1474
        %v1478 = vsel %vm779, %v1468, 0
        %v1481 = vsel %vm783, %v1467, 0
        %1483 = vmatprep.subr.bf16.mxu0 0
        %1484 = vmatpush1.bf16.msra.mxu0 0
        %1485 = vmatprep.subr.bf16.mxu0 0
        %1486 = vmatpush1.bf16.msra.mxu0 0
        %1487 = vmatprep.subr.bf16.mxu0 0
        %1488 = vmatpush1.bf16.msra.mxu0 0
        %1489 = vmatprep.subr.bf16.mxu0 0
        %1490 = vmatpush1.bf16.msra.mxu0 0
        %1491 = vmatprep.subr.bf16.mxu0 0
        %1492 = vmatpush1.bf16.msra.mxu0 0
        %1493 = vmatprep.subr.bf16.mxu0 0
        %1494 = vmatpush1.bf16.msra.mxu0 0
        %1495 = vmatprep.subr.bf16.mxu0 0
        %1496 = vmatpush1.bf16.msra.mxu0 0
        %1497 = vmatprep.subr.bf16.mxu0 0
        %1498 = vmatpush1.bf16.msra.mxu0 %v1481
        %1499 = vmatprep.subr.bf16.mxu0 0
        %1500 = vmatpush2.bf16.msra.mxu0 0
        %1501 = vmatprep.subr.bf16.mxu0 0
        %1502 = vmatpush2.bf16.msra.mxu0 0
        %1503 = vmatprep.subr.bf16.mxu0 0
        %1504 = vmatpush2.bf16.msra.mxu0 0
        %1505 = vmatprep.subr.bf16.mxu0 0
        %1506 = vmatpush2.bf16.msra.mxu0 0
        %1507 = vmatprep.subr.bf16.mxu0 0
        %1508 = vmatpush2.bf16.msra.mxu0 0
        %1509 = vmatprep.subr.bf16.mxu0 0
        %1510 = vmatpush2.bf16.msra.mxu0 0
        %1511 = vmatprep.subr.bf16.mxu0 0
        %1512 = vmatpush2.bf16.msra.mxu0 0
        %1513 = vmatprep.subr.bf16.mxu0 0
        %1514 = vmatpush2.bf16.msra.mxu0 0
        %1515 = vmatprep.mubr.bf16.mxu0 0
        %1516 = vmatmul.mubr.bf16.gmra.mxu0 %v1478
        %v1517 = vpop.f32.mrf.mxu0
        %v1518 = vadd.f32 %v1475, %v1517
        %v1519 = vpop.f32.mrf.mxu0
        %v1520 = vpop.f32.mrf.mxu0
        %v1521 = vadd.f32 %v1475, %v1520
        %v1522 = vpop.f32.mrf.mxu0
        %1523 = vdwg.mxu0
        %v1524 = vmul.f32 %v1518, 0.70710677
        %v1525 = vmul.f32 %v1521, 0.70710677
        %v1526 = vpack.c.bf16 %v1525, %v1524
        %v1527 = vpack.c.bf16 %v1521, %v1518
        %1529 = vrot.lane.b32.xlu0 %v1527, 124
        %v1530 = vpop.permute.xlu0 %1529
        %v1532 = vsel %vm835, %v1526, 0
        %v1535 = vsel %vm835, %v1530, 0
        %1537 = vmatprep.subr.bf16.mxu0 0
        %1538 = vmatpush1.bf16.xpose.msra.mxu0 0
        %1539 = vmatprep.subr.bf16.mxu0 0
        %1540 = vmatpush1.bf16.xpose.msra.mxu0 0
        %1541 = vmatprep.subr.bf16.mxu0 0
        %1542 = vmatpush1.bf16.xpose.msra.mxu0 0
        %1543 = vmatprep.subr.bf16.mxu0 0
        %1544 = vmatpush1.bf16.xpose.msra.mxu0 0
        %1545 = vmatprep.subr.bf16.mxu0 0
        %1546 = vmatpush1.bf16.xpose.msra.mxu0 0
        %1547 = vmatprep.subr.bf16.mxu0 0
        %1548 = vmatpush1.bf16.xpose.msra.mxu0 0
        %1549 = vmatprep.subr.bf16.mxu0 0
        %1550 = vmatpush1.bf16.xpose.msra.mxu0 0
        %1551 = vmatprep.subr.bf16.mxu0 0
        %1552 = vmatpush1.bf16.xpose.msra.mxu0 %v1535
        %1553 = vmatprep.subr.bf16.mxu0 0
        %1554 = vmatpush2.bf16.xpose.msra.mxu0 0
        %1555 = vmatprep.subr.bf16.mxu0 0
        %1556 = vmatpush2.bf16.xpose.msra.mxu0 0
        %1557 = vmatprep.subr.bf16.mxu0 0
        %1558 = vmatpush2.bf16.xpose.msra.mxu0 0
        %1559 = vmatprep.subr.bf16.mxu0 0
        %1560 = vmatpush2.bf16.xpose.msra.mxu0 0
        %1561 = vmatprep.subr.bf16.mxu0 0
        %1562 = vmatpush2.bf16.xpose.msra.mxu0 0
        %1563 = vmatprep.subr.bf16.mxu0 0
        %1564 = vmatpush2.bf16.xpose.msra.mxu0 0
        %1565 = vmatprep.subr.bf16.mxu0 0
        %1566 = vmatpush2.bf16.xpose.msra.mxu0 0
        %1567 = vmatprep.subr.bf16.mxu0 0
        %1568 = vmatpush2.bf16.xpose.msra.mxu0 0
        %1569 = vmatprep.mubr.bf16.mxu0 0
        %1570 = vmatmul.mubr.bf16.gmra.mxu0 %v1532
        %v1571 = vpop.f32.mrf.mxu0
        %v1572 = vadd.f32 0.0, %v1571
        %v1573 = vpop.f32.mrf.mxu0
        %v1574 = vpop.f32.mrf.mxu0
        %v1575 = vadd.f32 0.0, %v1574
        %v1576 = vpop.f32.mrf.mxu0
        %1577 = vdwg.mxu0
        %v1578 = vsel %vm756, %v1572, -10000.0
        %v1579 = vsel %vm757, %v1575, -10000.0
        %v1580 = vsel %vm885, %v1578, -inf
        %1581 = vmax.xlane.f32.xlu0 %v1580
        %v1582 = vpop.xlane.xlu0 %1581
        %v1583 = vsel %vm885, %v1579, -inf
        %1584 = vmax.xlane.f32.xlu0 %v1583
        %v1585 = vpop.xlane.xlu0 %1584
        %v1586 = vsub.f32 %v1578, %v1582
        %v1587 = vsub.f32 %v1579, %v1585
        %v1588 = vmul.f32 %v1586, 1.442695
        %v1589 = vpow.pop %v1588
        %v1590 = vmul.f32 %v1587, 1.442695
        %v1591 = vpow.pop %v1590
        %v1592 = vsel %vm885, %v1589, 0.0
        %1593 = vadd.xlane.f32.xlu0 %v1592
        %v1594 = vpop.xlane.xlu0 %1593
        %v1595 = vsel %vm885, %v1591, 0.0
        %1596 = vadd.xlane.f32.xlu0 %v1595
        %v1597 = vpop.xlane.xlu0 %1596
        %v1598 = vrcp.pop %v1594
        %v1599 = vrcp.pop %v1597
        %v1600 = vmul.f32 %v1589, %v1598
        %v1601 = vmul.f32 %v1591, %v1599
        %v1602 = vpack.c.bf16 %v1601, %v1600
        %1603 = vrot.lane.b32.xlu0 %v1527, 120
        %v1604 = vpop.permute.xlu0 %1603
        %v1607 = vsel %vm885, %v1602, 0
        %1609 = vmatprep.subr.bf16.mxu0 0
        %1610 = vmatpush1.bf16.msra.mxu0 0
        %1611 = vmatprep.subr.bf16.mxu0 0
        %1612 = vmatpush1.bf16.msra.mxu0 0
        %1613 = vmatprep.subr.bf16.mxu0 0
        %1614 = vmatpush1.bf16.msra.mxu0 0
        %1615 = vmatprep.subr.bf16.mxu0 0
        %1616 = vmatpush1.bf16.msra.mxu0 0
        %1617 = vmatprep.subr.bf16.mxu0 0
        %1618 = vmatpush1.bf16.msra.mxu0 0
        %1619 = vmatprep.subr.bf16.mxu0 0
        %1620 = vmatpush1.bf16.msra.mxu0 0
        %1621 = vmatprep.subr.bf16.mxu0 0
        %1622 = vmatpush1.bf16.msra.mxu0 0
        %1623 = vmatprep.subr.bf16.mxu0 0
        %1624 = vmatpush1.bf16.msra.mxu0 %v1604
        %1625 = vmatprep.subr.bf16.mxu0 0
        %1626 = vmatpush2.bf16.msra.mxu0 0
        %1627 = vmatprep.subr.bf16.mxu0 0
        %1628 = vmatpush2.bf16.msra.mxu0 0
        %1629 = vmatprep.subr.bf16.mxu0 0
        %1630 = vmatpush2.bf16.msra.mxu0 0
        %1631 = vmatprep.subr.bf16.mxu0 0
        %1632 = vmatpush2.bf16.msra.mxu0 0
        %1633 = vmatprep.subr.bf16.mxu0 0
        %1634 = vmatpush2.bf16.msra.mxu0 0
        %1635 = vmatprep.subr.bf16.mxu0 0
        %1636 = vmatpush2.bf16.msra.mxu0 0
        %1637 = vmatprep.subr.bf16.mxu0 0
        %1638 = vmatpush2.bf16.msra.mxu0 0
        %1639 = vmatprep.subr.bf16.mxu0 0
        %1640 = vmatpush2.bf16.msra.mxu0 0
        %1641 = vmatprep.mubr.bf16.mxu0 0
        %1642 = vmatmul.mubr.bf16.gmra.mxu0 %v1607
        %v1643 = vpop.f32.mrf.mxu0
        %v1644 = vadd.f32 0.0, %v1643
        %v1645 = vpop.f32.mrf.mxu0
        %v1646 = vpop.f32.mrf.mxu0
        %v1647 = vadd.f32 0.0, %v1646
        %v1648 = vpop.f32.mrf.mxu0
        %1649 = vdwg.mxu0
        %1651 = vrot.lane.b32.xlu0 %v1526, 126
        %v1652 = vpop.permute.xlu0 %1651
        %1653 = vrot.lane.b32.xlu0 %v1527, 122
        %v1654 = vpop.permute.xlu0 %1653
        %v1656 = vsel %vm835, %v1652, 0
        %v1659 = vsel %vm835, %v1654, 0
        %1661 = vmatprep.subr.bf16.mxu0 0
        %1662 = vmatpush1.bf16.xpose.msra.mxu0 0
        %1663 = vmatprep.subr.bf16.mxu0 0
        %1664 = vmatpush1.bf16.xpose.msra.mxu0 0
        %1665 = vmatprep.subr.bf16.mxu0 0
        %1666 = vmatpush1.bf16.xpose.msra.mxu0 0
        %1667 = vmatprep.subr.bf16.mxu0 0
        %1668 = vmatpush1.bf16.xpose.msra.mxu0 0
        %1669 = vmatprep.subr.bf16.mxu0 0
        %1670 = vmatpush1.bf16.xpose.msra.mxu0 0
        %1671 = vmatprep.subr.bf16.mxu0 0
        %1672 = vmatpush1.bf16.xpose.msra.mxu0 0
        %1673 = vmatprep.subr.bf16.mxu0 0
        %1674 = vmatpush1.bf16.xpose.msra.mxu0 0
        %1675 = vmatprep.subr.bf16.mxu0 0
        %1676 = vmatpush1.bf16.xpose.msra.mxu0 %v1659
        %1677 = vmatprep.subr.bf16.mxu0 0
        %1678 = vmatpush2.bf16.xpose.msra.mxu0 0
        %1679 = vmatprep.subr.bf16.mxu0 0
        %1680 = vmatpush2.bf16.xpose.msra.mxu0 0
        %1681 = vmatprep.subr.bf16.mxu0 0
        %1682 = vmatpush2.bf16.xpose.msra.mxu0 0
        %1683 = vmatprep.subr.bf16.mxu0 0
        %1684 = vmatpush2.bf16.xpose.msra.mxu0 0
        %1685 = vmatprep.subr.bf16.mxu0 0
        %1686 = vmatpush2.bf16.xpose.msra.mxu0 0
        %1687 = vmatprep.subr.bf16.mxu0 0
        %1688 = vmatpush2.bf16.xpose.msra.mxu0 0
        %1689 = vmatprep.subr.bf16.mxu0 0
        %1690 = vmatpush2.bf16.xpose.msra.mxu0 0
        %1691 = vmatprep.subr.bf16.mxu0 0
        %1692 = vmatpush2.bf16.xpose.msra.mxu0 0
        %1693 = vmatprep.mubr.bf16.mxu0 0
        %1694 = vmatmul.mubr.bf16.gmra.mxu0 %v1656
        %v1695 = vpop.f32.mrf.mxu0
        %v1696 = vadd.f32 0.0, %v1695
        %v1697 = vpop.f32.mrf.mxu0
        %v1698 = vpop.f32.mrf.mxu0
        %v1699 = vadd.f32 0.0, %v1698
        %v1700 = vpop.f32.mrf.mxu0
        %1701 = vdwg.mxu0
        %v1702 = vsel %vm756, %v1696, -10000.0
        %v1703 = vsel %vm757, %v1699, -10000.0
        %v1704 = vsel %vm885, %v1702, -inf
        %1705 = vmax.xlane.f32.xlu0 %v1704
        %v1706 = vpop.xlane.xlu0 %1705
        %v1707 = vsel %vm885, %v1703, -inf
        %1708 = vmax.xlane.f32.xlu0 %v1707
        %v1709 = vpop.xlane.xlu0 %1708
        %v1710 = vsub.f32 %v1702, %v1706
        %v1711 = vsub.f32 %v1703, %v1709
        %v1712 = vmul.f32 %v1710, 1.442695
        %v1713 = vpow.pop %v1712
        %v1714 = vmul.f32 %v1711, 1.442695
        %v1715 = vpow.pop %v1714
        %v1716 = vsel %vm885, %v1713, 0.0
        %1717 = vadd.xlane.f32.xlu0 %v1716
        %v1718 = vpop.xlane.xlu0 %1717
        %v1719 = vsel %vm885, %v1715, 0.0
        %1720 = vadd.xlane.f32.xlu0 %v1719
        %v1721 = vpop.xlane.xlu0 %1720
        %v1722 = vrcp.pop %v1718
        %v1723 = vrcp.pop %v1721
        %v1724 = vmul.f32 %v1713, %v1722
        %v1725 = vmul.f32 %v1715, %v1723
        %v1726 = vpack.c.bf16 %v1725, %v1724
        %1727 = vrot.lane.b32.xlu0 %v1527, 118
        %v1728 = vpop.permute.xlu0 %1727
        %v1731 = vsel %vm885, %v1726, 0
        %1733 = vmatprep.subr.bf16.mxu0 0
        %1734 = vmatpush1.bf16.msra.mxu0 0
        %1735 = vmatprep.subr.bf16.mxu0 0
        %1736 = vmatpush1.bf16.msra.mxu0 0
        %1737 = vmatprep.subr.bf16.mxu0 0
        %1738 = vmatpush1.bf16.msra.mxu0 0
        %1739 = vmatprep.subr.bf16.mxu0 0
        %1740 = vmatpush1.bf16.msra.mxu0 0
        %1741 = vmatprep.subr.bf16.mxu0 0
        %1742 = vmatpush1.bf16.msra.mxu0 0
        %1743 = vmatprep.subr.bf16.mxu0 0
        %1744 = vmatpush1.bf16.msra.mxu0 0
        %1745 = vmatprep.subr.bf16.mxu0 0
        %1746 = vmatpush1.bf16.msra.mxu0 0
        %1747 = vmatprep.subr.bf16.mxu0 0
        %1748 = vmatpush1.bf16.msra.mxu0 %v1728
        %1749 = vmatprep.subr.bf16.mxu0 0
        %1750 = vmatpush2.bf16.msra.mxu0 0
        %1751 = vmatprep.subr.bf16.mxu0 0
        %1752 = vmatpush2.bf16.msra.mxu0 0
        %1753 = vmatprep.subr.bf16.mxu0 0
        %1754 = vmatpush2.bf16.msra.mxu0 0
        %1755 = vmatprep.subr.bf16.mxu0 0
        %1756 = vmatpush2.bf16.msra.mxu0 0
        %1757 = vmatprep.subr.bf16.mxu0 0
        %1758 = vmatpush2.bf16.msra.mxu0 0
        %1759 = vmatprep.subr.bf16.mxu0 0
        %1760 = vmatpush2.bf16.msra.mxu0 0
        %1761 = vmatprep.subr.bf16.mxu0 0
        %1762 = vmatpush2.bf16.msra.mxu0 0
        %1763 = vmatprep.subr.bf16.mxu0 0
        %1764 = vmatpush2.bf16.msra.mxu0 0
        %1765 = vmatprep.mubr.bf16.mxu0 0
        %1766 = vmatmul.mubr.bf16.gmra.mxu0 %v1731
        %v1767 = vpop.f32.mrf.mxu0
        %v1768 = vadd.f32 0.0, %v1767
        %v1769 = vpop.f32.mrf.mxu0
        %v1770 = vpop.f32.mrf.mxu0
        %v1771 = vadd.f32 0.0, %v1770
        %v1772 = vpop.f32.mrf.mxu0
        %1773 = vdwg.mxu0
        %1776 = vrot.lane.b32.xlu0 %v1768, 2
        %v1777 = vpop.permute.xlu0 %1776
        %1778 = vrot.lane.b32.xlu0 %v1771, 2
        %v1779 = vpop.permute.xlu0 %1778
        %v1782 = vsel %vm835, %v1644, %v1777
        %v1783 = vsel %vm835, %v1647, %v1779
        %s1784 = scalar_lea.vmem %s5, 2
        %v1785 = vld [vmem:[%s1784] sm:$0x3]
        %v1786 = vpack.c.bf16 %v1783, %v1782
        %s1787 = scalar_lea.vmem %s6, 1
        %v1788 = vld [vmem:[%s1787] sm:$0x1]
        %v1790 = vlaneseq
        %v1791 = vshrl.u32 %v1790, 7
        %v1792 = vsub.s32 0, %v1791
        %v1793 = vrot.slane %v1788, %v1792
        %v1796 = vsel %vm779, %v1786, 0
        %v1799 = vsel %vm783, %v1785, 0
        %1801 = vmatprep.subr.bf16.mxu0 0
        %1802 = vmatpush1.bf16.msra.mxu0 0
        %1803 = vmatprep.subr.bf16.mxu0 0
        %1804 = vmatpush1.bf16.msra.mxu0 0
        %1805 = vmatprep.subr.bf16.mxu0 0
        %1806 = vmatpush1.bf16.msra.mxu0 0
        %1807 = vmatprep.subr.bf16.mxu0 0
        %1808 = vmatpush1.bf16.msra.mxu0 0
        %1809 = vmatprep.subr.bf16.mxu0 0
        %1810 = vmatpush1.bf16.msra.mxu0 0
        %1811 = vmatprep.subr.bf16.mxu0 0
        %1812 = vmatpush1.bf16.msra.mxu0 0
        %1813 = vmatprep.subr.bf16.mxu0 0
        %1814 = vmatpush1.bf16.msra.mxu0 0
        %1815 = vmatprep.subr.bf16.mxu0 0
        %1816 = vmatpush1.bf16.msra.mxu0 %v1799
        %1817 = vmatprep.subr.bf16.mxu0 0
        %1818 = vmatpush2.bf16.msra.mxu0 0
        %1819 = vmatprep.subr.bf16.mxu0 0
        %1820 = vmatpush2.bf16.msra.mxu0 0
        %1821 = vmatprep.subr.bf16.mxu0 0
        %1822 = vmatpush2.bf16.msra.mxu0 0
        %1823 = vmatprep.subr.bf16.mxu0 0
        %1824 = vmatpush2.bf16.msra.mxu0 0
        %1825 = vmatprep.subr.bf16.mxu0 0
        %1826 = vmatpush2.bf16.msra.mxu0 0
        %1827 = vmatprep.subr.bf16.mxu0 0
        %1828 = vmatpush2.bf16.msra.mxu0 0
        %1829 = vmatprep.subr.bf16.mxu0 0
        %1830 = vmatpush2.bf16.msra.mxu0 0
        %1831 = vmatprep.subr.bf16.mxu0 0
        %1832 = vmatpush2.bf16.msra.mxu0 0
        %1833 = vmatprep.mubr.bf16.mxu0 0
        %1834 = vmatmul.mubr.bf16.gmra.mxu0 %v1796
        %v1835 = vpop.f32.mrf.mxu0
        %v1836 = vadd.f32 %v1793, %v1835
        %v1837 = vpop.f32.mrf.mxu0
        %v1838 = vpop.f32.mrf.mxu0
        %v1839 = vadd.f32 %v1793, %v1838
        %v1840 = vpop.f32.mrf.mxu0
        %1841 = vdwg.mxu0
        %v1842 = vadd.f32 %v1464, %v1836
        %v1843 = vadd.f32 %v1465, %v1839
        %s1844 = scalar_lea.vmem %s7, 2
        %v1845 = vld [vmem:[%s1844] sm:$0x1]
        %s1846 = scalar_lea.vmem %s8, 2
        %v1847 = vld [vmem:[%s1846] sm:$0x1]
        %v1848 = vsel %vm779, %v1842, 0.0
        %1849 = vadd.xlane.f32.xlu0 %v1848
        %v1850 = vpop.xlane.xlu0 %1849
        %v1851 = vsel %vm779, %v1843, 0.0
        %1852 = vadd.xlane.f32.xlu0 %v1851
        %v1853 = vpop.xlane.xlu0 %1852
        %v1854 = vmul.f32 %v1850, %v1156
        %v1855 = vmul.f32 %v1853, %v1156
        %v1856 = vsub.f32 %v1842, %v1854
        %v1857 = vsub.f32 %v1843, %v1855
        %v1858 = vmul.f32 %v1856, %v1856
        %v1859 = vmul.f32 %v1857, %v1857
        %v1860 = vsel %vm779, %v1858, 0.0
        %1861 = vadd.xlane.f32.xlu0 %v1860
        %v1862 = vpop.xlane.xlu0 %1861
        %v1863 = vsel %vm779, %v1859, 0.0
        %1864 = vadd.xlane.f32.xlu0 %v1863
        %v1865 = vpop.xlane.xlu0 %1864
        %v1866 = vmul.f32 %v1862, %v1156
        %v1867 = vmul.f32 %v1865, %v1156
        %v1868 = vadd.f32 %v1866, 1e-05
        %v1869 = vadd.f32 %v1867, 1e-05
        %v1870 = vrsqrt.pop %v1868
        %v1871 = vrsqrt.pop %v1869
        %v1872 = vmul.f32 %v1856, %v1870
        %v1873 = vmul.f32 %v1857, %v1871
        %v1875 = vlaneseq
        %v1876 = vshrl.u32 %v1875, 7
        %v1877 = vsub.s32 0, %v1876
        %v1878 = vrot.slane %v1845, %v1877
        %v1880 = vmul.f32 %v1872, %v1878
        %v1881 = vmul.f32 %v1873, %v1878
        %v1883 = vlaneseq
        %v1884 = vshrl.u32 %v1883, 7
        %v1885 = vsub.s32 0, %v1884
        %v1886 = vrot.slane %v1847, %v1885
        %v1888 = vadd.f32 %v1880, %v1886
        %v1889 = vadd.f32 %v1881, %v1886
        %v1890 = vmul.f32 %v1888, %v761
        %v1891 = vmul.f32 %v1889, %v766
        %s1892 = scalar_lea.vmem %s9, 8
        %v1893 = vld [vmem:[%s1892] sm:$0xf]
        %v1894 = vld [vmem:[%s1892 + $0x4] sm:$0x3]
        %s1895 = scalar_lea.vmem %s10, 1
        %v1896 = vld [vmem:[%s1895] sm:$0x1]
        %v1897 = vrot.slane %v1890, 7
        %v1898 = vrot.slane %v1891, 7
        %v1899 = vsel %vm1200, %v1897, %v1898
        %v1900 = vsel %vm1200, %v1898, %v1897
        %v1901 = vsel %vm1213, %v1900, 0.0
        %v1902 = vsel %vm1214, %v1899, 0.0
        %v1903 = vrot.slane %v1890, 1
        %v1904 = vrot.slane %v1891, 1
        %v1905 = vsel %vm1219, %v1903, %v1904
        %v1906 = vsel %vm1219, %v1904, %v1903
        %v1907 = vsel %vm1232, %v1905, 0.0
        %v1908 = vsel %vm1233, %v1906, 0.0
        %1911 = vrot.lane.b32.xlu0 %v1890, 4
        %v1912 = vpop.permute.xlu0 %1911
        %1913 = vrot.lane.b32.xlu0 %v1891, 4
        %v1914 = vpop.permute.xlu0 %1913
        %1919 = vrot.lane.b32.xlu0 %v1907, 8
        %v1920 = vpop.permute.xlu0 %1919
        %1921 = vrot.lane.b32.xlu0 %v1908, 8
        %v1922 = vpop.permute.xlu0 %1921
        %v1925 = vsel %vm779, %v1901, %v1912
        %v1926 = vsel %vm779, %v1902, %v1914
        %v1927 = vsel %vm1254, %v1925, %v1920
        %v1928 = vsel %vm1254, %v1926, %v1922
        %v1929 = vpack.c.bf16 %v1928, %v1927
        %v1931 = vlaneseq
        %v1932 = vshrl.u32 %v1931, 7
        %v1933 = vsub.s32 0, %v1932
        %v1934 = vrot.slane %v1896, %v1933
        %v1938 = vunpack.c.l.b16 %v1893
        %v1939 = vunpack.c.l.b16 %v1894
        %v1940 = vpack.c.b16 %v1939, %v1938
        %v1942 = vsel %vm1269, %v1929, 0
        %v1945 = vsel %vm1273, %v1940, 0
        %1947 = vmatprep.subr.bf16.mxu0 0
        %1948 = vmatpush1.bf16.msra.mxu0 0
        %1949 = vmatprep.subr.bf16.mxu0 0
        %1950 = vmatpush1.bf16.msra.mxu0 0
        %1951 = vmatprep.subr.bf16.mxu0 0
        %1952 = vmatpush1.bf16.msra.mxu0 0
        %1953 = vmatprep.subr.bf16.mxu0 0
        %1954 = vmatpush1.bf16.msra.mxu0 0
        %1955 = vmatprep.subr.bf16.mxu0 0
        %1956 = vmatpush1.bf16.msra.mxu0 0
        %1957 = vmatprep.subr.bf16.mxu0 0
        %1958 = vmatpush1.bf16.msra.mxu0 0
        %1959 = vmatprep.subr.bf16.mxu0 0
        %1960 = vmatpush1.bf16.msra.mxu0 0
        %1961 = vmatprep.subr.bf16.mxu0 0
        %1962 = vmatpush1.bf16.msra.mxu0 %v1945
        %1963 = vmatprep.subr.bf16.mxu0 0
        %1964 = vmatpush2.bf16.msra.mxu0 0
        %1965 = vmatprep.subr.bf16.mxu0 0
        %1966 = vmatpush2.bf16.msra.mxu0 0
        %1967 = vmatprep.subr.bf16.mxu0 0
        %1968 = vmatpush2.bf16.msra.mxu0 0
        %1969 = vmatprep.subr.bf16.mxu0 0
        %1970 = vmatpush2.bf16.msra.mxu0 0
        %1971 = vmatprep.subr.bf16.mxu0 0
        %1972 = vmatpush2.bf16.msra.mxu0 0
        %1973 = vmatprep.subr.bf16.mxu0 0
        %1974 = vmatpush2.bf16.msra.mxu0 0
        %1975 = vmatprep.subr.bf16.mxu0 0
        %1976 = vmatpush2.bf16.msra.mxu0 0
        %1977 = vmatprep.subr.bf16.mxu0 0
        %1978 = vmatpush2.bf16.msra.mxu0 0
        %1979 = vmatprep.mubr.bf16.mxu0 0
        %1980 = vmatmul.mubr.bf16.gmra.mxu0 %v1942
        %v1981 = vpop.f32.mrf.mxu0
        %v1982 = vadd.f32 %v1934, %v1981
        %v1983 = vpop.f32.mrf.mxu0
        %v1984 = vpop.f32.mrf.mxu0
        %v1985 = vadd.f32 %v1934, %v1984
        %v1986 = vpop.f32.mrf.mxu0
        %1987 = vdwg.mxu0
        %v1988 = vmax.f32 %v1982, 0.0
        %v1989 = vmax.f32 %v1985, 0.0
        %v1990 = vmul.f32 %v1988, %v761
        %v1991 = vmul.f32 %v1989, %v766
        %s1992 = scalar_lea.vmem %s11, 8
        %v1993 = vld [vmem:[%s1992] sm:$0xf]
        %v1994 = vld [vmem:[%s1992 + $0x4] sm:$0x3]
        %s1995 = scalar_lea.vmem %s12, 1
        %v1996 = vld [vmem:[%s1995] sm:$0x1]
        %v1997 = vrot.slane %v1990, 7
        %v1998 = vrot.slane %v1991, 7
        %v1999 = vsel %vm1200, %v1997, %v1998
        %v2000 = vsel %vm1200, %v1998, %v1997
        %v2001 = vsel %vm1213, %v2000, 0.0
        %v2002 = vsel %vm1214, %v1999, 0.0
        %v2003 = vrot.slane %v1990, 1
        %v2004 = vrot.slane %v1991, 1
        %v2005 = vsel %vm1219, %v2003, %v2004
        %v2006 = vsel %vm1219, %v2004, %v2003
        %v2007 = vsel %vm1232, %v2005, 0.0
        %v2008 = vsel %vm1233, %v2006, 0.0
        %2011 = vrot.lane.b32.xlu0 %v1990, 4
        %v2012 = vpop.permute.xlu0 %2011
        %2013 = vrot.lane.b32.xlu0 %v1991, 4
        %v2014 = vpop.permute.xlu0 %2013
        %2019 = vrot.lane.b32.xlu0 %v2007, 8
        %v2020 = vpop.permute.xlu0 %2019
        %2021 = vrot.lane.b32.xlu0 %v2008, 8
        %v2022 = vpop.permute.xlu0 %2021
        %v2025 = vsel %vm779, %v2001, %v2012
        %v2026 = vsel %vm779, %v2002, %v2014
        %v2027 = vsel %vm1254, %v2025, %v2020
        %v2028 = vsel %vm1254, %v2026, %v2022
        %v2029 = vpack.c.bf16 %v2028, %v2027
        %v2031 = vlaneseq
        %v2032 = vshrl.u32 %v2031, 7
        %v2033 = vsub.s32 0, %v2032
        %v2034 = vrot.slane %v1996, %v2033
        %v2038 = vunpack.c.l.b16 %v1993
        %v2039 = vunpack.c.l.b16 %v1994
        %v2040 = vpack.c.b16 %v2039, %v2038
        %v2042 = vsel %vm1269, %v2029, 0
        %v2045 = vsel %vm1273, %v2040, 0
        %2047 = vmatprep.subr.bf16.mxu0 0
        %2048 = vmatpush1.bf16.msra.mxu0 0
        %2049 = vmatprep.subr.bf16.mxu0 0
        %2050 = vmatpush1.bf16.msra.mxu0 0
        %2051 = vmatprep.subr.bf16.mxu0 0
        %2052 = vmatpush1.bf16.msra.mxu0 0
        %2053 = vmatprep.subr.bf16.mxu0 0
        %2054 = vmatpush1.bf16.msra.mxu0 0
        %2055 = vmatprep.subr.bf16.mxu0 0
        %2056 = vmatpush1.bf16.msra.mxu0 0
        %2057 = vmatprep.subr.bf16.mxu0 0
        %2058 = vmatpush1.bf16.msra.mxu0 0
        %2059 = vmatprep.subr.bf16.mxu0 0
        %2060 = vmatpush1.bf16.msra.mxu0 0
        %2061 = vmatprep.subr.bf16.mxu0 0
        %2062 = vmatpush1.bf16.msra.mxu0 %v2045
        %2063 = vmatprep.subr.bf16.mxu0 0
        %2064 = vmatpush2.bf16.msra.mxu0 0
        %2065 = vmatprep.subr.bf16.mxu0 0
        %2066 = vmatpush2.bf16.msra.mxu0 0
        %2067 = vmatprep.subr.bf16.mxu0 0
        %2068 = vmatpush2.bf16.msra.mxu0 0
        %2069 = vmatprep.subr.bf16.mxu0 0
        %2070 = vmatpush2.bf16.msra.mxu0 0
        %2071 = vmatprep.subr.bf16.mxu0 0
        %2072 = vmatpush2.bf16.msra.mxu0 0
        %2073 = vmatprep.subr.bf16.mxu0 0
        %2074 = vmatpush2.bf16.msra.mxu0 0
        %2075 = vmatprep.subr.bf16.mxu0 0
        %2076 = vmatpush2.bf16.msra.mxu0 0
        %2077 = vmatprep.subr.bf16.mxu0 0
        %2078 = vmatpush2.bf16.msra.mxu0 0
        %2079 = vmatprep.mubr.bf16.mxu0 0
        %2080 = vmatmul.mubr.bf16.gmra.mxu0 %v2042
        %v2081 = vpop.f32.mrf.mxu0
        %v2082 = vadd.f32 %v2034, %v2081
        %v2083 = vpop.f32.mrf.mxu0
        %v2084 = vpop.f32.mrf.mxu0
        %v2085 = vadd.f32 %v2034, %v2084
        %v2086 = vpop.f32.mrf.mxu0
        %2087 = vdwg.mxu0
        %v2088 = vmul.f32 %v2082, %v761
        %v2089 = vmul.f32 %v2085, %v766
        %v2090 = vadd.f32 %v1888, %v2088
        %v2091 = vadd.f32 %v1889, %v2089
        %s2092 = scalar_lea.vmem %s7, 3
        %v2093 = vld [vmem:[%s2092] sm:$0x1]
        %s2094 = scalar_lea.vmem %s8, 3
        %v2095 = vld [vmem:[%s2094] sm:$0x1]
        %v2096 = vsel %vm779, %v2090, 0.0
        %2097 = vadd.xlane.f32.xlu0 %v2096
        %v2098 = vpop.xlane.xlu0 %2097
        %v2099 = vsel %vm779, %v2091, 0.0
        %2100 = vadd.xlane.f32.xlu0 %v2099
        %v2101 = vpop.xlane.xlu0 %2100
        %v2102 = vmul.f32 %v2098, %v1156
        %v2103 = vmul.f32 %v2101, %v1156
        %v2104 = vsub.f32 %v2090, %v2102
        %v2105 = vsub.f32 %v2091, %v2103
        %v2106 = vmul.f32 %v2104, %v2104
        %v2107 = vmul.f32 %v2105, %v2105
        %v2108 = vsel %vm779, %v2106, 0.0
        %2109 = vadd.xlane.f32.xlu0 %v2108
        %v2110 = vpop.xlane.xlu0 %2109
        %v2111 = vsel %vm779, %v2107, 0.0
        %2112 = vadd.xlane.f32.xlu0 %v2111
        %v2113 = vpop.xlane.xlu0 %2112
        %v2114 = vmul.f32 %v2110, %v1156
        %v2115 = vmul.f32 %v2113, %v1156
        %v2116 = vadd.f32 %v2114, 1e-05
        %v2117 = vadd.f32 %v2115, 1e-05
        %v2118 = vrsqrt.pop %v2116
        %v2119 = vrsqrt.pop %v2117
        %v2120 = vmul.f32 %v2104, %v2118
        %v2121 = vmul.f32 %v2105, %v2119
        %v2123 = vlaneseq
        %v2124 = vshrl.u32 %v2123, 7
        %v2125 = vsub.s32 0, %v2124
        %v2126 = vrot.slane %v2093, %v2125
        %v2128 = vmul.f32 %v2120, %v2126
        %v2129 = vmul.f32 %v2121, %v2126
        %v2131 = vlaneseq
        %v2132 = vshrl.u32 %v2131, 7
        %v2133 = vsub.s32 0, %v2132
        %v2134 = vrot.slane %v2095, %v2133
        %v2136 = vadd.f32 %v2128, %v2134
        %v2137 = vadd.f32 %v2129, %v2134
        %v2138 = vmul.f32 %v2136, %v761
        %v2139 = vmul.f32 %v2137, %v766
        %v2140 = vadd.f32 %v2138, %v732
        %v2141 = vadd.f32 %v2139, %v733
        %v2142 = vld [vmem:[%s13] sm:$0x3]
        %v2143 = vpack.c.bf16 %v2141, %v2140
        %v2144 = vld [vmem:[%s14] sm:$0x1]
        %v2146 = vlaneseq
        %v2147 = vshrl.u32 %v2146, 7
        %v2148 = vsub.s32 0, %v2147
        %v2149 = vrot.slane %v2144, %v2148
        %v2152 = vsel %vm779, %v2143, 0
        %v2155 = vsel %vm783, %v2142, 0
        %2157 = vmatprep.subr.bf16.mxu0 0
        %2158 = vmatpush1.bf16.msra.mxu0 0
        %2159 = vmatprep.subr.bf16.mxu0 0
        %2160 = vmatpush1.bf16.msra.mxu0 0
        %2161 = vmatprep.subr.bf16.mxu0 0
        %2162 = vmatpush1.bf16.msra.mxu0 0
        %2163 = vmatprep.subr.bf16.mxu0 0
        %2164 = vmatpush1.bf16.msra.mxu0 0
        %2165 = vmatprep.subr.bf16.mxu0 0
        %2166 = vmatpush1.bf16.msra.mxu0 0
        %2167 = vmatprep.subr.bf16.mxu0 0
        %2168 = vmatpush1.bf16.msra.mxu0 0
        %2169 = vmatprep.subr.bf16.mxu0 0
        %2170 = vmatpush1.bf16.msra.mxu0 0
        %2171 = vmatprep.subr.bf16.mxu0 0
        %2172 = vmatpush1.bf16.msra.mxu0 %v2155
        %2173 = vmatprep.subr.bf16.mxu0 0
        %2174 = vmatpush2.bf16.msra.mxu0 0
        %2175 = vmatprep.subr.bf16.mxu0 0
        %2176 = vmatpush2.bf16.msra.mxu0 0
        %2177 = vmatprep.subr.bf16.mxu0 0
        %2178 = vmatpush2.bf16.msra.mxu0 0
        %2179 = vmatprep.subr.bf16.mxu0 0
        %2180 = vmatpush2.bf16.msra.mxu0 0
        %2181 = vmatprep.subr.bf16.mxu0 0
        %2182 = vmatpush2.bf16.msra.mxu0 0
        %2183 = vmatprep.subr.bf16.mxu0 0
        %2184 = vmatpush2.bf16.msra.mxu0 0
        %2185 = vmatprep.subr.bf16.mxu0 0
        %2186 = vmatpush2.bf16.msra.mxu0 0
        %2187 = vmatprep.subr.bf16.mxu0 0
        %2188 = vmatpush2.bf16.msra.mxu0 0
        %2189 = vmatprep.mubr.bf16.mxu0 0
        %2190 = vmatmul.mubr.bf16.gmra.mxu0 %v2152
        %v2191 = vpop.f32.mrf.mxu0
        %v2192 = vadd.f32 %v2149, %v2191
        %v2193 = vpop.f32.mrf.mxu0
        %v2194 = vpop.f32.mrf.mxu0
        %v2195 = vadd.f32 %v2149, %v2194
        %v2196 = vpop.f32.mrf.mxu0
        %2197 = vdwg.mxu0
        %v2198 = vmul.f32 %v2192, %v761
        %v2199 = vmul.f32 %v2195, %v766
        %v2200 = vld [vmem:[%s15] sm:$0xf]
        %v2201 = vld [vmem:[%s15 + $0x4] sm:$0xf]
        %v2202 = vld [vmem:[%s15 + $0x8] sm:$0xf]
        %v2203 = vld [vmem:[%s15 + $0xc] sm:$0xf]
        %v2204 = vld [vmem:[%s15 + $0x10] sm:$0xf]
        %v2205 = vld [vmem:[%s15 + $0x14] sm:$0xf]
        %v2206 = vld [vmem:[%s16] sm:$0x1]
        %v2207 = vrot.slane %v2198, 7
        %v2208 = vrot.slane %v2199, 7
        %v2209 = vsel %vm1200, %v2207, %v2208
        %v2210 = vsel %vm1200, %v2208, %v2207
        %v2211 = vsel %vm1213, %v2210, 0.0
        %v2212 = vsel %vm1214, %v2209, 0.0
        %v2213 = vrot.slane %v2198, 1
        %v2214 = vrot.slane %v2199, 1
        %v2215 = vsel %vm1219, %v2213, %v2214
        %v2216 = vsel %vm1219, %v2214, %v2213
        %v2217 = vsel %vm1232, %v2215, 0.0
        %v2218 = vsel %vm1233, %v2216, 0.0
        %2221 = vrot.lane.b32.xlu0 %v2198, 16
        %v2222 = vpop.permute.xlu0 %2221
        %2223 = vrot.lane.b32.xlu0 %v2199, 16
        %v2224 = vpop.permute.xlu0 %2223
        %2229 = vrot.lane.b32.xlu0 %v2217, 32
        %v2230 = vpop.permute.xlu0 %2229
        %2231 = vrot.lane.b32.xlu0 %v2218, 32
        %v2232 = vpop.permute.xlu0 %2231
        %v2235 = vsel %vm885, %v2211, %v2222
        %v2236 = vsel %vm885, %v2212, %v2224
        %vm2237 = vcmask 261120
        %v2238 = vsel %vm2237, %v2235, %v2230
        %v2239 = vsel %vm2237, %v2236, %v2232
        %v2240 = vpack.c.bf16 %v2239, %v2238
        %v2242 = vlaneseq
        %v2243 = vshrl.u32 %v2242, 7
        %v2244 = vsub.s32 0, %v2243
        %v2245 = vrot.slane %v2206, %v2244
        %v2253 = vunpack.c.l.b16 %v2200
        %v2254 = vunpack.c.l.b16 %v2201
        %v2255 = vunpack.c.l.b16 %v2202
        %v2256 = vunpack.c.l.b16 %v2203
        %v2257 = vunpack.c.l.b16 %v2204
        %v2258 = vunpack.c.l.b16 %v2205
        %v2259 = vpack.c.b16 %v2254, %v2253
        %v2260 = vpack.c.b16 %v2256, %v2255
        %v2261 = vpack.c.b16 %v2258, %v2257
        %vm2265 = vcmask 392192
        %v2267 = vsel %vm2265, %v2240, 0
        %2269 = vmatprep.subr.bf16.mxu0 0
        %2270 = vmatpush1.bf16.msra.mxu0 0
        %2271 = vmatprep.subr.bf16.mxu0 0
        %2272 = vmatpush1.bf16.msra.mxu0 0
        %2273 = vmatprep.subr.bf16.mxu0 0
        %2274 = vmatpush1.bf16.msra.mxu0 0
        %2275 = vmatprep.subr.bf16.mxu0 0
        %2276 = vmatpush1.bf16.msra.mxu0 0
        %2277 = vmatprep.subr.bf16.mxu0 0
        %2278 = vmatpush1.bf16.msra.mxu0 0
        %2279 = vmatprep.subr.bf16.mxu0 0
        %2280 = vmatpush1.bf16.msra.mxu0 %v2261
        %2281 = vmatprep.subr.bf16.mxu0 0
        %2282 = vmatpush1.bf16.msra.mxu0 %v2260
        %2283 = vmatprep.subr.bf16.mxu0 0
        %2284 = vmatpush1.bf16.msra.mxu0 %v2259
        %2285 = vmatprep.subr.bf16.mxu0 0
        %2286 = vmatpush2.bf16.msra.mxu0 0
        %2287 = vmatprep.subr.bf16.mxu0 0
        %2288 = vmatpush2.bf16.msra.mxu0 0
        %2289 = vmatprep.subr.bf16.mxu0 0
        %2290 = vmatpush2.bf16.msra.mxu0 0
        %2291 = vmatprep.subr.bf16.mxu0 0
        %2292 = vmatpush2.bf16.msra.mxu0 0
        %2293 = vmatprep.subr.bf16.mxu0 0
        %2294 = vmatpush2.bf16.msra.mxu0 0
        %2295 = vmatprep.subr.bf16.mxu0 0
        %2296 = vmatpush2.bf16.msra.mxu0 0
        %2297 = vmatprep.subr.bf16.mxu0 0
        %2298 = vmatpush2.bf16.msra.mxu0 0
        %2299 = vmatprep.subr.bf16.mxu0 0
        %2300 = vmatpush2.bf16.msra.mxu0 0
        %2301 = vmatprep.mubr.bf16.mxu0 0
        %2302 = vmatmul.mubr.bf16.gmra.mxu0 %v2267
        %v2303 = vpop.f32.mrf.mxu0
        %v2304 = vadd.f32 %v2245, %v2303
        %v2305 = vpop.f32.mrf.mxu0
        %v2306 = vpop.f32.mrf.mxu0
        %v2307 = vadd.f32 %v2245, %v2306
        %v2308 = vpop.f32.mrf.mxu0
        %2309 = vdwg.mxu0
        %v2310 = vtanh.pop %v2304
        %v2311 = vtanh.pop %v2307
        %v2312 = vxor.u32 %v2304, 2147483648
        %v2313 = vxor.u32 %v2307, 2147483648
        %v2314 = vmul.f32 %v2312, 1.442695
        %v2315 = vpow.pop %v2314
        %v2316 = vmul.f32 %v2313, 1.442695
        %v2317 = vpow.pop %v2316
        %v2318 = vadd.f32 %v2315, 1.0
        %v2319 = vadd.f32 %v2317, 1.0
        %v2320 = vrcp.pop %v2318
        %v2321 = vmul.f32 1.0, %v2320
        %v2322 = vrcp.pop %v2319
        %v2323 = vmul.f32 1.0, %v2322
        %2326 = vrot.lane.b32.xlu0 %v2321, 112
        %v2327 = vpop.permute.xlu0 %2326
        %2328 = vrot.lane.b32.xlu0 %v2323, 112
        %v2329 = vpop.permute.xlu0 %2328
        %v2332 = vmul.f32 %v2310, %v2327
        %v2333 = vmul.f32 %v2311, %v2329
        %v2334 = vld [vmem:[%s17] sm:$0xf]
        %v2335 = vld [vmem:[%s17 + $0x4] sm:$0xf]
        %v2336 = vpack.c.bf16 %v2333, %v2332
        %v2337 = vld [vmem:[%s18] sm:$0x1]
        %v2339 = vlaneseq
        %v2340 = vshrl.u32 %v2339, 7
        %v2341 = vsub.s32 0, %v2340
        %v2342 = vrot.slane %v2337, %v2341
        %v2346 = vunpack.c.l.b16 %v2334
        %v2347 = vunpack.c.l.b16 %v2335
        %v2348 = vpack.c.b16 %v2347, %v2346
        %v2351 = vsel %vm885, %v2336, 0
        %2353 = vmatprep.subr.bf16.mxu0 0
        %2354 = vmatpush1.bf16.msra.mxu0 0
        %2355 = vmatprep.subr.bf16.mxu0 0
        %2356 = vmatpush1.bf16.msra.mxu0 0
        %2357 = vmatprep.subr.bf16.mxu0 0
        %2358 = vmatpush1.bf16.msra.mxu0 0
        %2359 = vmatprep.subr.bf16.mxu0 0
        %2360 = vmatpush1.bf16.msra.mxu0 0
        %2361 = vmatprep.subr.bf16.mxu0 0
        %2362 = vmatpush1.bf16.msra.mxu0 0
        %2363 = vmatprep.subr.bf16.mxu0 0
        %2364 = vmatpush1.bf16.msra.mxu0 0
        %2365 = vmatprep.subr.bf16.mxu0 0
        %2366 = vmatpush1.bf16.msra.mxu0 0
        %2367 = vmatprep.subr.bf16.mxu0 0
        %2368 = vmatpush1.bf16.msra.mxu0 %v2348
        %2369 = vmatprep.subr.bf16.mxu0 0
        %2370 = vmatpush2.bf16.msra.mxu0 0
        %2371 = vmatprep.subr.bf16.mxu0 0
        %2372 = vmatpush2.bf16.msra.mxu0 0
        %2373 = vmatprep.subr.bf16.mxu0 0
        %2374 = vmatpush2.bf16.msra.mxu0 0
        %2375 = vmatprep.subr.bf16.mxu0 0
        %2376 = vmatpush2.bf16.msra.mxu0 0
        %2377 = vmatprep.subr.bf16.mxu0 0
        %2378 = vmatpush2.bf16.msra.mxu0 0
        %2379 = vmatprep.subr.bf16.mxu0 0
        %2380 = vmatpush2.bf16.msra.mxu0 0
        %2381 = vmatprep.subr.bf16.mxu0 0
        %2382 = vmatpush2.bf16.msra.mxu0 0
        %2383 = vmatprep.subr.bf16.mxu0 0
        %2384 = vmatpush2.bf16.msra.mxu0 0
        %2385 = vmatprep.mubr.bf16.mxu0 0
        %2386 = vmatmul.mubr.bf16.gmra.mxu0 %v2351
        %v2387 = vpop.f32.mrf.mxu0
        %v2388 = vadd.f32 %v2342, %v2387
        %v2389 = vpop.f32.mrf.mxu0
        %v2390 = vpop.f32.mrf.mxu0
        %v2391 = vadd.f32 %v2342, %v2390
        %v2392 = vpop.f32.mrf.mxu0
        %2393 = vdwg.mxu0
        %v2394 = vadd.f32 %v2198, %v2388
        %v2395 = vadd.f32 %v2199, %v2391
        %v2396 = vmul.f32 %v2394, %v761
        %v2397 = vmul.f32 %v2395, %v766
        %v2398 = vadd.f32 %v2388, 0.0
        %v2399 = vadd.f32 %v2391, 0.0
        %s2400 = scalar_lea.vmem %s15, 24
        %v2401 = vld [vmem:[%s2400] sm:$0xf]
        %v2402 = vld [vmem:[%s2400 + $0x4] sm:$0xf]
        %v2403 = vld [vmem:[%s2400 + $0x8] sm:$0xf]
        %v2404 = vld [vmem:[%s2400 + $0xc] sm:$0xf]
        %v2405 = vld [vmem:[%s2400 + $0x10] sm:$0xf]
        %v2406 = vld [vmem:[%s2400 + $0x14] sm:$0xf]
        %s2407 = scalar_lea.vmem %s16, 1
        %v2408 = vld [vmem:[%s2407] sm:$0x1]
        %v2409 = vrot.slane %v2396, 6
        %v2410 = vrot.slane %v2397, 6
        %vm2411 = vcmp.lt.s32.totalorder %v730, 2
        %v2412 = vsel %vm2411, %v2409, %v2410
        %v2413 = vsel %vm2411, %v2410, %v2409
        %v2414 = vadd.s32 %v730, 4294967294
        %v2415 = vadd.s32 %v731, 4294967294
        %vm2416 = vcmp.ge.s32.totalorder %v2414, 0
        %vm2417 = vcmp.ge.s32.totalorder %v2415, 0
        %vm2418 = vcmp.lt.s32.totalorder %v2414, 16
        %vm2419 = vcmp.lt.s32.totalorder %v2415, 16
        %vm2420 = vmand %vm2416, %vm2418
        %vm2421 = vmand %vm2417, %vm2419
        %v2422 = vsel %vm2420, 1, 0
        %v2423 = vsel %vm2421, 1, 0
        %vm2424 = vcmp.eq.s32.totalorder %v2422, 1
        %vm2425 = vcmp.eq.s32.totalorder %v2423, 1
        %v2426 = vsel %vm2424, %v2413, 0.0
        %v2427 = vsel %vm2425, %v2412, 0.0
        %v2428 = vrot.slane %v2396, 2
        %v2429 = vrot.slane %v2397, 2
        %vm2430 = vcmp.lt.s32.totalorder %v730, 6
        %v2431 = vsel %vm2430, %v2428, %v2429
        %v2432 = vsel %vm2430, %v2429, %v2428
        %v2433 = vadd.s32 %v730, 2
        %v2434 = vadd.s32 %v731, 2
        %vm2435 = vcmp.ge.s32.totalorder %v2433, 0
        %vm2436 = vcmp.ge.s32.totalorder %v2434, 0
        %vm2437 = vcmp.lt.s32.totalorder %v2433, 16
        %vm2438 = vcmp.lt.s32.totalorder %v2434, 16
        %vm2439 = vmand %vm2435, %vm2437
        %vm2440 = vmand %vm2436, %vm2438
        %v2441 = vsel %vm2439, 1, 0
        %v2442 = vsel %vm2440, 1, 0
        %vm2443 = vcmp.eq.s32.totalorder %v2441, 1
        %vm2444 = vcmp.eq.s32.totalorder %v2442, 1
        %v2445 = vsel %vm2443, %v2431, 0.0
        %v2446 = vsel %vm2444, %v2432, 0.0
        %2449 = vrot.lane.b32.xlu0 %v2396, 16
        %v2450 = vpop.permute.xlu0 %2449
        %2451 = vrot.lane.b32.xlu0 %v2397, 16
        %v2452 = vpop.permute.xlu0 %2451
        %2457 = vrot.lane.b32.xlu0 %v2445, 32
        %v2458 = vpop.permute.xlu0 %2457
        %2459 = vrot.lane.b32.xlu0 %v2446, 32
        %v2460 = vpop.permute.xlu0 %2459
        %v2463 = vsel %vm885, %v2426, %v2450
        %v2464 = vsel %vm885, %v2427, %v2452
        %v2465 = vsel %vm2237, %v2463, %v2458
        %v2466 = vsel %vm2237, %v2464, %v2460
        %v2467 = vpack.c.bf16 %v2466, %v2465
        %v2469 = vlaneseq
        %v2470 = vshrl.u32 %v2469, 7
        %v2471 = vsub.s32 0, %v2470
        %v2472 = vrot.slane %v2408, %v2471
        %v2480 = vunpack.c.l.b16 %v2401
        %v2481 = vunpack.c.l.b16 %v2402
        %v2482 = vunpack.c.l.b16 %v2403
        %v2483 = vunpack.c.l.b16 %v2404
        %v2484 = vunpack.c.l.b16 %v2405
        %v2485 = vunpack.c.l.b16 %v2406
        %v2486 = vpack.c.b16 %v2481, %v2480
        %v2487 = vpack.c.b16 %v2483, %v2482
        %v2488 = vpack.c.b16 %v2485, %v2484
        %v2493 = vsel %vm2265, %v2467, 0
        %2495 = vmatprep.subr.bf16.mxu0 0
        %2496 = vmatpush1.bf16.msra.mxu0 0
        %2497 = vmatprep.subr.bf16.mxu0 0
        %2498 = vmatpush1.bf16.msra.mxu0 0
        %2499 = vmatprep.subr.bf16.mxu0 0
        %2500 = vmatpush1.bf16.msra.mxu0 0
        %2501 = vmatprep.subr.bf16.mxu0 0
        %2502 = vmatpush1.bf16.msra.mxu0 0
        %2503 = vmatprep.subr.bf16.mxu0 0
        %2504 = vmatpush1.bf16.msra.mxu0 0
        %2505 = vmatprep.subr.bf16.mxu0 0
        %2506 = vmatpush1.bf16.msra.mxu0 %v2488
        %2507 = vmatprep.subr.bf16.mxu0 0
        %2508 = vmatpush1.bf16.msra.mxu0 %v2487
        %2509 = vmatprep.subr.bf16.mxu0 0
        %2510 = vmatpush1.bf16.msra.mxu0 %v2486
        %2511 = vmatprep.subr.bf16.mxu0 0
        %2512 = vmatpush2.bf16.msra.mxu0 0
        %2513 = vmatprep.subr.bf16.mxu0 0
        %2514 = vmatpush2.bf16.msra.mxu0 0
        %2515 = vmatprep.subr.bf16.mxu0 0
        %2516 = vmatpush2.bf16.msra.mxu0 0
        %2517 = vmatprep.subr.bf16.mxu0 0
        %2518 = vmatpush2.bf16.msra.mxu0 0
        %2519 = vmatprep.subr.bf16.mxu0 0
        %2520 = vmatpush2.bf16.msra.mxu0 0
        %2521 = vmatprep.subr.bf16.mxu0 0
        %2522 = vmatpush2.bf16.msra.mxu0 0
        %2523 = vmatprep.subr.bf16.mxu0 0
        %2524 = vmatpush2.bf16.msra.mxu0 0
        %2525 = vmatprep.subr.bf16.mxu0 0
        %2526 = vmatpush2.bf16.msra.mxu0 0
        %2527 = vmatprep.mubr.bf16.mxu0 0
        %2528 = vmatmul.mubr.bf16.gmra.mxu0 %v2493
        %v2529 = vpop.f32.mrf.mxu0
        %v2530 = vadd.f32 %v2472, %v2529
        %v2531 = vpop.f32.mrf.mxu0
        %v2532 = vpop.f32.mrf.mxu0
        %v2533 = vadd.f32 %v2472, %v2532
        %v2534 = vpop.f32.mrf.mxu0
        %2535 = vdwg.mxu0
        %v2536 = vtanh.pop %v2530
        %v2537 = vtanh.pop %v2533
        %v2538 = vxor.u32 %v2530, 2147483648
        %v2539 = vxor.u32 %v2533, 2147483648
        %v2540 = vmul.f32 %v2538, 1.442695
        %v2541 = vpow.pop %v2540
        %v2542 = vmul.f32 %v2539, 1.442695
        %v2543 = vpow.pop %v2542
        %v2544 = vadd.f32 %v2541, 1.0
        %v2545 = vadd.f32 %v2543, 1.0
        %v2546 = vrcp.pop %v2544
        %v2547 = vmul.f32 1.0, %v2546
        %v2548 = vrcp.pop %v2545
        %v2549 = vmul.f32 1.0, %v2548
        %2552 = vrot.lane.b32.xlu0 %v2547, 112
        %v2553 = vpop.permute.xlu0 %2552
        %2554 = vrot.lane.b32.xlu0 %v2549, 112
        %v2555 = vpop.permute.xlu0 %2554
        %v2558 = vmul.f32 %v2536, %v2553
        %v2559 = vmul.f32 %v2537, %v2555
        %s2560 = scalar_lea.vmem %s17, 8
        %v2561 = vld [vmem:[%s2560] sm:$0xf]
        %v2562 = vld [vmem:[%s2560 + $0x4] sm:$0xf]
        %v2563 = vpack.c.bf16 %v2559, %v2558
        %s2564 = scalar_lea.vmem %s18, 1
        %v2565 = vld [vmem:[%s2564] sm:$0x1]
        %v2567 = vlaneseq
        %v2568 = vshrl.u32 %v2567, 7
        %v2569 = vsub.s32 0, %v2568
        %v2570 = vrot.slane %v2565, %v2569
        %v2574 = vunpack.c.l.b16 %v2561
        %v2575 = vunpack.c.l.b16 %v2562
        %v2576 = vpack.c.b16 %v2575, %v2574
        %v2579 = vsel %vm885, %v2563, 0
        %2581 = vmatprep.subr.bf16.mxu0 0
        %2582 = vmatpush1.bf16.msra.mxu0 0
        %2583 = vmatprep.subr.bf16.mxu0 0
        %2584 = vmatpush1.bf16.msra.mxu0 0
        %2585 = vmatprep.subr.bf16.mxu0 0
        %2586 = vmatpush1.bf16.msra.mxu0 0
        %2587 = vmatprep.subr.bf16.mxu0 0
        %2588 = vmatpush1.bf16.msra.mxu0 0
        %2589 = vmatprep.subr.bf16.mxu0 0
        %2590 = vmatpush1.bf16.msra.mxu0 0
        %2591 = vmatprep.subr.bf16.mxu0 0
        %2592 = vmatpush1.bf16.msra.mxu0 0
        %2593 = vmatprep.subr.bf16.mxu0 0
        %2594 = vmatpush1.bf16.msra.mxu0 0
        %2595 = vmatprep.subr.bf16.mxu0 0
        %2596 = vmatpush1.bf16.msra.mxu0 %v2576
        %2597 = vmatprep.subr.bf16.mxu0 0
        %2598 = vmatpush2.bf16.msra.mxu0 0
        %2599 = vmatprep.subr.bf16.mxu0 0
        %2600 = vmatpush2.bf16.msra.mxu0 0
        %2601 = vmatprep.subr.bf16.mxu0 0
        %2602 = vmatpush2.bf16.msra.mxu0 0
        %2603 = vmatprep.subr.bf16.mxu0 0
        %2604 = vmatpush2.bf16.msra.mxu0 0
        %2605 = vmatprep.subr.bf16.mxu0 0
        %2606 = vmatpush2.bf16.msra.mxu0 0
        %2607 = vmatprep.subr.bf16.mxu0 0
        %2608 = vmatpush2.bf16.msra.mxu0 0
        %2609 = vmatprep.subr.bf16.mxu0 0
        %2610 = vmatpush2.bf16.msra.mxu0 0
        %2611 = vmatprep.subr.bf16.mxu0 0
        %2612 = vmatpush2.bf16.msra.mxu0 0
        %2613 = vmatprep.mubr.bf16.mxu0 0
        %2614 = vmatmul.mubr.bf16.gmra.mxu0 %v2579
        %v2615 = vpop.f32.mrf.mxu0
        %v2616 = vadd.f32 %v2570, %v2615
        %v2617 = vpop.f32.mrf.mxu0
        %v2618 = vpop.f32.mrf.mxu0
        %v2619 = vadd.f32 %v2570, %v2618
        %v2620 = vpop.f32.mrf.mxu0
        %2621 = vdwg.mxu0
        %v2622 = vadd.f32 %v2396, %v2616
        %v2623 = vadd.f32 %v2397, %v2619
        %v2624 = vmul.f32 %v2622, %v761
        %v2625 = vmul.f32 %v2623, %v766
        %v2626 = vadd.f32 %v2398, %v2616
        %v2627 = vadd.f32 %v2399, %v2619
        %s2628 = scalar_lea.vmem %s15, 48
        %v2629 = vld [vmem:[%s2628] sm:$0xf]
        %v2630 = vld [vmem:[%s2628 + $0x4] sm:$0xf]
        %v2631 = vld [vmem:[%s2628 + $0x8] sm:$0xf]
        %v2632 = vld [vmem:[%s2628 + $0xc] sm:$0xf]
        %v2633 = vld [vmem:[%s2628 + $0x10] sm:$0xf]
        %v2634 = vld [vmem:[%s2628 + $0x14] sm:$0xf]
        %s2635 = scalar_lea.vmem %s16, 2
        %v2636 = vld [vmem:[%s2635] sm:$0x1]
        %v2637 = vrot.slane %v2624, 4
        %v2638 = vrot.slane %v2625, 4
        %vm2639 = vcmp.lt.s32.totalorder %v730, 4
        %v2640 = vsel %vm2639, %v2637, %v2638
        %v2641 = vsel %vm2639, %v2638, %v2637
        %v2642 = vadd.s32 %v730, 4294967292
        %v2643 = vadd.s32 %v731, 4294967292
        %vm2644 = vcmp.ge.s32.totalorder %v2642, 0
        %vm2645 = vcmp.ge.s32.totalorder %v2643, 0
        %vm2646 = vcmp.lt.s32.totalorder %v2642, 16
        %vm2647 = vcmp.lt.s32.totalorder %v2643, 16
        %vm2648 = vmand %vm2644, %vm2646
        %vm2649 = vmand %vm2645, %vm2647
        %v2650 = vsel %vm2648, 1, 0
        %v2651 = vsel %vm2649, 1, 0
        %vm2652 = vcmp.eq.s32.totalorder %v2650, 1
        %vm2653 = vcmp.eq.s32.totalorder %v2651, 1
        %v2654 = vsel %vm2652, %v2641, 0.0
        %v2655 = vsel %vm2653, %v2640, 0.0
        %v2656 = vadd.s32 %v730, 4
        %v2657 = vadd.s32 %v731, 4
        %vm2658 = vcmp.ge.s32.totalorder %v2656, 0
        %vm2659 = vcmp.ge.s32.totalorder %v2657, 0
        %vm2660 = vcmp.lt.s32.totalorder %v2656, 16
        %vm2661 = vcmp.lt.s32.totalorder %v2657, 16
        %vm2662 = vmand %vm2658, %vm2660
        %vm2663 = vmand %vm2659, %vm2661
        %v2664 = vsel %vm2662, 1, 0
        %v2665 = vsel %vm2663, 1, 0
        %vm2666 = vcmp.eq.s32.totalorder %v2664, 1
        %vm2667 = vcmp.eq.s32.totalorder %v2665, 1
        %v2668 = vsel %vm2666, %v2640, 0.0
        %v2669 = vsel %vm2667, %v2641, 0.0
        %2672 = vrot.lane.b32.xlu0 %v2624, 16
        %v2673 = vpop.permute.xlu0 %2672
        %2674 = vrot.lane.b32.xlu0 %v2625, 16
        %v2675 = vpop.permute.xlu0 %2674
        %2680 = vrot.lane.b32.xlu0 %v2668, 32
        %v2681 = vpop.permute.xlu0 %2680
        %2682 = vrot.lane.b32.xlu0 %v2669, 32
        %v2683 = vpop.permute.xlu0 %2682
        %v2686 = vsel %vm885, %v2654, %v2673
        %v2687 = vsel %vm885, %v2655, %v2675
        %v2688 = vsel %vm2237, %v2686, %v2681
        %v2689 = vsel %vm2237, %v2687, %v2683
        %v2690 = vpack.c.bf16 %v2689, %v2688
        %v2692 = vlaneseq
        %v2693 = vshrl.u32 %v2692, 7
        %v2694 = vsub.s32 0, %v2693
        %v2695 = vrot.slane %v2636, %v2694
        %v2703 = vunpack.c.l.b16 %v2629
        %v2704 = vunpack.c.l.b16 %v2630
        %v2705 = vunpack.c.l.b16 %v2631
        %v2706 = vunpack.c.l.b16 %v2632
        %v2707 = vunpack.c.l.b16 %v2633
        %v2708 = vunpack.c.l.b16 %v2634
        %v2709 = vpack.c.b16 %v2704, %v2703
        %v2710 = vpack.c.b16 %v2706, %v2705
        %v2711 = vpack.c.b16 %v2708, %v2707
        %v2716 = vsel %vm2265, %v2690, 0
        %2718 = vmatprep.subr.bf16.mxu0 0
        %2719 = vmatpush1.bf16.msra.mxu0 0
        %2720 = vmatprep.subr.bf16.mxu0 0
        %2721 = vmatpush1.bf16.msra.mxu0 0
        %2722 = vmatprep.subr.bf16.mxu0 0
        %2723 = vmatpush1.bf16.msra.mxu0 0
        %2724 = vmatprep.subr.bf16.mxu0 0
        %2725 = vmatpush1.bf16.msra.mxu0 0
        %2726 = vmatprep.subr.bf16.mxu0 0
        %2727 = vmatpush1.bf16.msra.mxu0 0
        %2728 = vmatprep.subr.bf16.mxu0 0
        %2729 = vmatpush1.bf16.msra.mxu0 %v2711
        %2730 = vmatprep.subr.bf16.mxu0 0
        %2731 = vmatpush1.bf16.msra.mxu0 %v2710
        %2732 = vmatprep.subr.bf16.mxu0 0
        %2733 = vmatpush1.bf16.msra.mxu0 %v2709
        %2734 = vmatprep.subr.bf16.mxu0 0
        %2735 = vmatpush2.bf16.msra.mxu0 0
        %2736 = vmatprep.subr.bf16.mxu0 0
        %2737 = vmatpush2.bf16.msra.mxu0 0
        %2738 = vmatprep.subr.bf16.mxu0 0
        %2739 = vmatpush2.bf16.msra.mxu0 0
        %2740 = vmatprep.subr.bf16.mxu0 0
        %2741 = vmatpush2.bf16.msra.mxu0 0
        %2742 = vmatprep.subr.bf16.mxu0 0
        %2743 = vmatpush2.bf16.msra.mxu0 0
        %2744 = vmatprep.subr.bf16.mxu0 0
        %2745 = vmatpush2.bf16.msra.mxu0 0
        %2746 = vmatprep.subr.bf16.mxu0 0
        %2747 = vmatpush2.bf16.msra.mxu0 0
        %2748 = vmatprep.subr.bf16.mxu0 0
        %2749 = vmatpush2.bf16.msra.mxu0 0
        %2750 = vmatprep.mubr.bf16.mxu0 0
        %2751 = vmatmul.mubr.bf16.gmra.mxu0 %v2716
        %v2752 = vpop.f32.mrf.mxu0
        %v2753 = vadd.f32 %v2695, %v2752
        %v2754 = vpop.f32.mrf.mxu0
        %v2755 = vpop.f32.mrf.mxu0
        %v2756 = vadd.f32 %v2695, %v2755
        %v2757 = vpop.f32.mrf.mxu0
        %2758 = vdwg.mxu0
        %v2759 = vtanh.pop %v2753
        %v2760 = vtanh.pop %v2756
        %v2761 = vxor.u32 %v2753, 2147483648
        %v2762 = vxor.u32 %v2756, 2147483648
        %v2763 = vmul.f32 %v2761, 1.442695
        %v2764 = vpow.pop %v2763
        %v2765 = vmul.f32 %v2762, 1.442695
        %v2766 = vpow.pop %v2765
        %v2767 = vadd.f32 %v2764, 1.0
        %v2768 = vadd.f32 %v2766, 1.0
        %v2769 = vrcp.pop %v2767
        %v2770 = vmul.f32 1.0, %v2769
        %v2771 = vrcp.pop %v2768
        %v2772 = vmul.f32 1.0, %v2771
        %2775 = vrot.lane.b32.xlu0 %v2770, 112
        %v2776 = vpop.permute.xlu0 %2775
        %2777 = vrot.lane.b32.xlu0 %v2772, 112
        %v2778 = vpop.permute.xlu0 %2777
        %v2781 = vmul.f32 %v2759, %v2776
        %v2782 = vmul.f32 %v2760, %v2778
        %s2783 = scalar_lea.vmem %s17, 16
        %v2784 = vld [vmem:[%s2783] sm:$0xf]
        %v2785 = vld [vmem:[%s2783 + $0x4] sm:$0xf]
        %v2786 = vpack.c.bf16 %v2782, %v2781
        %s2787 = scalar_lea.vmem %s18, 2
        %v2788 = vld [vmem:[%s2787] sm:$0x1]
        %v2790 = vlaneseq
        %v2791 = vshrl.u32 %v2790, 7
        %v2792 = vsub.s32 0, %v2791
        %v2793 = vrot.slane %v2788, %v2792
        %v2797 = vunpack.c.l.b16 %v2784
        %v2798 = vunpack.c.l.b16 %v2785
        %v2799 = vpack.c.b16 %v2798, %v2797
        %v2802 = vsel %vm885, %v2786, 0
        %2804 = vmatprep.subr.bf16.mxu0 0
        %2805 = vmatpush1.bf16.msra.mxu0 0
        %2806 = vmatprep.subr.bf16.mxu0 0
        %2807 = vmatpush1.bf16.msra.mxu0 0
        %2808 = vmatprep.subr.bf16.mxu0 0
        %2809 = vmatpush1.bf16.msra.mxu0 0
        %2810 = vmatprep.subr.bf16.mxu0 0
        %2811 = vmatpush1.bf16.msra.mxu0 0
        %2812 = vmatprep.subr.bf16.mxu0 0
        %2813 = vmatpush1.bf16.msra.mxu0 0
        %2814 = vmatprep.subr.bf16.mxu0 0
        %2815 = vmatpush1.bf16.msra.mxu0 0
        %2816 = vmatprep.subr.bf16.mxu0 0
        %2817 = vmatpush1.bf16.msra.mxu0 0
        %2818 = vmatprep.subr.bf16.mxu0 0
        %2819 = vmatpush1.bf16.msra.mxu0 %v2799
        %2820 = vmatprep.subr.bf16.mxu0 0
        %2821 = vmatpush2.bf16.msra.mxu0 0
        %2822 = vmatprep.subr.bf16.mxu0 0
        %2823 = vmatpush2.bf16.msra.mxu0 0
        %2824 = vmatprep.subr.bf16.mxu0 0
        %2825 = vmatpush2.bf16.msra.mxu0 0
        %2826 = vmatprep.subr.bf16.mxu0 0
        %2827 = vmatpush2.bf16.msra.mxu0 0
        %2828 = vmatprep.subr.bf16.mxu0 0
        %2829 = vmatpush2.bf16.msra.mxu0 0
        %2830 = vmatprep.subr.bf16.mxu0 0
        %2831 = vmatpush2.bf16.msra.mxu0 0
        %2832 = vmatprep.subr.bf16.mxu0 0
        %2833 = vmatpush2.bf16.msra.mxu0 0
        %2834 = vmatprep.subr.bf16.mxu0 0
        %2835 = vmatpush2.bf16.msra.mxu0 0
        %2836 = vmatprep.mubr.bf16.mxu0 0
        %2837 = vmatmul.mubr.bf16.gmra.mxu0 %v2802
        %v2838 = vpop.f32.mrf.mxu0
        %v2839 = vadd.f32 %v2793, %v2838
        %v2840 = vpop.f32.mrf.mxu0
        %v2841 = vpop.f32.mrf.mxu0
        %v2842 = vadd.f32 %v2793, %v2841
        %v2843 = vpop.f32.mrf.mxu0
        %2844 = vdwg.mxu0
        %2847 = vrot.lane.b32.xlu0 %v2839, 16
        %v2848 = vpop.permute.xlu0 %2847
        %2849 = vrot.lane.b32.xlu0 %v2842, 16
        %v2850 = vpop.permute.xlu0 %2849
        %v2853 = vadd.f32 %v2626, %v2848
        %v2854 = vadd.f32 %v2627, %v2850
        %v2855 = vmul.f32 %v2853, %v761
        %v2856 = vmul.f32 %v2854, %v766
        %v2857 = vld [vmem:[%s19] sm:$0xf]
        %v2858 = vld [vmem:[%s19 + $0x4] sm:$0xf]
        %v2859 = vpack.c.bf16 %v2856, %v2855
        %v2860 = vld [vmem:[%s20] sm:$0x1]
        %v2862 = vlaneseq
        %v2863 = vshrl.u32 %v2862, 7
        %v2864 = vsub.s32 0, %v2863
        %v2865 = vrot.slane %v2860, %v2864
        %2868 = vrot.lane.b32.xlu0 %v2859, 112
        %v2869 = vpop.permute.xlu0 %2868
        %v2872 = vunpack.c.l.b16 %v2857
        %v2873 = vunpack.c.l.b16 %v2858
        %v2874 = vpack.c.b16 %v2873, %v2872
        %v2877 = vsel %vm885, %v2869, 0
        %2879 = vmatprep.subr.bf16.mxu0 0
        %2880 = vmatpush1.bf16.msra.mxu0 0
        %2881 = vmatprep.subr.bf16.mxu0 0
        %2882 = vmatpush1.bf16.msra.mxu0 0
        %2883 = vmatprep.subr.bf16.mxu0 0
        %2884 = vmatpush1.bf16.msra.mxu0 0
        %2885 = vmatprep.subr.bf16.mxu0 0
        %2886 = vmatpush1.bf16.msra.mxu0 0
        %2887 = vmatprep.subr.bf16.mxu0 0
        %2888 = vmatpush1.bf16.msra.mxu0 0
        %2889 = vmatprep.subr.bf16.mxu0 0
        %2890 = vmatpush1.bf16.msra.mxu0 0
        %2891 = vmatprep.subr.bf16.mxu0 0
        %2892 = vmatpush1.bf16.msra.mxu0 0
        %2893 = vmatprep.subr.bf16.mxu0 0
        %2894 = vmatpush1.bf16.msra.mxu0 %v2874
        %2895 = vmatprep.subr.bf16.mxu0 0
        %2896 = vmatpush2.bf16.msra.mxu0 0
        %2897 = vmatprep.subr.bf16.mxu0 0
        %2898 = vmatpush2.bf16.msra.mxu0 0
        %2899 = vmatprep.subr.bf16.mxu0 0
        %2900 = vmatpush2.bf16.msra.mxu0 0
        %2901 = vmatprep.subr.bf16.mxu0 0
        %2902 = vmatpush2.bf16.msra.mxu0 0
        %2903 = vmatprep.subr.bf16.mxu0 0
        %2904 = vmatpush2.bf16.msra.mxu0 0
        %2905 = vmatprep.subr.bf16.mxu0 0
        %2906 = vmatpush2.bf16.msra.mxu0 0
        %2907 = vmatprep.subr.bf16.mxu0 0
        %2908 = vmatpush2.bf16.msra.mxu0 0
        %2909 = vmatprep.subr.bf16.mxu0 0
        %2910 = vmatpush2.bf16.msra.mxu0 0
        %2911 = vmatprep.mubr.bf16.mxu0 0
        %2912 = vmatmul.mubr.bf16.gmra.mxu0 %v2877
        %v2913 = vpop.f32.mrf.mxu0
        %v2914 = vadd.f32 %v2865, %v2913
        %v2915 = vpop.f32.mrf.mxu0
        %v2916 = vpop.f32.mrf.mxu0
        %v2917 = vadd.f32 %v2865, %v2916
        %v2918 = vpop.f32.mrf.mxu0
        %2919 = vdwg.mxu0
        %v2920 = vmul.f32 %v2914, %v761
        %v2921 = vmul.f32 %v2917, %v766
        %v2922 = vmul.f32 %v2920, 1.442695
        %v2923 = vpow.pop %v2922
        %v2924 = vmul.f32 %v2921, 1.442695
        %v2925 = vpow.pop %v2924
        %v2926 = vmul.f32 %v732, %v2923
        %v2927 = vmul.f32 %v733, %v2925
        %v2928 = vmul.f32 %v2926, %v761
        %v2929 = vmul.f32 %v2927, %v766
        %2932 = vrot.lane.b32.xlu0 %v2928, 124
        %v2933 = vpop.permute.xlu0 %2932
        %2934 = vrot.lane.b32.xlu0 %v2929, 124
        %v2935 = vpop.permute.xlu0 %2934
        %v2938 = vadd.f32 %v2920, %v2933
        %v2939 = vadd.f32 %v2921, %v2935
        %2942 = vrot.lane.b32.xlu0 %v2920, 124
        %v2943 = vpop.permute.xlu0 %2942
        %2944 = vrot.lane.b32.xlu0 %v2921, 124
        %v2945 = vpop.permute.xlu0 %2944
        %v2948 = vsel %vm779, %v2943, 0.0
        %2949 = vadd.xlane.f32.xlu0 %v2948
        %v2950 = vpop.xlane.xlu0 %2949
        %v2951 = vsel %vm779, %v2945, 0.0
        %2952 = vadd.xlane.f32.xlu0 %v2951
        %v2953 = vpop.xlane.xlu0 %2952
        %v2954 = vadd.f32 %v2950, %v2953
        %v2955 = vrot.slane %v2954, 4
        %v2956 = vadd.f32 %v2954, %v2955
        %v2957 = vrot.slane %v2956, 2
        %v2958 = vadd.f32 %v2956, %v2957
        %v2959 = vrot.slane %v2958, 1
        %v2960 = vadd.f32 %v2958, %v2959
        %2961 = vst [vmem:[%s709] sm:$0x1] %v2960
        %2964 = vrot.lane.b32.xlu0 %v2938, 4
        %v2965 = vpop.permute.xlu0 %2964
        %2966 = vrot.lane.b32.xlu0 %v2939, 4
        %v2967 = vpop.permute.xlu0 %2966
        %v2970 = vsel %vm779, %v732, %v2965
        %v2971 = vsel %vm779, %v733, %v2967
        %2972 = vst.msk [vmem:[%s727] sm:$0xff] %vm1254, %v2970
        %2973 = vst.msk [vmem:[%s727 + $0x8] sm:$0xff] %vm1254, %v2971
        %p2974 = scmp.lt.s32.totalorder %s37, 1
        %s2975 = scalar_select %p2974, %s37, 1
        %s2976 = smul.addr %s2975, 2
        %s2977 = smul.addr %s2976, 8
        %s2978 = scalar_lea.vmem %s21, %s2977
        %s2979 = sand.u32 %s527, 1
        %s2980 = scalar_lea.sflag [#allocation3], %s2979
        %s2981 = sand.u32 %s527, 1
        %s2982 = scalar_lea.vmem [#allocation2], %s2981
        // Predicated region
        $region105: #{tpu_custom_call.1} parent=103 // pred_check
          %p2983 = pneg %p511
        $region106: #{tpu_custom_call.1} parent=103 // pred_check_branch
          %2985 = sbr.rel (%p2983) target = $region108
        $region107: #{tpu_custom_call.1} parent=103 // pred_region
          _
        $region108: #{tpu_custom_call.1} parent=103 // pred_fallthru
          _
        // Predicated region
        $region109: #{tpu_custom_call.1} parent=103 // pred_check
          %p2986 = pneg %p537
        $region110: #{tpu_custom_call.1} parent=103 // pred_check_branch
          %2988 = sbr.rel (%p2986) target = $region112
        $region111: #{tpu_custom_call.1} parent=103 // pred_region
          %s2990 = ssub.s32 16, 16
          %2991 = vsyncadd %s2980, %s2990
          %s2992 = smul.addr %s37, 16
          %s2993 = scalar_lea.hbm %s22, %s2992
          %s2995 = sshll.u32 %s2982, 4
          %s2996 = int_to_ptr.vmem [resolvable:$true] %s2995
          %2998 = dma.vmem_to_hbm [thread:$0]  %s2996, 16, %s2993, %s2980
        $region112: #{tpu_custom_call.1} parent=103 // pred_fallthru
          _
      $region104: #{tpu_custom_call.1} parent=5 // pred_fallthru
        _
      %p2999 = scmp.le.s32.totalorder 2, %s32
      // Predicated region
      $region113: #{tpu_custom_call.1} parent=5 // pred_check
        %p3000 = pneg %p2999
      $region114: #{tpu_custom_call.1} parent=5 // pred_check_branch
        %3002 = sbr.rel (%p3000) target = $region116
      $region115: #{tpu_custom_call.1} parent=5 // pred_region
        %s3003 = ssub.s32 %s32, 2
        // Predicated region
        $region117: #{tpu_custom_call.1} parent=115 // pred_check
          %p3004 = pneg %p517
        $region118: #{tpu_custom_call.1} parent=115 // pred_check_branch
          %3006 = sbr.rel (%p3004) target = $region120
        $region119: #{tpu_custom_call.1} parent=115 // pred_region
          %p3007 = scmp.lt.s32.totalorder %s38, 1
          %s3008 = scalar_select %p3007, %s38, 1
          %s3009 = smul.addr %s3008, 2
          %s3010 = smul.addr %s3009, 8
          %s3011 = scalar_lea.vmem %s21, %s3010
        $region120: #{tpu_custom_call.1} parent=115 // pred_fallthru
          _
        // Predicated region
        $region121: #{tpu_custom_call.1} parent=115 // pred_check
          %p3012 = pneg %p543
        $region122: #{tpu_custom_call.1} parent=115 // pred_check_branch
          %3014 = sbr.rel (%p3012) target = $region124
        $region123: #{tpu_custom_call.1} parent=115 // pred_region
          %s3015 = sand.u32 %s528, 1
          %s3016 = scalar_lea.sflag [#allocation3], %s3015
          %s3017 = sand.u32 %s528, 1
          %s3018 = scalar_lea.vmem [#allocation2], %s3017
          %3019 = dma.done %s3016, 16
        $region124: #{tpu_custom_call.1} parent=115 // pred_fallthru
          _
      $region116: #{tpu_custom_call.1} parent=5 // pred_fallthru
        _
    $region6: #{tpu_custom_call.1} parent=1 // loop_footer
      %s36 = sadd.s32 1, %s32
    $region7: #{tpu_custom_call.1} parent=1 // loop_footer_branch
      %31 = sbr.rel target = $region3
    $region8: #{tpu_custom_call.1} parent=1 // loop_exit
      _
    %3020 = vsyncpa [#allocation3], 1
    %s3021 = scalar_lea.sflag [#allocation3], 1
    %3022 = vsyncpa %s3021, 1

</llo_original>
